<compile_context>
chip_gen: v7x
topology: tpu7x:2x2x1
jax: 0.10.0
libtpu: 0.0.40
codegen_flags: <defaults>
</compile_context>

<pallas_src>
import jax
import jax.numpy as jnp
from jax import lax
from jax.experimental import pallas as pl
from jax.experimental.pallas import tpu as pltpu

# Architecture constants implied by the PyTorch module (28x28 input -> flatten == 120).
KH = KW = 4                 # all convs are 4x4, stride 1, VALID
C1, C2, C3 = 6, 16, 120     # conv channel counts
H0 = W0 = 28                # input spatial size
OH1 = 25                    # conv1 output spatial
PD1 = 12                    # after AvgPool2d(2)  (floor mode: conv row/col 24 dropped)
OH2 = 9                     # conv2 output spatial
PD2 = 4                     # after AvgPool2d(2)  (conv row/col 8 dropped)
NFC1 = 84
BT = 8                      # batch tile per grid step (multiple of 8 -> aligned GEMM M dims)


# ------------------------------ fused kernel -------------------------------

def _lenet_kernel(x_ref,                       # [BT*28, 28]
                  s1_ref, a1_ref, b1_ref,      # [4,BT*25,BT*28] [4,28,150] [1,150]
                  hp1_ref, wp1_ref,            # [BT*12,BT*25]   [150,72]
                  s2_ref, a2_ref, b2_ref,      # [4,BT*9,BT*12]  [4,72,144] [1,144]
                  hp2_ref, wp2_ref,            # [BT*4,BT*9]     [144,64]
                  s3_ref, a3_ref, b3_ref,      # [4,BT,BT*4]     [4,64,120] [1,120]
                  f1w_ref, f1b_ref, f2w_ref, f2b_ref,
                  logp_ref, feat_ref):
    """Whole forward pass for one batch tile; all intermediates stay in VMEM/vregs."""
    def dot(a, b):
        return jnp.dot(a, b, preferred_element_type=jnp.float32)

    x = x_ref[...]                                              # [BT*28, 28]

    # ---- stage 1: conv1 (1->6, 4x4 VALID) + tanh + 2x2 avg-pool ----
    # For each height tap kh: gather rows (b*28 + oh + kh) with a 0/1 selection
    # matrix, then one banded-weight GEMM does the (kw, cin)->cout contraction
    # for every output column at once.  Lanes of the result are c*25 + ow.
    c1 = b1_ref[...]
    for kh in range(KH):
        rows = dot(s1_ref[kh], x)                               # [BT*25, 28]
        c1 = c1 + dot(rows, a1_ref[kh])                         # [BT*25, 150]
    y1 = jnp.tanh(c1)
    p1 = dot(dot(hp1_ref[...], y1), wp1_ref[...])               # [BT*12, 72] lanes c*12+w

    # ---- stage 2: conv2 (6->16, 4x4) + tanh + 2x2 avg-pool ----
    c2 = b2_ref[...]
    for kh in range(KH):
        rows = dot(s2_ref[kh], p1)                              # [BT*9, 72]
        c2 = c2 + dot(rows, a2_ref[kh])                         # [BT*9, 144]
    y2 = jnp.tanh(c2)                                           # lanes c*9 + ow
    p2 = dot(dot(hp2_ref[...], y2), wp2_ref[...])               # [BT*4, 64] lanes c*4+w

    # ---- stage 3: conv3 (16->120, 4x4 -> 1x1) + tanh == flattened features ----
    c3 = b3_ref[...]
    for kh in range(KH):
        rows = dot(s3_ref[kh], p2)                              # [BT, 64]
        c3 = c3 + dot(rows, a3_ref[kh])                         # [BT, 120]
    feats = jnp.tanh(c3)                                        # [BT, 120]

    # ---- classifier + log_softmax (fused epilogue) ----
    h = jnp.tanh(dot(feats, f1w_ref[...]) + f1b_ref[...])       # [BT, 84]
    logits = dot(h, f2w_ref[...]) + f2b_ref[...]                # [BT, n_classes]
    z = logits - jnp.max(logits, axis=-1, keepdims=True)
    logp = z - jnp.log(jnp.sum(jnp.exp(z), axis=-1, keepdims=True))

    feat_ref[...] = feats.astype(feat_ref.dtype)
    logp_ref[...] = logp.astype(logp_ref.dtype)


# --------------------- host-side GEMM-layout prologue ------------------------

def _band_matrix(w_kh, w_in, w_out):
    """[cin*w_in, cout*w_out]: M[ci*w_in + j + kw, co*w_out + j] = w_kh[co, ci, kw]."""
    cout, cin, kw_sz = w_kh.shape
    ri = jnp.arange(cin * w_in)
    ci, wi = ri // w_in, ri % w_in
    cj = jnp.arange(cout * w_out)
    co, j = cj // w_out, cj % w_out
    kw = wi[:, None] - j[None, :]
    valid = (kw >= 0) & (kw < kw_sz)
    vals = w_kh[co[None, :], ci[:, None], jnp.clip(kw, 0, kw_sz - 1)]
    return jnp.where(valid, vals, 0.0).astype(jnp.float32)


def _height_select(bt, h_in, h_out, kh):
    """[bt*h_out, bt*h_in] 0/1: output row (b*h_out + r) gathers input row (b*h_in + r + kh)."""
    r = jnp.arange(bt * h_out)
    src = (r // h_out) * h_in + (r % h_out) + kh
    return (jnp.arange(bt * h_in)[None, :] == src[:, None]).astype(jnp.float32)


def _height_pool(bt, h_in, h_out):
    """[bt*h_out, bt*h_in]: 0.5 at input rows 2r and 2r+1 of each sample (floor-mode pool)."""
    r = jnp.arange(bt * h_out)
    base = (r // h_out) * h_in + 2 * (r % h_out)
    cols = jnp.arange(bt * h_in)[None, :]
    m = (cols == base[:, None]) | (cols == base[:, None] + 1)
    return 0.5 * m.astype(jnp.float32)


def _width_pool(c, w_in, w_out):
    """[c*w_in, c*w_out]: 0.5 at lanes 2j and 2j+1 within each channel block (floor-mode pool)."""
    ri, cj = jnp.arange(c * w_in), jnp.arange(c * w_out)
    cr, wr = ri // w_in, ri % w_in
    cc, wc = cj // w_out, cj % w_out
    m = (cr[:, None] == cc[None, :]) & (
        (wr[:, None] == 2 * wc[None, :]) | (wr[:, None] == 2 * wc[None, :] + 1))
    return 0.5 * m.astype(jnp.float32)


def _const_spec(shape):
    nd = len(shape)
    return pl.BlockSpec(shape, lambda i, _nd=nd: (0,) * _nd)


@jax.jit
def _forward_both(params, x):
    B = x.shape[0]
    n_tiles = pl.cdiv(B, BT)
    b_pad = n_tiles * BT

    w1, b1 = params["conv1"]
    w2, b2 = params["conv2"]
    w3, b3 = params["conv3"]
    f1w, f1b = params["fc1"]
    f2w, f2b = params["fc2"]
    n_classes = f2w.shape[0]

    # Input layout: drop the singleton channel dim, pad batch to a tile multiple,
    # flatten to [b_pad*28, 28] (rows on sublanes, width on lanes).
    xr = x.reshape(B, H0, W0)
    if b_pad != B:
        xr = jnp.pad(xr, ((0, b_pad - B), (0, 0), (0, 0)))
    x2d = xr.reshape(b_pad * H0, W0)

    # One-time layout plumbing (outside the hot kernel).
    a1 = jnp.stack([_band_matrix(w1[:, :, kh, :], W0, OH1) for kh in range(KH)])
    a2 = jnp.stack([_band_matrix(w2[:, :, kh, :], PD1, OH2) for kh in range(KH)])
    a3 = jnp.stack([_band_matrix(w3[:, :, kh, :], PD2, 1) for kh in range(KH)])
    s1 = jnp.stack([_height_select(BT, H0, OH1, kh) for kh in range(KH)])
    s2 = jnp.stack([_height_select(BT, PD1, OH2, kh) for kh in range(KH)])
    s3 = jnp.stack([_height_select(BT, PD2, 1, kh) for kh in range(KH)])
    hp1, wp1 = _height_pool(BT, OH1, PD1), _width_pool(C1, OH1, PD1)
    hp2, wp2 = _height_pool(BT, OH2, PD2), _width_pool(C2, OH2, PD2)
    b1l = jnp.repeat(b1, OH1).reshape(1, C1 * OH1)
    b2l = jnp.repeat(b2, OH2).reshape(1, C2 * OH2)
    b3l = b3.reshape(1, C3)

    args = (x2d,
            s1, a1, b1l, hp1, wp1,
            s2, a2, b2l, hp2, wp2,
            s3, a3, b3l,
            f1w.T, f1b.reshape(1, NFC1), f2w.T, f2b.reshape(1, n_classes))

    in_specs = [pl.BlockSpec((BT * H0, W0), lambda i: (i, 0))]
    in_specs += [_const_spec(a.shape) for a in args[1:]]

    logp, feats = pl.pallas_call(
        _lenet_kernel,
        out_shape=(jax.ShapeDtypeStruct((b_pad, n_classes), jnp.float32),
                   jax.ShapeDtypeStruct((b_pad, C3), jnp.float32)),
        grid=(n_tiles,),
        in_specs=in_specs,
        out_specs=(pl.BlockSpec((BT, n_classes), lambda i: (i, 0)),
                   pl.BlockSpec((BT, C3), lambda i: (i, 0))),
        compiler_params=pltpu.CompilerParams(
            dimension_semantics=("parallel",)),
    )(*args)
    return logp[:B], feats[:B]


def forward(params, x, return_features=False):
    assert x.shape[1:] == (1, H0, W0), "architecture implies 1x28x28 inputs"
    log_probs, feats = _forward_both(params, x)
    return feats if return_features else log_probs


# --------------------------- params + JAX reference -------------------------

def init_params(n_classes, key):
    """Deterministic PyTorch-default-style (uniform +/- 1/sqrt(fan_in)) init."""
    def conv(k, cout, cin, kh, kw):
        k1, k2 = jax.random.split(k)
        bound = 1.0 / jnp.sqrt(cin * kh * kw)
        return (jax.random.uniform(k1, (cout, cin, kh, kw), jnp.float32, -bound, bound),
                jax.random.uniform(k2, (cout,), jnp.float32, -bound, bound))

    def lin(k, cout, cin):
        k1, k2 = jax.random.split(k)
        bound = 1.0 / jnp.sqrt(cin)
        return (jax.random.uniform(k1, (cout, cin), jnp.float32, -bound, bound),
                jax.random.uniform(k2, (cout,), jnp.float32, -bound, bound))

    keys = jax.random.split(key, 5)
    return {
        "conv1": conv(keys[0], C1, 1, KH, KW),
        "conv2": conv(keys[1], C2, C1, KH, KW),
        "conv3": conv(keys[2], C3, C2, KH, KW),
        "fc1": lin(keys[3], NFC1, C3),
        "fc2": lin(keys[4], n_classes, NFC1),
    }


def _avgpool2_ref(x):
    B, C, H, W = x.shape
    ho, wo = H // 2, W // 2
    x = x[:, :, :ho * 2, :wo * 2].reshape(B, C, ho, 2, wo, 2)
    return x.mean(axis=(3, 5))


def forward_ref(params, x, return_features=False):
    """Plain-JAX reference for correctness checking."""
    def conv(x, w, b):
        y = lax.conv_general_dilated(x, w, (1, 1), "VALID",
                                     dimension_numbers=("NCHW", "OIHW", "NCHW"))
        return jnp.tanh(y + b[None, :, None, None])
    x = _avgpool2_ref(conv(x, *params["conv1"]))
    x = _avgpool2_ref(conv(x, *params["conv2"]))
    x = conv(x, *params["conv3"])
    f = x.reshape(x.shape[0], -1)
    if return_features:
        return f
    h = jnp.tanh(f @ params["fc1"][0].T + params["fc1"][1])
    logits = h @ params["fc2"][0].T + params["fc2"][1]
    return jax.nn.log_softmax(logits, axis=1)


if __name__ == "__main__":
    n_classes = 10
    key = jax.random.PRNGKey(0)
    kp, kx = jax.random.split(key)
    params = init_params(n_classes, kp)
    x = jax.random.normal(kx, (2, 1, H0, W0), jnp.float32)

    log_probs = forward(params, x)
    jax.block_until_ready(log_probs)
    feats = forward(params, x, return_features=True)
    jax.block_until_ready(feats)

    ref_lp = forward_ref(params, x)
    ref_f = forward_ref(params, x, return_features=True)
    assert log_probs.shape == (2, n_classes)
    assert feats.shape == (2, C3)
    assert bool(jnp.allclose(log_probs, ref_lp, atol=2e-4, rtol=2e-4)), "log_softmax mismatch"
    assert bool(jnp.allclose(feats, ref_f, atol=2e-4, rtol=2e-4)), "feature mismatch"
    print("KERNEL_OK")
</pallas_src>

<mosaic_0001>
module attributes {stable_mosaic.version = 11 : i64} {
  func.func private @main(%arg0: i32) attributes {dimension_semantics = [#tpu.dimension_semantics<core_parallel>], iteration_bounds = array<i64: 2>, tpu.core_type = #tpu.core_type<sc_scalar_subcore>, window_params = []} {
    return
  }
}

module attributes {stable_mosaic.version = 11 : i64} {
  func.func private @main(%arg0: i32) attributes {dimension_semantics = [#tpu.dimension_semantics<core_parallel>], iteration_bounds = array<i64: 2>, tpu.core_type = #tpu.core_type<sc_scalar_subcore>, window_params = []} {
    return
  }
}

module attributes {stable_mosaic.version = 11 : i64} {
  func.func @_lenet_kernel(%arg0: i32, %arg1: memref<224x28xf32, #tpu.memory_space<vmem>>, %arg2: memref<4x200x224xf32, #tpu.memory_space<vmem>>, %arg3: memref<4x28x150xf32, #tpu.memory_space<vmem>>, %arg4: memref<1x150xf32, #tpu.memory_space<vmem>>, %arg5: memref<96x200xf32, #tpu.memory_space<vmem>>, %arg6: memref<150x72xf32, #tpu.memory_space<vmem>>, %arg7: memref<4x72x96xf32, #tpu.memory_space<vmem>>, %arg8: memref<4x72x144xf32, #tpu.memory_space<vmem>>, %arg9: memref<1x144xf32, #tpu.memory_space<vmem>>, %arg10: memref<32x72xf32, #tpu.memory_space<vmem>>, %arg11: memref<144x64xf32, #tpu.memory_space<vmem>>, %arg12: memref<4x8x32xf32, #tpu.memory_space<vmem>>, %arg13: memref<4x64x120xf32, #tpu.memory_space<vmem>>, %arg14: memref<1x120xf32, #tpu.memory_space<vmem>>, %arg15: memref<120x84xf32, #tpu.memory_space<vmem>>, %arg16: memref<1x84xf32, #tpu.memory_space<vmem>>, %arg17: memref<84x10xf32, #tpu.memory_space<vmem>>, %arg18: memref<1x10xf32, #tpu.memory_space<vmem>>, %arg19: memref<8x10xf32, #tpu.memory_space<vmem>>, %arg20: memref<8x120xf32, #tpu.memory_space<vmem>>) attributes {dimension_semantics = [#tpu.dimension_semantics<parallel>], iteration_bounds = array<i64: 1>, scalar_prefetch = 0 : i64, scratch_operands = 0 : i64, tpu.core_type = #tpu.core_type<tc>, window_params = [{transform_indices = @transform_0, window_bounds = array<i64: 224, 28>}, {pipeline_mode = #tpu.pipeline_mode<synchronous>, transform_indices = @transform_1, window_bounds = array<i64: 4, 200, 224>}, {pipeline_mode = #tpu.pipeline_mode<synchronous>, transform_indices = @transform_2, window_bounds = array<i64: 4, 28, 150>}, {pipeline_mode = #tpu.pipeline_mode<synchronous>, transform_indices = @transform_3, window_bounds = array<i64: 1, 150>}, {pipeline_mode = #tpu.pipeline_mode<synchronous>, transform_indices = @transform_4, window_bounds = array<i64: 96, 200>}, {pipeline_mode = #tpu.pipeline_mode<synchronous>, transform_indices = @transform_5, window_bounds = array<i64: 150, 72>}, {pipeline_mode = #tpu.pipeline_mode<synchronous>, transform_indices = @transform_6, window_bounds = array<i64: 4, 72, 96>}, {pipeline_mode = #tpu.pipeline_mode<synchronous>, transform_indices = @transform_7, window_bounds = array<i64: 4, 72, 144>}, {pipeline_mode = #tpu.pipeline_mode<synchronous>, transform_indices = @transform_8, window_bounds = array<i64: 1, 144>}, {pipeline_mode = #tpu.pipeline_mode<synchronous>, transform_indices = @transform_9, window_bounds = array<i64: 32, 72>}, {pipeline_mode = #tpu.pipeline_mode<synchronous>, transform_indices = @transform_10, window_bounds = array<i64: 144, 64>}, {pipeline_mode = #tpu.pipeline_mode<synchronous>, transform_indices = @transform_11, window_bounds = array<i64: 4, 8, 32>}, {pipeline_mode = #tpu.pipeline_mode<synchronous>, transform_indices = @transform_12, window_bounds = array<i64: 4, 64, 120>}, {pipeline_mode = #tpu.pipeline_mode<synchronous>, transform_indices = @transform_13, window_bounds = array<i64: 1, 120>}, {pipeline_mode = #tpu.pipeline_mode<synchronous>, transform_indices = @transform_14, window_bounds = array<i64: 120, 84>}, {pipeline_mode = #tpu.pipeline_mode<synchronous>, transform_indices = @transform_15, window_bounds = array<i64: 1, 84>}, {pipeline_mode = #tpu.pipeline_mode<synchronous>, transform_indices = @transform_16, window_bounds = array<i64: 84, 10>}, {pipeline_mode = #tpu.pipeline_mode<synchronous>, transform_indices = @transform_17, window_bounds = array<i64: 1, 10>}, {transform_indices = @transform_18, window_bounds = array<i64: 8, 10>}, {transform_indices = @transform_19, window_bounds = array<i64: 8, 120>}]} {
    %c0 = arith.constant 0 : index
    %c0_0 = arith.constant 0 : index
    %0 = vector.load %arg1[%c0, %c0_0] : memref<224x28xf32, #tpu.memory_space<vmem>>, vector<224x28xf32>
    %c0_1 = arith.constant 0 : index
    %c0_2 = arith.constant 0 : index
    %1 = vector.load %arg4[%c0_1, %c0_2] : memref<1x150xf32, #tpu.memory_space<vmem>>, vector<1x150xf32>
    %c0_3 = arith.constant 0 : index
    %c0_4 = arith.constant 0 : index
    %c0_5 = arith.constant 0 : index
    %2 = vector.load %arg2[%c0_3, %c0_4, %c0_5] : memref<4x200x224xf32, #tpu.memory_space<vmem>>, vector<1x200x224xf32>
    %3 = vector.shape_cast %2 : vector<1x200x224xf32> to vector<200x224xf32>
    %cst = arith.constant dense<0.000000e+00> : vector<200x28xf32>
    %4 = tpu.matmul %3, %0, %cst {dimension_numbers = #tpu.dot_dimension_numbers<[1], [0], [0], [1], [0, 0, 1, 1], [], []>} : vector<200x224xf32>, vector<224x28xf32>, vector<200x28xf32> -> vector<200x28xf32>
    %c0_6 = arith.constant 0 : index
    %c0_7 = arith.constant 0 : index
    %c0_8 = arith.constant 0 : index
    %5 = vector.load %arg3[%c0_6, %c0_7, %c0_8] : memref<4x28x150xf32, #tpu.memory_space<vmem>>, vector<1x28x150xf32>
    %6 = vector.shape_cast %5 : vector<1x28x150xf32> to vector<28x150xf32>
    %cst_9 = arith.constant dense<0.000000e+00> : vector<200x150xf32>
    %7 = tpu.matmul %4, %6, %cst_9 {dimension_numbers = #tpu.dot_dimension_numbers<[1], [0], [0], [1], [0, 0, 1, 1], [], []>} : vector<200x28xf32>, vector<28x150xf32>, vector<200x150xf32> -> vector<200x150xf32>
    %8 = vector.broadcast %1 : vector<1x150xf32> to vector<200x150xf32>
    %9 = arith.addf %8, %7 : vector<200x150xf32>
    %c1 = arith.constant 1 : index
    %c0_10 = arith.constant 0 : index
    %c0_11 = arith.constant 0 : index
    %10 = vector.load %arg2[%c1, %c0_10, %c0_11] : memref<4x200x224xf32, #tpu.memory_space<vmem>>, vector<1x200x224xf32>
    %11 = vector.shape_cast %10 : vector<1x200x224xf32> to vector<200x224xf32>
    %cst_12 = arith.constant dense<0.000000e+00> : vector<200x28xf32>
    %12 = tpu.matmul %11, %0, %cst_12 {dimension_numbers = #tpu.dot_dimension_numbers<[1], [0], [0], [1], [0, 0, 1, 1], [], []>} : vector<200x224xf32>, vector<224x28xf32>, vector<200x28xf32> -> vector<200x28xf32>
    %c1_13 = arith.constant 1 : index
    %c0_14 = arith.constant 0 : index
    %c0_15 = arith.constant 0 : index
    %13 = vector.load %arg3[%c1_13, %c0_14, %c0_15] : memref<4x28x150xf32, #tpu.memory_space<vmem>>, vector<1x28x150xf32>
    %14 = vector.shape_cast %13 : vector<1x28x150xf32> to vector<28x150xf32>
    %cst_16 = arith.constant dense<0.000000e+00> : vector<200x150xf32>
    %15 = tpu.matmul %12, %14, %cst_16 {dimension_numbers = #tpu.dot_dimension_numbers<[1], [0], [0], [1], [0, 0, 1, 1], [], []>} : vector<200x28xf32>, vector<28x150xf32>, vector<200x150xf32> -> vector<200x150xf32>
    %16 = arith.addf %9, %15 : vector<200x150xf32>
    %c2 = arith.constant 2 : index
    %c0_17 = arith.constant 0 : index
    %c0_18 = arith.constant 0 : index
    %17 = vector.load %arg2[%c2, %c0_17, %c0_18] : memref<4x200x224xf32, #tpu.memory_space<vmem>>, vector<1x200x224xf32>
    %18 = vector.shape_cast %17 : vector<1x200x224xf32> to vector<200x224xf32>
    %cst_19 = arith.constant dense<0.000000e+00> : vector<200x28xf32>
    %19 = tpu.matmul %18, %0, %cst_19 {dimension_numbers = #tpu.dot_dimension_numbers<[1], [0], [0], [1], [0, 0, 1, 1], [], []>} : vector<200x224xf32>, vector<224x28xf32>, vector<200x28xf32> -> vector<200x28xf32>
    %c2_20 = arith.constant 2 : index
    %c0_21 = arith.constant 0 : index
    %c0_22 = arith.constant 0 : index
    %20 = vector.load %arg3[%c2_20, %c0_21, %c0_22] : memref<4x28x150xf32, #tpu.memory_space<vmem>>, vector<1x28x150xf32>
    %21 = vector.shape_cast %20 : vector<1x28x150xf32> to vector<28x150xf32>
    %cst_23 = arith.constant dense<0.000000e+00> : vector<200x150xf32>
    %22 = tpu.matmul %19, %21, %cst_23 {dimension_numbers = #tpu.dot_dimension_numbers<[1], [0], [0], [1], [0, 0, 1, 1], [], []>} : vector<200x28xf32>, vector<28x150xf32>, vector<200x150xf32> -> vector<200x150xf32>
    %23 = arith.addf %16, %22 : vector<200x150xf32>
    %c3 = arith.constant 3 : index
    %c0_24 = arith.constant 0 : index
    %c0_25 = arith.constant 0 : index
    %24 = vector.load %arg2[%c3, %c0_24, %c0_25] : memref<4x200x224xf32, #tpu.memory_space<vmem>>, vector<1x200x224xf32>
    %25 = vector.shape_cast %24 : vector<1x200x224xf32> to vector<200x224xf32>
    %cst_26 = arith.constant dense<0.000000e+00> : vector<200x28xf32>
    %26 = tpu.matmul %25, %0, %cst_26 {dimension_numbers = #tpu.dot_dimension_numbers<[1], [0], [0], [1], [0, 0, 1, 1], [], []>} : vector<200x224xf32>, vector<224x28xf32>, vector<200x28xf32> -> vector<200x28xf32>
    %c3_27 = arith.constant 3 : index
    %c0_28 = arith.constant 0 : index
    %c0_29 = arith.constant 0 : index
    %27 = vector.load %arg3[%c3_27, %c0_28, %c0_29] : memref<4x28x150xf32, #tpu.memory_space<vmem>>, vector<1x28x150xf32>
    %28 = vector.shape_cast %27 : vector<1x28x150xf32> to vector<28x150xf32>
    %cst_30 = arith.constant dense<0.000000e+00> : vector<200x150xf32>
    %29 = tpu.matmul %26, %28, %cst_30 {dimension_numbers = #tpu.dot_dimension_numbers<[1], [0], [0], [1], [0, 0, 1, 1], [], []>} : vector<200x28xf32>, vector<28x150xf32>, vector<200x150xf32> -> vector<200x150xf32>
    %30 = arith.addf %23, %29 : vector<200x150xf32>
    %31 = math.tanh %30 : vector<200x150xf32>
    %c0_31 = arith.constant 0 : index
    %c0_32 = arith.constant 0 : index
    %32 = vector.load %arg5[%c0_31, %c0_32] : memref<96x200xf32, #tpu.memory_space<vmem>>, vector<96x200xf32>
    %cst_33 = arith.constant dense<0.000000e+00> : vector<96x150xf32>
    %33 = tpu.matmul %32, %31, %cst_33 {dimension_numbers = #tpu.dot_dimension_numbers<[1], [0], [0], [1], [0, 0, 1, 1], [], []>} : vector<96x200xf32>, vector<200x150xf32>, vector<96x150xf32> -> vector<96x150xf32>
    %c0_34 = arith.constant 0 : index
    %c0_35 = arith.constant 0 : index
    %34 = vector.load %arg6[%c0_34, %c0_35] : memref<150x72xf32, #tpu.memory_space<vmem>>, vector<150x72xf32>
    %cst_36 = arith.constant dense<0.000000e+00> : vector<96x72xf32>
    %35 = tpu.matmul %33, %34, %cst_36 {dimension_numbers = #tpu.dot_dimension_numbers<[1], [0], [0], [1], [0, 0, 1, 1], [], []>} : vector<96x150xf32>, vector<150x72xf32>, vector<96x72xf32> -> vector<96x72xf32>
    %c0_37 = arith.constant 0 : index
    %c0_38 = arith.constant 0 : index
    %36 = vector.load %arg9[%c0_37, %c0_38] : memref<1x144xf32, #tpu.memory_space<vmem>>, vector<1x144xf32>
    %c0_39 = arith.constant 0 : index
    %c0_40 = arith.constant 0 : index
    %c0_41 = arith.constant 0 : index
    %37 = vector.load %arg7[%c0_39, %c0_40, %c0_41] : memref<4x72x96xf32, #tpu.memory_space<vmem>>, vector<1x72x96xf32>
    %38 = vector.shape_cast %37 : vector<1x72x96xf32> to vector<72x96xf32>
    %cst_42 = arith.constant dense<0.000000e+00> : vector<72x72xf32>
    %39 = tpu.matmul %38, %35, %cst_42 {dimension_numbers = #tpu.dot_dimension_numbers<[1], [0], [0], [1], [0, 0, 1, 1], [], []>} : vector<72x96xf32>, vector<96x72xf32>, vector<72x72xf32> -> vector<72x72xf32>
    %c0_43 = arith.constant 0 : index
    %c0_44 = arith.constant 0 : index
    %c0_45 = arith.constant 0 : index
    %40 = vector.load %arg8[%c0_43, %c0_44, %c0_45] : memref<4x72x144xf32, #tpu.memory_space<vmem>>, vector<1x72x144xf32>
    %41 = vector.shape_cast %40 : vector<1x72x144xf32> to vector<72x144xf32>
    %cst_46 = arith.constant dense<0.000000e+00> : vector<72x144xf32>
    %42 = tpu.matmul %39, %41, %cst_46 {dimension_numbers = #tpu.dot_dimension_numbers<[1], [0], [0], [1], [0, 0, 1, 1], [], []>} : vector<72x72xf32>, vector<72x144xf32>, vector<72x144xf32> -> vector<72x144xf32>
    %43 = vector.broadcast %36 : vector<1x144xf32> to vector<72x144xf32>
    %44 = arith.addf %43, %42 : vector<72x144xf32>
    %c1_47 = arith.constant 1 : index
    %c0_48 = arith.constant 0 : index
    %c0_49 = arith.constant 0 : index
    %45 = vector.load %arg7[%c1_47, %c0_48, %c0_49] : memref<4x72x96xf32, #tpu.memory_space<vmem>>, vector<1x72x96xf32>
    %46 = vector.shape_cast %45 : vector<1x72x96xf32> to vector<72x96xf32>
    %cst_50 = arith.constant dense<0.000000e+00> : vector<72x72xf32>
    %47 = tpu.matmul %46, %35, %cst_50 {dimension_numbers = #tpu.dot_dimension_numbers<[1], [0], [0], [1], [0, 0, 1, 1], [], []>} : vector<72x96xf32>, vector<96x72xf32>, vector<72x72xf32> -> vector<72x72xf32>
    %c1_51 = arith.constant 1 : index
    %c0_52 = arith.constant 0 : index
    %c0_53 = arith.constant 0 : index
    %48 = vector.load %arg8[%c1_51, %c0_52, %c0_53] : memref<4x72x144xf32, #tpu.memory_space<vmem>>, vector<1x72x144xf32>
    %49 = vector.shape_cast %48 : vector<1x72x144xf32> to vector<72x144xf32>
    %cst_54 = arith.constant dense<0.000000e+00> : vector<72x144xf32>
    %50 = tpu.matmul %47, %49, %cst_54 {dimension_numbers = #tpu.dot_dimension_numbers<[1], [0], [0], [1], [0, 0, 1, 1], [], []>} : vector<72x72xf32>, vector<72x144xf32>, vector<72x144xf32> -> vector<72x144xf32>
    %51 = arith.addf %44, %50 : vector<72x144xf32>
    %c2_55 = arith.constant 2 : index
    %c0_56 = arith.constant 0 : index
    %c0_57 = arith.constant 0 : index
    %52 = vector.load %arg7[%c2_55, %c0_56, %c0_57] : memref<4x72x96xf32, #tpu.memory_space<vmem>>, vector<1x72x96xf32>
    %53 = vector.shape_cast %52 : vector<1x72x96xf32> to vector<72x96xf32>
    %cst_58 = arith.constant dense<0.000000e+00> : vector<72x72xf32>
    %54 = tpu.matmul %53, %35, %cst_58 {dimension_numbers = #tpu.dot_dimension_numbers<[1], [0], [0], [1], [0, 0, 1, 1], [], []>} : vector<72x96xf32>, vector<96x72xf32>, vector<72x72xf32> -> vector<72x72xf32>
    %c2_59 = arith.constant 2 : index
    %c0_60 = arith.constant 0 : index
    %c0_61 = arith.constant 0 : index
    %55 = vector.load %arg8[%c2_59, %c0_60, %c0_61] : memref<4x72x144xf32, #tpu.memory_space<vmem>>, vector<1x72x144xf32>
    %56 = vector.shape_cast %55 : vector<1x72x144xf32> to vector<72x144xf32>
    %cst_62 = arith.constant dense<0.000000e+00> : vector<72x144xf32>
    %57 = tpu.matmul %54, %56, %cst_62 {dimension_numbers = #tpu.dot_dimension_numbers<[1], [0], [0], [1], [0, 0, 1, 1], [], []>} : vector<72x72xf32>, vector<72x144xf32>, vector<72x144xf32> -> vector<72x144xf32>
    %58 = arith.addf %51, %57 : vector<72x144xf32>
    %c3_63 = arith.constant 3 : index
    %c0_64 = arith.constant 0 : index
    %c0_65 = arith.constant 0 : index
    %59 = vector.load %arg7[%c3_63, %c0_64, %c0_65] : memref<4x72x96xf32, #tpu.memory_space<vmem>>, vector<1x72x96xf32>
    %60 = vector.shape_cast %59 : vector<1x72x96xf32> to vector<72x96xf32>
    %cst_66 = arith.constant dense<0.000000e+00> : vector<72x72xf32>
    %61 = tpu.matmul %60, %35, %cst_66 {dimension_numbers = #tpu.dot_dimension_numbers<[1], [0], [0], [1], [0, 0, 1, 1], [], []>} : vector<72x96xf32>, vector<96x72xf32>, vector<72x72xf32> -> vector<72x72xf32>
    %c3_67 = arith.constant 3 : index
    %c0_68 = arith.constant 0 : index
    %c0_69 = arith.constant 0 : index
    %62 = vector.load %arg8[%c3_67, %c0_68, %c0_69] : memref<4x72x144xf32, #tpu.memory_space<vmem>>, vector<1x72x144xf32>
    %63 = vector.shape_cast %62 : vector<1x72x144xf32> to vector<72x144xf32>
    %cst_70 = arith.constant dense<0.000000e+00> : vector<72x144xf32>
    %64 = tpu.matmul %61, %63, %cst_70 {dimension_numbers = #tpu.dot_dimension_numbers<[1], [0], [0], [1], [0, 0, 1, 1], [], []>} : vector<72x72xf32>, vector<72x144xf32>, vector<72x144xf32> -> vector<72x144xf32>
    %65 = arith.addf %58, %64 : vector<72x144xf32>
    %66 = math.tanh %65 : vector<72x144xf32>
    %c0_71 = arith.constant 0 : index
    %c0_72 = arith.constant 0 : index
    %67 = vector.load %arg10[%c0_71, %c0_72] : memref<32x72xf32, #tpu.memory_space<vmem>>, vector<32x72xf32>
    %cst_73 = arith.constant dense<0.000000e+00> : vector<32x144xf32>
    %68 = tpu.matmul %67, %66, %cst_73 {dimension_numbers = #tpu.dot_dimension_numbers<[1], [0], [0], [1], [0, 0, 1, 1], [], []>} : vector<32x72xf32>, vector<72x144xf32>, vector<32x144xf32> -> vector<32x144xf32>
    %c0_74 = arith.constant 0 : index
    %c0_75 = arith.constant 0 : index
    %69 = vector.load %arg11[%c0_74, %c0_75] : memref<144x64xf32, #tpu.memory_space<vmem>>, vector<144x64xf32>
    %cst_76 = arith.constant dense<0.000000e+00> : vector<32x64xf32>
    %70 = tpu.matmul %68, %69, %cst_76 {dimension_numbers = #tpu.dot_dimension_numbers<[1], [0], [0], [1], [0, 0, 1, 1], [], []>} : vector<32x144xf32>, vector<144x64xf32>, vector<32x64xf32> -> vector<32x64xf32>
    %c0_77 = arith.constant 0 : index
    %c0_78 = arith.constant 0 : index
    %71 = vector.load %arg14[%c0_77, %c0_78] : memref<1x120xf32, #tpu.memory_space<vmem>>, vector<1x120xf32>
    %c0_79 = arith.constant 0 : index
    %c0_80 = arith.constant 0 : index
    %c0_81 = arith.constant 0 : index
    %72 = vector.load %arg12[%c0_79, %c0_80, %c0_81] : memref<4x8x32xf32, #tpu.memory_space<vmem>>, vector<1x8x32xf32>
    %73 = vector.shape_cast %72 : vector<1x8x32xf32> to vector<8x32xf32>
    %cst_82 = arith.constant dense<0.000000e+00> : vector<8x64xf32>
    %74 = tpu.matmul %73, %70, %cst_82 {dimension_numbers = #tpu.dot_dimension_numbers<[1], [0], [0], [1], [0, 0, 1, 1], [], []>} : vector<8x32xf32>, vector<32x64xf32>, vector<8x64xf32> -> vector<8x64xf32>
    %c0_83 = arith.constant 0 : index
    %c0_84 = arith.constant 0 : index
    %c0_85 = arith.constant 0 : index
    %75 = vector.load %arg13[%c0_83, %c0_84, %c0_85] : memref<4x64x120xf32, #tpu.memory_space<vmem>>, vector<1x64x120xf32>
    %76 = vector.shape_cast %75 : vector<1x64x120xf32> to vector<64x120xf32>
    %cst_86 = arith.constant dense<0.000000e+00> : vector<8x120xf32>
    %77 = tpu.matmul %74, %76, %cst_86 {dimension_numbers = #tpu.dot_dimension_numbers<[1], [0], [0], [1], [0, 0, 1, 1], [], []>} : vector<8x64xf32>, vector<64x120xf32>, vector<8x120xf32> -> vector<8x120xf32>
    %78 = vector.broadcast %71 : vector<1x120xf32> to vector<8x120xf32>
    %79 = arith.addf %78, %77 : vector<8x120xf32>
    %c1_87 = arith.constant 1 : index
    %c0_88 = arith.constant 0 : index
    %c0_89 = arith.constant 0 : index
    %80 = vector.load %arg12[%c1_87, %c0_88, %c0_89] : memref<4x8x32xf32, #tpu.memory_space<vmem>>, vector<1x8x32xf32>
    %81 = vector.shape_cast %80 : vector<1x8x32xf32> to vector<8x32xf32>
    %cst_90 = arith.constant dense<0.000000e+00> : vector<8x64xf32>
    %82 = tpu.matmul %81, %70, %cst_90 {dimension_numbers = #tpu.dot_dimension_numbers<[1], [0], [0], [1], [0, 0, 1, 1], [], []>} : vector<8x32xf32>, vector<32x64xf32>, vector<8x64xf32> -> vector<8x64xf32>
    %c1_91 = arith.constant 1 : index
    %c0_92 = arith.constant 0 : index
    %c0_93 = arith.constant 0 : index
    %83 = vector.load %arg13[%c1_91, %c0_92, %c0_93] : memref<4x64x120xf32, #tpu.memory_space<vmem>>, vector<1x64x120xf32>
    %84 = vector.shape_cast %83 : vector<1x64x120xf32> to vector<64x120xf32>
    %cst_94 = arith.constant dense<0.000000e+00> : vector<8x120xf32>
    %85 = tpu.matmul %82, %84, %cst_94 {dimension_numbers = #tpu.dot_dimension_numbers<[1], [0], [0], [1], [0, 0, 1, 1], [], []>} : vector<8x64xf32>, vector<64x120xf32>, vector<8x120xf32> -> vector<8x120xf32>
    %86 = arith.addf %79, %85 : vector<8x120xf32>
    %c2_95 = arith.constant 2 : index
    %c0_96 = arith.constant 0 : index
    %c0_97 = arith.constant 0 : index
    %87 = vector.load %arg12[%c2_95, %c0_96, %c0_97] : memref<4x8x32xf32, #tpu.memory_space<vmem>>, vector<1x8x32xf32>
    %88 = vector.shape_cast %87 : vector<1x8x32xf32> to vector<8x32xf32>
    %cst_98 = arith.constant dense<0.000000e+00> : vector<8x64xf32>
    %89 = tpu.matmul %88, %70, %cst_98 {dimension_numbers = #tpu.dot_dimension_numbers<[1], [0], [0], [1], [0, 0, 1, 1], [], []>} : vector<8x32xf32>, vector<32x64xf32>, vector<8x64xf32> -> vector<8x64xf32>
    %c2_99 = arith.constant 2 : index
    %c0_100 = arith.constant 0 : index
    %c0_101 = arith.constant 0 : index
    %90 = vector.load %arg13[%c2_99, %c0_100, %c0_101] : memref<4x64x120xf32, #tpu.memory_space<vmem>>, vector<1x64x120xf32>
    %91 = vector.shape_cast %90 : vector<1x64x120xf32> to vector<64x120xf32>
    %cst_102 = arith.constant dense<0.000000e+00> : vector<8x120xf32>
    %92 = tpu.matmul %89, %91, %cst_102 {dimension_numbers = #tpu.dot_dimension_numbers<[1], [0], [0], [1], [0, 0, 1, 1], [], []>} : vector<8x64xf32>, vector<64x120xf32>, vector<8x120xf32> -> vector<8x120xf32>
    %93 = arith.addf %86, %92 : vector<8x120xf32>
    %c3_103 = arith.constant 3 : index
    %c0_104 = arith.constant 0 : index
    %c0_105 = arith.constant 0 : index
    %94 = vector.load %arg12[%c3_103, %c0_104, %c0_105] : memref<4x8x32xf32, #tpu.memory_space<vmem>>, vector<1x8x32xf32>
    %95 = vector.shape_cast %94 : vector<1x8x32xf32> to vector<8x32xf32>
    %cst_106 = arith.constant dense<0.000000e+00> : vector<8x64xf32>
    %96 = tpu.matmul %95, %70, %cst_106 {dimension_numbers = #tpu.dot_dimension_numbers<[1], [0], [0], [1], [0, 0, 1, 1], [], []>} : vector<8x32xf32>, vector<32x64xf32>, vector<8x64xf32> -> vector<8x64xf32>
    %c3_107 = arith.constant 3 : index
    %c0_108 = arith.constant 0 : index
    %c0_109 = arith.constant 0 : index
    %97 = vector.load %arg13[%c3_107, %c0_108, %c0_109] : memref<4x64x120xf32, #tpu.memory_space<vmem>>, vector<1x64x120xf32>
    %98 = vector.shape_cast %97 : vector<1x64x120xf32> to vector<64x120xf32>
    %cst_110 = arith.constant dense<0.000000e+00> : vector<8x120xf32>
    %99 = tpu.matmul %96, %98, %cst_110 {dimension_numbers = #tpu.dot_dimension_numbers<[1], [0], [0], [1], [0, 0, 1, 1], [], []>} : vector<8x64xf32>, vector<64x120xf32>, vector<8x120xf32> -> vector<8x120xf32>
    %100 = arith.addf %93, %99 : vector<8x120xf32>
    %101 = math.tanh %100 : vector<8x120xf32>
    %c0_111 = arith.constant 0 : index
    %c0_112 = arith.constant 0 : index
    %102 = vector.load %arg15[%c0_111, %c0_112] : memref<120x84xf32, #tpu.memory_space<vmem>>, vector<120x84xf32>
    %cst_113 = arith.constant dense<0.000000e+00> : vector<8x84xf32>
    %103 = tpu.matmul %101, %102, %cst_113 {dimension_numbers = #tpu.dot_dimension_numbers<[1], [0], [0], [1], [0, 0, 1, 1], [], []>} : vector<8x120xf32>, vector<120x84xf32>, vector<8x84xf32> -> vector<8x84xf32>
    %c0_114 = arith.constant 0 : index
    %c0_115 = arith.constant 0 : index
    %104 = vector.load %arg16[%c0_114, %c0_115] : memref<1x84xf32, #tpu.memory_space<vmem>>, vector<1x84xf32>
    %105 = vector.broadcast %104 : vector<1x84xf32> to vector<8x84xf32>
    %106 = arith.addf %103, %105 : vector<8x84xf32>
    %107 = math.tanh %106 : vector<8x84xf32>
    %c0_116 = arith.constant 0 : index
    %c0_117 = arith.constant 0 : index
    %108 = vector.load %arg17[%c0_116, %c0_117] : memref<84x10xf32, #tpu.memory_space<vmem>>, vector<84x10xf32>
    %cst_118 = arith.constant dense<0.000000e+00> : vector<8x10xf32>
    %109 = tpu.matmul %107, %108, %cst_118 {dimension_numbers = #tpu.dot_dimension_numbers<[1], [0], [0], [1], [0, 0, 1, 1], [], []>} : vector<8x84xf32>, vector<84x10xf32>, vector<8x10xf32> -> vector<8x10xf32>
    %c0_119 = arith.constant 0 : index
    %c0_120 = arith.constant 0 : index
    %110 = vector.load %arg18[%c0_119, %c0_120] : memref<1x10xf32, #tpu.memory_space<vmem>>, vector<1x10xf32>
    %111 = vector.broadcast %110 : vector<1x10xf32> to vector<8x10xf32>
    %112 = arith.addf %109, %111 : vector<8x10xf32>
    %cst_121 = arith.constant dense<0xFF800000> : vector<8xf32>
    %113 = vector.multi_reduction <maximumf>, %112, %cst_121 [1] : vector<8x10xf32> to vector<8xf32>
    %114 = vector.shape_cast %113 : vector<8xf32> to vector<8x1xf32>
    %115 = vector.broadcast %114 : vector<8x1xf32> to vector<8x10xf32>
    %116 = arith.subf %112, %115 : vector<8x10xf32>
    %117 = math.exp %116 : vector<8x10xf32>
    %cst_122 = arith.constant dense<0.000000e+00> : vector<8xf32>
    %118 = vector.multi_reduction <add>, %117, %cst_122 [1] : vector<8x10xf32> to vector<8xf32>
    %119 = vector.shape_cast %118 : vector<8xf32> to vector<8x1xf32>
    %120 = math.log %119 : vector<8x1xf32>
    %121 = vector.broadcast %120 : vector<8x1xf32> to vector<8x10xf32>
    %122 = arith.subf %116, %121 : vector<8x10xf32>
    %c0_123 = arith.constant 0 : index
    %c0_124 = arith.constant 0 : index
    %123 = vector.load %arg20[%c0_123, %c0_124] : memref<8x120xf32, #tpu.memory_space<vmem>>, vector<8x120xf32>
    tpu.vector_store %arg20[%c0_123, %c0_124], %101 {strides = array<i32>} : memref<8x120xf32, #tpu.memory_space<vmem>>, vector<8x120xf32>,
    %c0_125 = arith.constant 0 : index
    %c0_126 = arith.constant 0 : index
    %124 = vector.load %arg19[%c0_125, %c0_126] : memref<8x10xf32, #tpu.memory_space<vmem>>, vector<8x10xf32>
    tpu.vector_store %arg19[%c0_125, %c0_126], %122 {strides = array<i32>} : memref<8x10xf32, #tpu.memory_space<vmem>>, vector<8x10xf32>,
    return
  }
  func.func @transform_0(%arg0: i32) -> (i32, i32) {
    %c0_i32 = arith.constant 0 : i32
    %c0_i32_0 = arith.constant 0 : i32
    return %arg0, %c0_i32 : i32, i32
  }
  func.func @transform_1(%arg0: i32) -> (i32, i32, i32) {
    %c0_i32 = arith.constant 0 : i32
    %c0_i32_0 = arith.constant 0 : i32
    %c0_i32_1 = arith.constant 0 : i32
    %c0_i32_2 = arith.constant 0 : i32
    return %c0_i32, %c0_i32_0, %c0_i32_1 : i32, i32, i32
  }
  func.func @transform_2(%arg0: i32) -> (i32, i32, i32) {
    %c0_i32 = arith.constant 0 : i32
    %c0_i32_0 = arith.constant 0 : i32
    %c0_i32_1 = arith.constant 0 : i32
    %c0_i32_2 = arith.constant 0 : i32
    return %c0_i32, %c0_i32_0, %c0_i32_1 : i32, i32, i32
  }
  func.func @transform_3(%arg0: i32) -> (i32, i32) {
    %c0_i32 = arith.constant 0 : i32
    %c0_i32_0 = arith.constant 0 : i32
    %c0_i32_1 = arith.constant 0 : i32
    return %c0_i32, %c0_i32_0 : i32, i32
  }
  func.func @transform_4(%arg0: i32) -> (i32, i32) {
    %c0_i32 = arith.constant 0 : i32
    %c0_i32_0 = arith.constant 0 : i32
    %c0_i32_1 = arith.constant 0 : i32
    return %c0_i32, %c0_i32_0 : i32, i32
  }
  func.func @transform_5(%arg0: i32) -> (i32, i32) {
    %c0_i32 = arith.constant 0 : i32
    %c0_i32_0 = arith.constant 0 : i32
    %c0_i32_1 = arith.constant 0 : i32
    return %c0_i32, %c0_i32_0 : i32, i32
  }
  func.func @transform_6(%arg0: i32) -> (i32, i32, i32) {
    %c0_i32 = arith.constant 0 : i32
    %c0_i32_0 = arith.constant 0 : i32
    %c0_i32_1 = arith.constant 0 : i32
    %c0_i32_2 = arith.constant 0 : i32
    return %c0_i32, %c0_i32_0, %c0_i32_1 : i32, i32, i32
  }
  func.func @transform_7(%arg0: i32) -> (i32, i32, i32) {
    %c0_i32 = arith.constant 0 : i32
    %c0_i32_0 = arith.constant 0 : i32
    %c0_i32_1 = arith.constant 0 : i32
    %c0_i32_2 = arith.constant 0 : i32
    return %c0_i32, %c0_i32_0, %c0_i32_1 : i32, i32, i32
  }
  func.func @transform_8(%arg0: i32) -> (i32, i32) {
    %c0_i32 = arith.constant 0 : i32
    %c0_i32_0 = arith.constant 0 : i32
    %c0_i32_1 = arith.constant 0 : i32
    return %c0_i32, %c0_i32_0 : i32, i32
  }
  func.func @transform_9(%arg0: i32) -> (i32, i32) {
    %c0_i32 = arith.constant 0 : i32
    %c0_i32_0 = arith.constant 0 : i32
    %c0_i32_1 = arith.constant 0 : i32
    return %c0_i32, %c0_i32_0 : i32, i32
  }
  func.func @transform_10(%arg0: i32) -> (i32, i32) {
    %c0_i32 = arith.constant 0 : i32
    %c0_i32_0 = arith.constant 0 : i32
    %c0_i32_1 = arith.constant 0 : i32
    return %c0_i32, %c0_i32_0 : i32, i32
  }
  func.func @transform_11(%arg0: i32) -> (i32, i32, i32) {
    %c0_i32 = arith.constant 0 : i32
    %c0_i32_0 = arith.constant 0 : i32
    %c0_i32_1 = arith.constant 0 : i32
    %c0_i32_2 = arith.constant 0 : i32
    return %c0_i32, %c0_i32_0, %c0_i32_1 : i32, i32, i32
  }
  func.func @transform_12(%arg0: i32) -> (i32, i32, i32) {
    %c0_i32 = arith.constant 0 : i32
    %c0_i32_0 = arith.constant 0 : i32
    %c0_i32_1 = arith.constant 0 : i32
    %c0_i32_2 = arith.constant 0 : i32
    return %c0_i32, %c0_i32_0, %c0_i32_1 : i32, i32, i32
  }
  func.func @transform_13(%arg0: i32) -> (i32, i32) {
    %c0_i32 = arith.constant 0 : i32
    %c0_i32_0 = arith.constant 0 : i32
    %c0_i32_1 = arith.constant 0 : i32
    return %c0_i32, %c0_i32_0 : i32, i32
  }
  func.func @transform_14(%arg0: i32) -> (i32, i32) {
    %c0_i32 = arith.constant 0 : i32
    %c0_i32_0 = arith.constant 0 : i32
    %c0_i32_1 = arith.constant 0 : i32
    return %c0_i32, %c0_i32_0 : i32, i32
  }
  func.func @transform_15(%arg0: i32) -> (i32, i32) {
    %c0_i32 = arith.constant 0 : i32
    %c0_i32_0 = arith.constant 0 : i32
    %c0_i32_1 = arith.constant 0 : i32
    return %c0_i32, %c0_i32_0 : i32, i32
  }
  func.func @transform_16(%arg0: i32) -> (i32, i32) {
    %c0_i32 = arith.constant 0 : i32
    %c0_i32_0 = arith.constant 0 : i32
    %c0_i32_1 = arith.constant 0 : i32
    return %c0_i32, %c0_i32_0 : i32, i32
  }
  func.func @transform_17(%arg0: i32) -> (i32, i32) {
    %c0_i32 = arith.constant 0 : i32
    %c0_i32_0 = arith.constant 0 : i32
    %c0_i32_1 = arith.constant 0 : i32
    return %c0_i32, %c0_i32_0 : i32, i32
  }
  func.func @transform_18(%arg0: i32) -> (i32, i32) {
    %c0_i32 = arith.constant 0 : i32
    %c0_i32_0 = arith.constant 0 : i32
    return %arg0, %c0_i32 : i32, i32
  }
  func.func @transform_19(%arg0: i32) -> (i32, i32) {
    %c0_i32 = arith.constant 0 : i32
    %c0_i32_0 = arith.constant 0 : i32
    return %arg0, %c0_i32 : i32, i32
  }
}

</mosaic_0001>

<llo_original>
// kernel: _forward_both.1
$region0: #{_forward_both.1}
  #allocation0 [shape = 'u32[]', space=smem, size = 0x4, offset = 0x4, fixed_abs, tag = 'smem constant byte address 0x4 - core index']
  #allocation1 [shape = 'u32[144,128]{1,0:T(1,128)}', space=vmem, size = 0x12000, scoped, tag = 'internal scratch']
  %s0 = inlined_call_operand.vmem [shape: f32[224,28], index: 0, kind: input, shape index: {}]
  %s1 = inlined_call_operand.vmem [shape: f32[4,200,224], index: 1, kind: input, shape index: {}]
  %s2 = inlined_call_operand.vmem [shape: f32[4,28,150], index: 2, kind: input, shape index: {}]
  %s3 = inlined_call_operand.vmem [shape: f32[1,150], index: 3, kind: input, shape index: {}]
  %s4 = inlined_call_operand.vmem [shape: f32[96,200], index: 4, kind: input, shape index: {}]
  %s5 = inlined_call_operand.vmem [shape: f32[150,72], index: 5, kind: input, shape index: {}]
  %s6 = inlined_call_operand.vmem [shape: f32[4,72,96], index: 6, kind: input, shape index: {}]
  %s7 = inlined_call_operand.vmem [shape: f32[4,72,144], index: 7, kind: input, shape index: {}]
  %s8 = inlined_call_operand.vmem [shape: f32[1,144], index: 8, kind: input, shape index: {}]
  %s9 = inlined_call_operand.vmem [shape: f32[32,72], index: 9, kind: input, shape index: {}]
  %s10 = inlined_call_operand.vmem [shape: f32[144,64], index: 10, kind: input, shape index: {}]
  %s11 = inlined_call_operand.vmem [shape: f32[4,8,32], index: 11, kind: input, shape index: {}]
  %s12 = inlined_call_operand.vmem [shape: f32[4,64,120], index: 12, kind: input, shape index: {}]
  %s13 = inlined_call_operand.vmem [shape: f32[1,120], index: 13, kind: input, shape index: {}]
  %s14 = inlined_call_operand.vmem [shape: f32[120,84], index: 14, kind: input, shape index: {}]
  %s15 = inlined_call_operand.vmem [shape: f32[1,84], index: 15, kind: input, shape index: {}]
  %s16 = inlined_call_operand.vmem [shape: f32[84,10], index: 16, kind: input, shape index: {}]
  %s17 = inlined_call_operand.vmem [shape: f32[1,10], index: 17, kind: input, shape index: {}]
  %s18 = inlined_call_operand.vmem [shape: f32[8,10], index: 18, kind: output, shape index: {0}]
  %s19 = inlined_call_operand.vmem [shape: f32[8,120], index: 19, kind: output, shape index: {1}]
  %20 = xla_tuple %s18, %s19
  %s21 = sld [smem:[#allocation0]]
  $region90: #{_forward_both.1} parent=0
    _
  %s23 = ssub.s32 1, %s21
  %s24 = scalar_select 0, %s23, %s21
  // Predicated region
  $region2: #{_forward_both.1} parent=0 // pred_check
    _
  $region3: #{_forward_both.1} parent=0 // pred_check_branch
    %26 = sbr.rel (0) target = $region5
  $region4: #{_forward_both.1} parent=0 // pred_region
    _
  $region5: #{_forward_both.1} parent=0 // pred_fallthru
    _
  // Predicated region
  $region6: #{_forward_both.1} parent=0 // pred_check
    _
  $region7: #{_forward_both.1} parent=0 // pred_check_branch
    %28 = sbr.rel (0) target = $region9
  $region8: #{_forward_both.1} parent=0 // pred_region
    _
  $region9: #{_forward_both.1} parent=0 // pred_fallthru
    _
  // Predicated region
  $region10: #{_forward_both.1} parent=0 // pred_check
    _
  $region11: #{_forward_both.1} parent=0 // pred_check_branch
    %30 = sbr.rel (0) target = $region13
  $region12: #{_forward_both.1} parent=0 // pred_region
    _
  $region13: #{_forward_both.1} parent=0 // pred_fallthru
    _
  // Predicated region
  $region14: #{_forward_both.1} parent=0 // pred_check
    _
  $region15: #{_forward_both.1} parent=0 // pred_check_branch
    %32 = sbr.rel (0) target = $region17
  $region16: #{_forward_both.1} parent=0 // pred_region
    _
  $region17: #{_forward_both.1} parent=0 // pred_fallthru
    _
  // Predicated region
  $region18: #{_forward_both.1} parent=0 // pred_check
    _
  $region19: #{_forward_both.1} parent=0 // pred_check_branch
    %34 = sbr.rel (0) target = $region21
  $region20: #{_forward_both.1} parent=0 // pred_region
    _
  $region21: #{_forward_both.1} parent=0 // pred_fallthru
    _
  // Predicated region
  $region22: #{_forward_both.1} parent=0 // pred_check
    _
  $region23: #{_forward_both.1} parent=0 // pred_check_branch
    %36 = sbr.rel (0) target = $region25
  $region24: #{_forward_both.1} parent=0 // pred_region
    _
  $region25: #{_forward_both.1} parent=0 // pred_fallthru
    _
  // Predicated region
  $region26: #{_forward_both.1} parent=0 // pred_check
    _
  $region27: #{_forward_both.1} parent=0 // pred_check_branch
    %38 = sbr.rel (0) target = $region29
  $region28: #{_forward_both.1} parent=0 // pred_region
    _
  $region29: #{_forward_both.1} parent=0 // pred_fallthru
    _
  // Predicated region
  $region30: #{_forward_both.1} parent=0 // pred_check
    _
  $region31: #{_forward_both.1} parent=0 // pred_check_branch
    %40 = sbr.rel (0) target = $region33
  $region32: #{_forward_both.1} parent=0 // pred_region
    _
  $region33: #{_forward_both.1} parent=0 // pred_fallthru
    _
  // Predicated region
  $region34: #{_forward_both.1} parent=0 // pred_check
    _
  $region35: #{_forward_both.1} parent=0 // pred_check_branch
    %42 = sbr.rel (0) target = $region37
  $region36: #{_forward_both.1} parent=0 // pred_region
    _
  $region37: #{_forward_both.1} parent=0 // pred_fallthru
    _
  // Predicated region
  $region38: #{_forward_both.1} parent=0 // pred_check
    _
  $region39: #{_forward_both.1} parent=0 // pred_check_branch
    %44 = sbr.rel (0) target = $region41
  $region40: #{_forward_both.1} parent=0 // pred_region
    _
  $region41: #{_forward_both.1} parent=0 // pred_fallthru
    _
  // Predicated region
  $region42: #{_forward_both.1} parent=0 // pred_check
    _
  $region43: #{_forward_both.1} parent=0 // pred_check_branch
    %46 = sbr.rel (0) target = $region45
  $region44: #{_forward_both.1} parent=0 // pred_region
    _
  $region45: #{_forward_both.1} parent=0 // pred_fallthru
    _
  // Predicated region
  $region46: #{_forward_both.1} parent=0 // pred_check
    _
  $region47: #{_forward_both.1} parent=0 // pred_check_branch
    %48 = sbr.rel (0) target = $region49
  $region48: #{_forward_both.1} parent=0 // pred_region
    _
  $region49: #{_forward_both.1} parent=0 // pred_fallthru
    _
  // Predicated region
  $region50: #{_forward_both.1} parent=0 // pred_check
    _
  $region51: #{_forward_both.1} parent=0 // pred_check_branch
    %50 = sbr.rel (0) target = $region53
  $region52: #{_forward_both.1} parent=0 // pred_region
    _
  $region53: #{_forward_both.1} parent=0 // pred_fallthru
    _
  // Predicated region
  $region54: #{_forward_both.1} parent=0 // pred_check
    _
  $region55: #{_forward_both.1} parent=0 // pred_check_branch
    %52 = sbr.rel (0) target = $region57
  $region56: #{_forward_both.1} parent=0 // pred_region
    _
  $region57: #{_forward_both.1} parent=0 // pred_fallthru
    _
  // Predicated region
  $region58: #{_forward_both.1} parent=0 // pred_check
    _
  $region59: #{_forward_both.1} parent=0 // pred_check_branch
    %54 = sbr.rel (0) target = $region61
  $region60: #{_forward_both.1} parent=0 // pred_region
    _
  $region61: #{_forward_both.1} parent=0 // pred_fallthru
    _
  // Predicated region
  $region62: #{_forward_both.1} parent=0 // pred_check
    _
  $region63: #{_forward_both.1} parent=0 // pred_check_branch
    %56 = sbr.rel (0) target = $region65
  $region64: #{_forward_both.1} parent=0 // pred_region
    _
  $region65: #{_forward_both.1} parent=0 // pred_fallthru
    _
  // Predicated region
  $region66: #{_forward_both.1} parent=0 // pred_check
    _
  $region67: #{_forward_both.1} parent=0 // pred_check_branch
    %58 = sbr.rel (0) target = $region69
  $region68: #{_forward_both.1} parent=0 // pred_region
    _
  $region69: #{_forward_both.1} parent=0 // pred_fallthru
    _
  // Predicated region
  $region70: #{_forward_both.1} parent=0 // pred_check
    _
  $region71: #{_forward_both.1} parent=0 // pred_check_branch
    %60 = sbr.rel (0) target = $region73
  $region72: #{_forward_both.1} parent=0 // pred_region
    _
  $region73: #{_forward_both.1} parent=0 // pred_fallthru
    _
  %v61 = vld [vmem:[%s0] sm:$0xff]
  %v62 = vld [vmem:[%s0 + $0x8] sm:$0xff]
  %v63 = vld [vmem:[%s0 + $0x10] sm:$0xff]
  %v64 = vld [vmem:[%s0 + $0x18] sm:$0xff]
  %v65 = vld [vmem:[%s0 + $0x20] sm:$0xff]
  %v66 = vld [vmem:[%s0 + $0x28] sm:$0xff]
  %v67 = vld [vmem:[%s0 + $0x30] sm:$0xff]
  %v68 = vld [vmem:[%s0 + $0x38] sm:$0xff]
  %v69 = vld [vmem:[%s0 + $0x40] sm:$0xff]
  %v70 = vld [vmem:[%s0 + $0x48] sm:$0xff]
  %v71 = vld [vmem:[%s0 + $0x50] sm:$0xff]
  %v72 = vld [vmem:[%s0 + $0x58] sm:$0xff]
  %v73 = vld [vmem:[%s0 + $0x60] sm:$0xff]
  %v74 = vld [vmem:[%s0 + $0x68] sm:$0xff]
  %v75 = vld [vmem:[%s0 + $0x70] sm:$0xff]
  %v76 = vld [vmem:[%s0 + $0x78] sm:$0xff]
  %v77 = vld [vmem:[%s0 + $0x80] sm:$0xff]
  %v78 = vld [vmem:[%s0 + $0x88] sm:$0xff]
  %v79 = vld [vmem:[%s0 + $0x90] sm:$0xff]
  %v80 = vld [vmem:[%s0 + $0x98] sm:$0xff]
  %v81 = vld [vmem:[%s0 + $0xa0] sm:$0xff]
  %v82 = vld [vmem:[%s0 + $0xa8] sm:$0xff]
  %v83 = vld [vmem:[%s0 + $0xb0] sm:$0xff]
  %v84 = vld [vmem:[%s0 + $0xb8] sm:$0xff]
  %v85 = vld [vmem:[%s0 + $0xc0] sm:$0xff]
  %v86 = vld [vmem:[%s0 + $0xc8] sm:$0xff]
  %v87 = vld [vmem:[%s0 + $0xd0] sm:$0xff]
  %v88 = vld [vmem:[%s0 + $0xd8] sm:$0xff]
  %v89 = vld [vmem:[%s3] sm:$0x3]
  %v90 = vld [vmem:[%s1] sm:$0xff]
  %v91 = vld [vmem:[%s1 + $0x8] sm:$0xff]
  %v92 = vld [vmem:[%s1 + $0x10] sm:$0xff]
  %v93 = vld [vmem:[%s1 + $0x18] sm:$0xff]
  %v94 = vld [vmem:[%s1 + $0x20] sm:$0xff]
  %v95 = vld [vmem:[%s1 + $0x28] sm:$0xff]
  %v96 = vld [vmem:[%s1 + $0x30] sm:$0xff]
  %v97 = vld [vmem:[%s1 + $0x38] sm:$0xff]
  %v98 = vld [vmem:[%s1 + $0x40] sm:$0xff]
  %v99 = vld [vmem:[%s1 + $0x48] sm:$0xff]
  %v100 = vld [vmem:[%s1 + $0x50] sm:$0xff]
  %v101 = vld [vmem:[%s1 + $0x58] sm:$0xff]
  %v102 = vld [vmem:[%s1 + $0x60] sm:$0xff]
  %v103 = vld [vmem:[%s1 + $0x68] sm:$0xff]
  %v104 = vld [vmem:[%s1 + $0x70] sm:$0xff]
  %v105 = vld [vmem:[%s1 + $0x78] sm:$0xff]
  %v106 = vld [vmem:[%s1 + $0x80] sm:$0xff]
  %v107 = vld [vmem:[%s1 + $0x88] sm:$0xff]
  %v108 = vld [vmem:[%s1 + $0x90] sm:$0xff]
  %v109 = vld [vmem:[%s1 + $0x98] sm:$0xff]
  %v110 = vld [vmem:[%s1 + $0xa0] sm:$0xff]
  %v111 = vld [vmem:[%s1 + $0xa8] sm:$0xff]
  %v112 = vld [vmem:[%s1 + $0xb0] sm:$0xff]
  %v113 = vld [vmem:[%s1 + $0xb8] sm:$0xff]
  %v114 = vld [vmem:[%s1 + $0xc0] sm:$0xff]
  %v115 = vld [vmem:[%s1 + $0xc8] sm:$0xff]
  %v116 = vld [vmem:[%s1 + $0xd0] sm:$0xff]
  %v117 = vld [vmem:[%s1 + $0xd8] sm:$0xff]
  %v118 = vld [vmem:[%s1 + $0xe0] sm:$0xff]
  %v119 = vld [vmem:[%s1 + $0xe8] sm:$0xff]
  %v120 = vld [vmem:[%s1 + $0xf0] sm:$0xff]
  %v121 = vld [vmem:[%s1 + $0xf8] sm:$0xff]
  %v122 = vld [vmem:[%s1 + $0x100] sm:$0xff]
  %v123 = vld [vmem:[%s1 + $0x108] sm:$0xff]
  %v124 = vld [vmem:[%s1 + $0x110] sm:$0xff]
  %v125 = vld [vmem:[%s1 + $0x118] sm:$0xff]
  %v126 = vld [vmem:[%s1 + $0x120] sm:$0xff]
  %v127 = vld [vmem:[%s1 + $0x128] sm:$0xff]
  %v128 = vld [vmem:[%s1 + $0x130] sm:$0xff]
  %v129 = vld [vmem:[%s1 + $0x138] sm:$0xff]
  %v130 = vld [vmem:[%s1 + $0x140] sm:$0xff]
  %v131 = vld [vmem:[%s1 + $0x148] sm:$0xff]
  %v132 = vld [vmem:[%s1 + $0x150] sm:$0xff]
  %v133 = vld [vmem:[%s1 + $0x158] sm:$0xff]
  %v134 = vld [vmem:[%s1 + $0x160] sm:$0xff]
  %v135 = vld [vmem:[%s1 + $0x168] sm:$0xff]
  %v136 = vld [vmem:[%s1 + $0x170] sm:$0xff]
  %v137 = vld [vmem:[%s1 + $0x178] sm:$0xff]
  %v138 = vld [vmem:[%s1 + $0x180] sm:$0xff]
  %v139 = vld [vmem:[%s1 + $0x188] sm:$0xff]
  %vm140 = vcmask 785408
  %v142 = vsel %vm140, %v91, 0
  %v145 = vsel %vm140, %v93, 0
  %v148 = vsel %vm140, %v95, 0
  %v151 = vsel %vm140, %v97, 0
  %v154 = vsel %vm140, %v99, 0
  %v157 = vsel %vm140, %v101, 0
  %v160 = vsel %vm140, %v103, 0
  %v163 = vsel %vm140, %v105, 0
  %v166 = vsel %vm140, %v107, 0
  %v169 = vsel %vm140, %v109, 0
  %v172 = vsel %vm140, %v111, 0
  %v175 = vsel %vm140, %v113, 0
  %v178 = vsel %vm140, %v115, 0
  %v181 = vsel %vm140, %v117, 0
  %v184 = vsel %vm140, %v119, 0
  %v187 = vsel %vm140, %v121, 0
  %v190 = vsel %vm140, %v123, 0
  %v193 = vsel %vm140, %v125, 0
  %v196 = vsel %vm140, %v127, 0
  %v199 = vsel %vm140, %v129, 0
  %v202 = vsel %vm140, %v131, 0
  %v205 = vsel %vm140, %v133, 0
  %v208 = vsel %vm140, %v135, 0
  %v211 = vsel %vm140, %v137, 0
  %v214 = vsel %vm140, %v139, 0
  %216 = vmatprep.subr.mxu0 0.0
  %217 = vmatpush1.msra.mxu0 %v61
  %218 = vmatprep.subr.mxu0 0.0
  %219 = vmatpush1.msra.mxu0 %v62
  %220 = vmatprep.subr.mxu0 0.0
  %221 = vmatpush1.msra.mxu0 %v63
  %222 = vmatprep.subr.mxu0 0.0
  %223 = vmatpush1.msra.mxu0 %v64
  %224 = vmatprep.subr.mxu0 0.0
  %225 = vmatpush1.msra.mxu0 %v65
  %226 = vmatprep.subr.mxu0 0.0
  %227 = vmatpush1.msra.mxu0 %v66
  %228 = vmatprep.subr.mxu0 0.0
  %229 = vmatpush1.msra.mxu0 %v67
  %230 = vmatprep.subr.mxu0 0.0
  %231 = vmatpush1.msra.mxu0 %v68
  %232 = vmatprep.subr.mxu0 0.0
  %233 = vmatpush1.msra.mxu0 %v69
  %234 = vmatprep.subr.mxu0 0.0
  %235 = vmatpush1.msra.mxu0 %v70
  %236 = vmatprep.subr.mxu0 0.0
  %237 = vmatpush1.msra.mxu0 %v71
  %238 = vmatprep.subr.mxu0 0.0
  %239 = vmatpush1.msra.mxu0 %v72
  %240 = vmatprep.subr.mxu0 0.0
  %241 = vmatpush1.msra.mxu0 %v73
  %242 = vmatprep.subr.mxu0 0.0
  %243 = vmatpush1.msra.mxu0 %v74
  %244 = vmatprep.subr.mxu0 0.0
  %245 = vmatpush1.msra.mxu0 %v75
  %246 = vmatprep.subr.mxu0 0.0
  %247 = vmatpush1.msra.mxu0 %v76
  %248 = vmatprep.subr.mxu0 0.0
  %249 = vmatpush1.msra.mxu0 %v77
  %250 = vmatprep.subr.mxu0 0.0
  %251 = vmatpush1.msra.mxu0 %v78
  %252 = vmatprep.subr.mxu0 0.0
  %253 = vmatpush1.msra.mxu0 %v79
  %254 = vmatprep.subr.mxu0 0.0
  %255 = vmatpush1.msra.mxu0 %v80
  %256 = vmatprep.subr.mxu0 0.0
  %257 = vmatpush1.msra.mxu0 %v81
  %258 = vmatprep.subr.mxu0 0.0
  %259 = vmatpush1.msra.mxu0 %v82
  %260 = vmatprep.subr.mxu0 0.0
  %261 = vmatpush1.msra.mxu0 %v83
  %262 = vmatprep.subr.mxu0 0.0
  %263 = vmatpush1.msra.mxu0 %v84
  %264 = vmatprep.subr.mxu0 0.0
  %265 = vmatpush1.msra.mxu0 %v85
  %266 = vmatprep.subr.mxu0 0.0
  %267 = vmatpush1.msra.mxu0 %v86
  %268 = vmatprep.subr.mxu0 0.0
  %269 = vmatpush1.msra.mxu0 %v87
  %270 = vmatprep.subr.mxu0 0.0
  %271 = vmatpush1.msra.mxu0 %v88
  %272 = vmatprep.subr.mxu0 0.0
  %273 = vmatpush1.msra.mxu0 0.0
  %274 = vmatprep.subr.mxu0 0.0
  %275 = vmatpush1.msra.mxu0 0.0
  %276 = vmatprep.subr.mxu0 0.0
  %277 = vmatpush1.msra.mxu0 0.0
  %278 = vmatprep.subr.mxu0 0.0
  %279 = vmatpush1.msra.mxu0 0.0
  %280 = vmatprep.mubr.f32.mxu0 %v142
  %281 = vmatmul.mubr.f32.gmra.mrb[0].mxu0 %v90
  %v282 = vpop.f32.mrb[0].mxu0
  %v283 = vadd.f32 0.0, %v282
  %v284 = vpop.f32.mrb[0].mxu0
  %285 = vmatprep.mubr.f32.mxu0 %v145
  %286 = vmatmul.mubr.f32.gmra.mrb[0].mxu0 %v92
  %v287 = vpop.f32.mrb[0].mxu0
  %v288 = vadd.f32 0.0, %v287
  %v289 = vpop.f32.mrb[0].mxu0
  %290 = vmatprep.mubr.f32.mxu0 %v148
  %291 = vmatmul.mubr.f32.gmra.mrb[0].mxu0 %v94
  %v292 = vpop.f32.mrb[0].mxu0
  %v293 = vadd.f32 0.0, %v292
  %v294 = vpop.f32.mrb[0].mxu0
  %295 = vmatprep.mubr.f32.mxu0 %v151
  %296 = vmatmul.mubr.f32.gmra.mrb[0].mxu0 %v96
  %v297 = vpop.f32.mrb[0].mxu0
  %v298 = vadd.f32 0.0, %v297
  %v299 = vpop.f32.mrb[0].mxu0
  %300 = vmatprep.mubr.f32.mxu0 %v154
  %301 = vmatmul.mubr.f32.gmra.mrb[0].mxu0 %v98
  %v302 = vpop.f32.mrb[0].mxu0
  %v303 = vadd.f32 0.0, %v302
  %v304 = vpop.f32.mrb[0].mxu0
  %305 = vmatprep.mubr.f32.mxu0 %v157
  %306 = vmatmul.mubr.f32.gmra.mrb[0].mxu0 %v100
  %v307 = vpop.f32.mrb[0].mxu0
  %v308 = vadd.f32 0.0, %v307
  %v309 = vpop.f32.mrb[0].mxu0
  %310 = vmatprep.mubr.f32.mxu0 %v160
  %311 = vmatmul.mubr.f32.gmra.mrb[0].mxu0 %v102
  %v312 = vpop.f32.mrb[0].mxu0
  %v313 = vadd.f32 0.0, %v312
  %v314 = vpop.f32.mrb[0].mxu0
  %315 = vmatprep.mubr.f32.mxu0 %v163
  %316 = vmatmul.mubr.f32.gmra.mrb[0].mxu0 %v104
  %v317 = vpop.f32.mrb[0].mxu0
  %v318 = vadd.f32 0.0, %v317
  %v319 = vpop.f32.mrb[0].mxu0
  %320 = vmatprep.mubr.f32.mxu0 %v166
  %321 = vmatmul.mubr.f32.gmra.mrb[0].mxu0 %v106
  %v322 = vpop.f32.mrb[0].mxu0
  %v323 = vadd.f32 0.0, %v322
  %v324 = vpop.f32.mrb[0].mxu0
  %325 = vmatprep.mubr.f32.mxu0 %v169
  %326 = vmatmul.mubr.f32.gmra.mrb[0].mxu0 %v108
  %v327 = vpop.f32.mrb[0].mxu0
  %v328 = vadd.f32 0.0, %v327
  %v329 = vpop.f32.mrb[0].mxu0
  %330 = vmatprep.mubr.f32.mxu0 %v172
  %331 = vmatmul.mubr.f32.gmra.mrb[0].mxu0 %v110
  %v332 = vpop.f32.mrb[0].mxu0
  %v333 = vadd.f32 0.0, %v332
  %v334 = vpop.f32.mrb[0].mxu0
  %335 = vmatprep.mubr.f32.mxu0 %v175
  %336 = vmatmul.mubr.f32.gmra.mrb[0].mxu0 %v112
  %v337 = vpop.f32.mrb[0].mxu0
  %v338 = vadd.f32 0.0, %v337
  %v339 = vpop.f32.mrb[0].mxu0
  %340 = vmatprep.mubr.f32.mxu0 %v178
  %341 = vmatmul.mubr.f32.gmra.mrb[0].mxu0 %v114
  %v342 = vpop.f32.mrb[0].mxu0
  %v343 = vadd.f32 0.0, %v342
  %v344 = vpop.f32.mrb[0].mxu0
  %345 = vmatprep.mubr.f32.mxu0 %v181
  %346 = vmatmul.mubr.f32.gmra.mrb[0].mxu0 %v116
  %v347 = vpop.f32.mrb[0].mxu0
  %v348 = vadd.f32 0.0, %v347
  %v349 = vpop.f32.mrb[0].mxu0
  %350 = vmatprep.mubr.f32.mxu0 %v184
  %351 = vmatmul.mubr.f32.gmra.mrb[0].mxu0 %v118
  %v352 = vpop.f32.mrb[0].mxu0
  %v353 = vadd.f32 0.0, %v352
  %v354 = vpop.f32.mrb[0].mxu0
  %355 = vmatprep.mubr.f32.mxu0 %v187
  %356 = vmatmul.mubr.f32.gmra.mrb[0].mxu0 %v120
  %v357 = vpop.f32.mrb[0].mxu0
  %v358 = vadd.f32 0.0, %v357
  %v359 = vpop.f32.mrb[0].mxu0
  %360 = vmatprep.mubr.f32.mxu0 %v190
  %361 = vmatmul.mubr.f32.gmra.mrb[0].mxu0 %v122
  %v362 = vpop.f32.mrb[0].mxu0
  %v363 = vadd.f32 0.0, %v362
  %v364 = vpop.f32.mrb[0].mxu0
  %365 = vmatprep.mubr.f32.mxu0 %v193
  %366 = vmatmul.mubr.f32.gmra.mrb[0].mxu0 %v124
  %v367 = vpop.f32.mrb[0].mxu0
  %v368 = vadd.f32 0.0, %v367
  %v369 = vpop.f32.mrb[0].mxu0
  %370 = vmatprep.mubr.f32.mxu0 %v196
  %371 = vmatmul.mubr.f32.gmra.mrb[0].mxu0 %v126
  %v372 = vpop.f32.mrb[0].mxu0
  %v373 = vadd.f32 0.0, %v372
  %v374 = vpop.f32.mrb[0].mxu0
  %375 = vmatprep.mubr.f32.mxu0 %v199
  %376 = vmatmul.mubr.f32.gmra.mrb[0].mxu0 %v128
  %v377 = vpop.f32.mrb[0].mxu0
  %v378 = vadd.f32 0.0, %v377
  %v379 = vpop.f32.mrb[0].mxu0
  %380 = vmatprep.mubr.f32.mxu0 %v202
  %381 = vmatmul.mubr.f32.gmra.mrb[0].mxu0 %v130
  %v382 = vpop.f32.mrb[0].mxu0
  %v383 = vadd.f32 0.0, %v382
  %v384 = vpop.f32.mrb[0].mxu0
  %385 = vmatprep.mubr.f32.mxu0 %v205
  %386 = vmatmul.mubr.f32.gmra.mrb[0].mxu0 %v132
  %v387 = vpop.f32.mrb[0].mxu0
  %v388 = vadd.f32 0.0, %v387
  %v389 = vpop.f32.mrb[0].mxu0
  %390 = vmatprep.mubr.f32.mxu0 %v208
  %391 = vmatmul.mubr.f32.gmra.mrb[0].mxu0 %v134
  %v392 = vpop.f32.mrb[0].mxu0
  %v393 = vadd.f32 0.0, %v392
  %v394 = vpop.f32.mrb[0].mxu0
  %395 = vmatprep.mubr.f32.mxu0 %v211
  %396 = vmatmul.mubr.f32.gmra.mrb[0].mxu0 %v136
  %v397 = vpop.f32.mrb[0].mxu0
  %v398 = vadd.f32 0.0, %v397
  %v399 = vpop.f32.mrb[0].mxu0
  %400 = vmatprep.mubr.f32.mxu0 %v214
  %401 = vmatmul.mubr.f32.gmra.mrb[0].mxu0 %v138
  %v402 = vpop.f32.mrb[0].mxu0
  %v403 = vadd.f32 0.0, %v402
  %v404 = vpop.f32.mrb[0].mxu0
  %405 = vdwg.mxu0
  %v406 = vld [vmem:[%s2] sm:$0xff]
  %v407 = vld [vmem:[%s2 + $0x8] sm:$0xff]
  %v408 = vld [vmem:[%s2 + $0x10] sm:$0xff]
  %v409 = vld [vmem:[%s2 + $0x18] sm:$0xff]
  %v410 = vld [vmem:[%s2 + $0x20] sm:$0xff]
  %v411 = vld [vmem:[%s2 + $0x28] sm:$0xff]
  %v412 = vld [vmem:[%s2 + $0x30] sm:$0xf]
  %v413 = vld [vmem:[%s2 + $0x38] sm:$0xf]
  %vm414 = vcmask 228352
  %v416 = vsel %vm414, %v283, 0
  %v419 = vsel %vm414, %v288, 0
  %v422 = vsel %vm414, %v293, 0
  %v425 = vsel %vm414, %v298, 0
  %v428 = vsel %vm414, %v303, 0
  %v431 = vsel %vm414, %v308, 0
  %v434 = vsel %vm414, %v313, 0
  %v437 = vsel %vm414, %v318, 0
  %v440 = vsel %vm414, %v323, 0
  %v443 = vsel %vm414, %v328, 0
  %v446 = vsel %vm414, %v333, 0
  %v449 = vsel %vm414, %v338, 0
  %v452 = vsel %vm414, %v343, 0
  %v455 = vsel %vm414, %v348, 0
  %v458 = vsel %vm414, %v353, 0
  %v461 = vsel %vm414, %v358, 0
  %v464 = vsel %vm414, %v363, 0
  %v467 = vsel %vm414, %v368, 0
  %v470 = vsel %vm414, %v373, 0
  %v473 = vsel %vm414, %v378, 0
  %v476 = vsel %vm414, %v383, 0
  %v479 = vsel %vm414, %v388, 0
  %v482 = vsel %vm414, %v393, 0
  %v485 = vsel %vm414, %v398, 0
  %v488 = vsel %vm414, %v403, 0
  %vm490 = vcmask 1043456
  %v492 = vsel %vm490, %v412, 0
  %v495 = vsel %vm490, %v413, 0
  %497 = vmatprep.subr.mxu0 %v407
  %498 = vmatpush1.msra.mxu0 %v406
  %499 = vmatprep.subr.mxu0 %v409
  %500 = vmatpush1.msra.mxu0 %v408
  %501 = vmatprep.subr.mxu0 %v411
  %502 = vmatpush1.msra.mxu0 %v410
  %503 = vmatprep.subr.mxu0 %v495
  %504 = vmatpush1.msra.mxu0 %v492
  %505 = vmatprep.subr.mxu0 0.0
  %506 = vmatpush1.msra.mxu0 0.0
  %507 = vmatprep.subr.mxu0 0.0
  %508 = vmatpush1.msra.mxu0 0.0
  %509 = vmatprep.subr.mxu0 0.0
  %510 = vmatpush1.msra.mxu0 0.0
  %511 = vmatprep.subr.mxu0 0.0
  %512 = vmatpush1.msra.mxu0 0.0
  %513 = vmatprep.subr.mxu0 0.0
  %514 = vmatpush1.msra.mxu0 0.0
  %515 = vmatprep.subr.mxu0 0.0
  %516 = vmatpush1.msra.mxu0 0.0
  %517 = vmatprep.subr.mxu0 0.0
  %518 = vmatpush1.msra.mxu0 0.0
  %519 = vmatprep.subr.mxu0 0.0
  %520 = vmatpush1.msra.mxu0 0.0
  %521 = vmatprep.subr.mxu0 0.0
  %522 = vmatpush1.msra.mxu0 0.0
  %523 = vmatprep.subr.mxu0 0.0
  %524 = vmatpush1.msra.mxu0 0.0
  %525 = vmatprep.subr.mxu0 0.0
  %526 = vmatpush1.msra.mxu0 0.0
  %527 = vmatprep.subr.mxu0 0.0
  %528 = vmatpush1.msra.mxu0 0.0
  %529 = vmatprep.subr.mxu0 0.0
  %530 = vmatpush1.msra.mxu0 0.0
  %531 = vmatprep.subr.mxu0 0.0
  %532 = vmatpush1.msra.mxu0 0.0
  %533 = vmatprep.subr.mxu0 0.0
  %534 = vmatpush1.msra.mxu0 0.0
  %535 = vmatprep.subr.mxu0 0.0
  %536 = vmatpush1.msra.mxu0 0.0
  %537 = vmatprep.subr.mxu0 0.0
  %538 = vmatpush1.msra.mxu0 0.0
  %539 = vmatprep.subr.mxu0 0.0
  %540 = vmatpush1.msra.mxu0 0.0
  %541 = vmatprep.subr.mxu0 0.0
  %542 = vmatpush1.msra.mxu0 0.0
  %543 = vmatprep.subr.mxu0 0.0
  %544 = vmatpush1.msra.mxu0 0.0
  %545 = vmatprep.subr.mxu0 0.0
  %546 = vmatpush1.msra.mxu0 0.0
  %547 = vmatprep.subr.mxu0 0.0
  %548 = vmatpush1.msra.mxu0 0.0
  %549 = vmatprep.subr.mxu0 0.0
  %550 = vmatpush1.msra.mxu0 0.0
  %551 = vmatprep.subr.mxu0 0.0
  %552 = vmatpush1.msra.mxu0 0.0
  %553 = vmatprep.subr.mxu0 0.0
  %554 = vmatpush1.msra.mxu0 0.0
  %555 = vmatprep.subr.mxu0 0.0
  %556 = vmatpush1.msra.mxu0 0.0
  %557 = vmatprep.subr.mxu0 0.0
  %558 = vmatpush1.msra.mxu0 0.0
  %559 = vmatprep.subr.mxu0 0.0
  %560 = vmatpush1.msra.mxu0 0.0
  %561 = vmatprep.mubr.f32.mxu0 0.0
  %562 = vmatmul.mubr.f32.gmra.mrb[0].mxu0 %v416
  %v563 = vpop.f32.mrb[0].mxu0
  %v564 = vadd.f32 0.0, %v563
  %v565 = vpop.f32.mrb[0].mxu0
  %v566 = vadd.f32 0.0, %v565
  %567 = vmatprep.mubr.f32.mxu0 0.0
  %568 = vmatmul.mubr.f32.gmra.mrb[0].mxu0 %v419
  %v569 = vpop.f32.mrb[0].mxu0
  %v570 = vadd.f32 0.0, %v569
  %v571 = vpop.f32.mrb[0].mxu0
  %v572 = vadd.f32 0.0, %v571
  %573 = vmatprep.mubr.f32.mxu0 0.0
  %574 = vmatmul.mubr.f32.gmra.mrb[0].mxu0 %v422
  %v575 = vpop.f32.mrb[0].mxu0
  %v576 = vadd.f32 0.0, %v575
  %v577 = vpop.f32.mrb[0].mxu0
  %v578 = vadd.f32 0.0, %v577
  %579 = vmatprep.mubr.f32.mxu0 0.0
  %580 = vmatmul.mubr.f32.gmra.mrb[0].mxu0 %v425
  %v581 = vpop.f32.mrb[0].mxu0
  %v582 = vadd.f32 0.0, %v581
  %v583 = vpop.f32.mrb[0].mxu0
  %v584 = vadd.f32 0.0, %v583
  %585 = vmatprep.mubr.f32.mxu0 0.0
  %586 = vmatmul.mubr.f32.gmra.mrb[0].mxu0 %v428
  %v587 = vpop.f32.mrb[0].mxu0
  %v588 = vadd.f32 0.0, %v587
  %v589 = vpop.f32.mrb[0].mxu0
  %v590 = vadd.f32 0.0, %v589
  %591 = vmatprep.mubr.f32.mxu0 0.0
  %592 = vmatmul.mubr.f32.gmra.mrb[0].mxu0 %v431
  %v593 = vpop.f32.mrb[0].mxu0
  %v594 = vadd.f32 0.0, %v593
  %v595 = vpop.f32.mrb[0].mxu0
  %v596 = vadd.f32 0.0, %v595
  %597 = vmatprep.mubr.f32.mxu0 0.0
  %598 = vmatmul.mubr.f32.gmra.mrb[0].mxu0 %v434
  %v599 = vpop.f32.mrb[0].mxu0
  %v600 = vadd.f32 0.0, %v599
  %v601 = vpop.f32.mrb[0].mxu0
  %v602 = vadd.f32 0.0, %v601
  %603 = vmatprep.mubr.f32.mxu0 0.0
  %604 = vmatmul.mubr.f32.gmra.mrb[0].mxu0 %v437
  %v605 = vpop.f32.mrb[0].mxu0
  %v606 = vadd.f32 0.0, %v605
  %v607 = vpop.f32.mrb[0].mxu0
  %v608 = vadd.f32 0.0, %v607
  %609 = vmatprep.mubr.f32.mxu0 0.0
  %610 = vmatmul.mubr.f32.gmra.mrb[0].mxu0 %v440
  %v611 = vpop.f32.mrb[0].mxu0
  %v612 = vadd.f32 0.0, %v611
  %v613 = vpop.f32.mrb[0].mxu0
  %v614 = vadd.f32 0.0, %v613
  %615 = vmatprep.mubr.f32.mxu0 0.0
  %616 = vmatmul.mubr.f32.gmra.mrb[0].mxu0 %v443
  %v617 = vpop.f32.mrb[0].mxu0
  %v618 = vadd.f32 0.0, %v617
  %v619 = vpop.f32.mrb[0].mxu0
  %v620 = vadd.f32 0.0, %v619
  %621 = vmatprep.mubr.f32.mxu0 0.0
  %622 = vmatmul.mubr.f32.gmra.mrb[0].mxu0 %v446
  %v623 = vpop.f32.mrb[0].mxu0
  %v624 = vadd.f32 0.0, %v623
  %v625 = vpop.f32.mrb[0].mxu0
  %v626 = vadd.f32 0.0, %v625
  %627 = vmatprep.mubr.f32.mxu0 0.0
  %628 = vmatmul.mubr.f32.gmra.mrb[0].mxu0 %v449
  %v629 = vpop.f32.mrb[0].mxu0
  %v630 = vadd.f32 0.0, %v629
  %v631 = vpop.f32.mrb[0].mxu0
  %v632 = vadd.f32 0.0, %v631
  %633 = vmatprep.mubr.f32.mxu0 0.0
  %634 = vmatmul.mubr.f32.gmra.mrb[0].mxu0 %v452
  %v635 = vpop.f32.mrb[0].mxu0
  %v636 = vadd.f32 0.0, %v635
  %v637 = vpop.f32.mrb[0].mxu0
  %v638 = vadd.f32 0.0, %v637
  %639 = vmatprep.mubr.f32.mxu0 0.0
  %640 = vmatmul.mubr.f32.gmra.mrb[0].mxu0 %v455
  %v641 = vpop.f32.mrb[0].mxu0
  %v642 = vadd.f32 0.0, %v641
  %v643 = vpop.f32.mrb[0].mxu0
  %v644 = vadd.f32 0.0, %v643
  %645 = vmatprep.mubr.f32.mxu0 0.0
  %646 = vmatmul.mubr.f32.gmra.mrb[0].mxu0 %v458
  %v647 = vpop.f32.mrb[0].mxu0
  %v648 = vadd.f32 0.0, %v647
  %v649 = vpop.f32.mrb[0].mxu0
  %v650 = vadd.f32 0.0, %v649
  %651 = vmatprep.mubr.f32.mxu0 0.0
  %652 = vmatmul.mubr.f32.gmra.mrb[0].mxu0 %v461
  %v653 = vpop.f32.mrb[0].mxu0
  %v654 = vadd.f32 0.0, %v653
  %v655 = vpop.f32.mrb[0].mxu0
  %v656 = vadd.f32 0.0, %v655
  %657 = vmatprep.mubr.f32.mxu0 0.0
  %658 = vmatmul.mubr.f32.gmra.mrb[0].mxu0 %v464
  %v659 = vpop.f32.mrb[0].mxu0
  %v660 = vadd.f32 0.0, %v659
  %v661 = vpop.f32.mrb[0].mxu0
  %v662 = vadd.f32 0.0, %v661
  %663 = vmatprep.mubr.f32.mxu0 0.0
  %664 = vmatmul.mubr.f32.gmra.mrb[0].mxu0 %v467
  %v665 = vpop.f32.mrb[0].mxu0
  %v666 = vadd.f32 0.0, %v665
  %v667 = vpop.f32.mrb[0].mxu0
  %v668 = vadd.f32 0.0, %v667
  %669 = vmatprep.mubr.f32.mxu0 0.0
  %670 = vmatmul.mubr.f32.gmra.mrb[0].mxu0 %v470
  %v671 = vpop.f32.mrb[0].mxu0
  %v672 = vadd.f32 0.0, %v671
  %v673 = vpop.f32.mrb[0].mxu0
  %v674 = vadd.f32 0.0, %v673
  %675 = vmatprep.mubr.f32.mxu0 0.0
  %676 = vmatmul.mubr.f32.gmra.mrb[0].mxu0 %v473
  %v677 = vpop.f32.mrb[0].mxu0
  %v678 = vadd.f32 0.0, %v677
  %v679 = vpop.f32.mrb[0].mxu0
  %v680 = vadd.f32 0.0, %v679
  %681 = vmatprep.mubr.f32.mxu0 0.0
  %682 = vmatmul.mubr.f32.gmra.mrb[0].mxu0 %v476
  %v683 = vpop.f32.mrb[0].mxu0
  %v684 = vadd.f32 0.0, %v683
  %v685 = vpop.f32.mrb[0].mxu0
  %v686 = vadd.f32 0.0, %v685
  %687 = vmatprep.mubr.f32.mxu0 0.0
  %688 = vmatmul.mubr.f32.gmra.mrb[0].mxu0 %v479
  %v689 = vpop.f32.mrb[0].mxu0
  %v690 = vadd.f32 0.0, %v689
  %v691 = vpop.f32.mrb[0].mxu0
  %v692 = vadd.f32 0.0, %v691
  %693 = vmatprep.mubr.f32.mxu0 0.0
  %694 = vmatmul.mubr.f32.gmra.mrb[0].mxu0 %v482
  %v695 = vpop.f32.mrb[0].mxu0
  %v696 = vadd.f32 0.0, %v695
  %v697 = vpop.f32.mrb[0].mxu0
  %v698 = vadd.f32 0.0, %v697
  %699 = vmatprep.mubr.f32.mxu0 0.0
  %700 = vmatmul.mubr.f32.gmra.mrb[0].mxu0 %v485
  %v701 = vpop.f32.mrb[0].mxu0
  %v702 = vadd.f32 0.0, %v701
  %v703 = vpop.f32.mrb[0].mxu0
  %v704 = vadd.f32 0.0, %v703
  %705 = vmatprep.mubr.f32.mxu0 0.0
  %706 = vmatmul.mubr.f32.gmra.mrb[0].mxu0 %v488
  %v707 = vpop.f32.mrb[0].mxu0
  %v708 = vadd.f32 0.0, %v707
  %v709 = vpop.f32.mrb[0].mxu0
  %v710 = vadd.f32 0.0, %v709
  %711 = vdwg.mxu0
  %v713 = vlaneseq
  %v714 = vshrl.u32 %v713, 7
  %v715 = vsub.s32 0, %v714
  %v716 = vrot.slane %v89, %v715
  %v717 = vlaneseq
  %v718 = vshrl.u32 %v717, 7
  %v719 = vsub.s32 1, %v718
  %v720 = vrot.slane %v89, %v719
  %v723 = vadd.f32 %v716, %v564
  %v724 = vadd.f32 %v720, %v566
  %v725 = vadd.f32 %v716, %v570
  %v726 = vadd.f32 %v720, %v572
  %v727 = vadd.f32 %v716, %v576
  %v728 = vadd.f32 %v720, %v578
  %v729 = vadd.f32 %v716, %v582
  %v730 = vadd.f32 %v720, %v584
  %v731 = vadd.f32 %v716, %v588
  %v732 = vadd.f32 %v720, %v590
  %v733 = vadd.f32 %v716, %v594
  %v734 = vadd.f32 %v720, %v596
  %v735 = vadd.f32 %v716, %v600
  %v736 = vadd.f32 %v720, %v602
  %v737 = vadd.f32 %v716, %v606
  %v738 = vadd.f32 %v720, %v608
  %v739 = vadd.f32 %v716, %v612
  %v740 = vadd.f32 %v720, %v614
  %v741 = vadd.f32 %v716, %v618
  %v742 = vadd.f32 %v720, %v620
  %v743 = vadd.f32 %v716, %v624
  %v744 = vadd.f32 %v720, %v626
  %v745 = vadd.f32 %v716, %v630
  %v746 = vadd.f32 %v720, %v632
  %v747 = vadd.f32 %v716, %v636
  %v748 = vadd.f32 %v720, %v638
  %v749 = vadd.f32 %v716, %v642
  %v750 = vadd.f32 %v720, %v644
  %v751 = vadd.f32 %v716, %v648
  %v752 = vadd.f32 %v720, %v650
  %v753 = vadd.f32 %v716, %v654
  %v754 = vadd.f32 %v720, %v656
  %v755 = vadd.f32 %v716, %v660
  %v756 = vadd.f32 %v720, %v662
  %v757 = vadd.f32 %v716, %v666
  %v758 = vadd.f32 %v720, %v668
  %v759 = vadd.f32 %v716, %v672
  %v760 = vadd.f32 %v720, %v674
  %v761 = vadd.f32 %v716, %v678
  %v762 = vadd.f32 %v720, %v680
  %v763 = vadd.f32 %v716, %v684
  %v764 = vadd.f32 %v720, %v686
  %v765 = vadd.f32 %v716, %v690
  %v766 = vadd.f32 %v720, %v692
  %v767 = vadd.f32 %v716, %v696
  %v768 = vadd.f32 %v720, %v698
  %v769 = vadd.f32 %v716, %v702
  %v770 = vadd.f32 %v720, %v704
  %v771 = vadd.f32 %v716, %v708
  %v772 = vadd.f32 %v720, %v710
  %s773 = scalar_lea.vmem %s1, 400
  %v774 = vld [vmem:[%s773] sm:$0xff]
  %v775 = vld [vmem:[%s773 + $0x8] sm:$0xff]
  %v776 = vld [vmem:[%s773 + $0x10] sm:$0xff]
  %v777 = vld [vmem:[%s773 + $0x18] sm:$0xff]
  %v778 = vld [vmem:[%s773 + $0x20] sm:$0xff]
  %v779 = vld [vmem:[%s773 + $0x28] sm:$0xff]
  %v780 = vld [vmem:[%s773 + $0x30] sm:$0xff]
  %v781 = vld [vmem:[%s773 + $0x38] sm:$0xff]
  %v782 = vld [vmem:[%s773 + $0x40] sm:$0xff]
  %v783 = vld [vmem:[%s773 + $0x48] sm:$0xff]
  %v784 = vld [vmem:[%s773 + $0x50] sm:$0xff]
  %v785 = vld [vmem:[%s773 + $0x58] sm:$0xff]
  %v786 = vld [vmem:[%s773 + $0x60] sm:$0xff]
  %v787 = vld [vmem:[%s773 + $0x68] sm:$0xff]
  %v788 = vld [vmem:[%s773 + $0x70] sm:$0xff]
  %v789 = vld [vmem:[%s773 + $0x78] sm:$0xff]
  %v790 = vld [vmem:[%s773 + $0x80] sm:$0xff]
  %v791 = vld [vmem:[%s773 + $0x88] sm:$0xff]
  %v792 = vld [vmem:[%s773 + $0x90] sm:$0xff]
  %v793 = vld [vmem:[%s773 + $0x98] sm:$0xff]
  %v794 = vld [vmem:[%s773 + $0xa0] sm:$0xff]
  %v795 = vld [vmem:[%s773 + $0xa8] sm:$0xff]
  %v796 = vld [vmem:[%s773 + $0xb0] sm:$0xff]
  %v797 = vld [vmem:[%s773 + $0xb8] sm:$0xff]
  %v798 = vld [vmem:[%s773 + $0xc0] sm:$0xff]
  %v799 = vld [vmem:[%s773 + $0xc8] sm:$0xff]
  %v800 = vld [vmem:[%s773 + $0xd0] sm:$0xff]
  %v801 = vld [vmem:[%s773 + $0xd8] sm:$0xff]
  %v802 = vld [vmem:[%s773 + $0xe0] sm:$0xff]
  %v803 = vld [vmem:[%s773 + $0xe8] sm:$0xff]
  %v804 = vld [vmem:[%s773 + $0xf0] sm:$0xff]
  %v805 = vld [vmem:[%s773 + $0xf8] sm:$0xff]
  %v806 = vld [vmem:[%s773 + $0x100] sm:$0xff]
  %v807 = vld [vmem:[%s773 + $0x108] sm:$0xff]
  %v808 = vld [vmem:[%s773 + $0x110] sm:$0xff]
  %v809 = vld [vmem:[%s773 + $0x118] sm:$0xff]
  %v810 = vld [vmem:[%s773 + $0x120] sm:$0xff]
  %v811 = vld [vmem:[%s773 + $0x128] sm:$0xff]
  %v812 = vld [vmem:[%s773 + $0x130] sm:$0xff]
  %v813 = vld [vmem:[%s773 + $0x138] sm:$0xff]
  %v814 = vld [vmem:[%s773 + $0x140] sm:$0xff]
  %v815 = vld [vmem:[%s773 + $0x148] sm:$0xff]
  %v816 = vld [vmem:[%s773 + $0x150] sm:$0xff]
  %v817 = vld [vmem:[%s773 + $0x158] sm:$0xff]
  %v818 = vld [vmem:[%s773 + $0x160] sm:$0xff]
  %v819 = vld [vmem:[%s773 + $0x168] sm:$0xff]
  %v820 = vld [vmem:[%s773 + $0x170] sm:$0xff]
  %v821 = vld [vmem:[%s773 + $0x178] sm:$0xff]
  %v822 = vld [vmem:[%s773 + $0x180] sm:$0xff]
  %v823 = vld [vmem:[%s773 + $0x188] sm:$0xff]
  %v825 = vsel %vm140, %v775, 0
  %v828 = vsel %vm140, %v777, 0
  %v831 = vsel %vm140, %v779, 0
  %v834 = vsel %vm140, %v781, 0
  %v837 = vsel %vm140, %v783, 0
  %v840 = vsel %vm140, %v785, 0
  %v843 = vsel %vm140, %v787, 0
  %v846 = vsel %vm140, %v789, 0
  %v849 = vsel %vm140, %v791, 0
  %v852 = vsel %vm140, %v793, 0
  %v855 = vsel %vm140, %v795, 0
  %v858 = vsel %vm140, %v797, 0
  %v861 = vsel %vm140, %v799, 0
  %v864 = vsel %vm140, %v801, 0
  %v867 = vsel %vm140, %v803, 0
  %v870 = vsel %vm140, %v805, 0
  %v873 = vsel %vm140, %v807, 0
  %v876 = vsel %vm140, %v809, 0
  %v879 = vsel %vm140, %v811, 0
  %v882 = vsel %vm140, %v813, 0
  %v885 = vsel %vm140, %v815, 0
  %v888 = vsel %vm140, %v817, 0
  %v891 = vsel %vm140, %v819, 0
  %v894 = vsel %vm140, %v821, 0
  %v897 = vsel %vm140, %v823, 0
  %899 = vmatprep.subr.mxu0 0.0
  %900 = vmatpush1.msra.mxu0 %v61
  %901 = vmatprep.subr.mxu0 0.0
  %902 = vmatpush1.msra.mxu0 %v62
  %903 = vmatprep.subr.mxu0 0.0
  %904 = vmatpush1.msra.mxu0 %v63
  %905 = vmatprep.subr.mxu0 0.0
  %906 = vmatpush1.msra.mxu0 %v64
  %907 = vmatprep.subr.mxu0 0.0
  %908 = vmatpush1.msra.mxu0 %v65
  %909 = vmatprep.subr.mxu0 0.0
  %910 = vmatpush1.msra.mxu0 %v66
  %911 = vmatprep.subr.mxu0 0.0
  %912 = vmatpush1.msra.mxu0 %v67
  %913 = vmatprep.subr.mxu0 0.0
  %914 = vmatpush1.msra.mxu0 %v68
  %915 = vmatprep.subr.mxu0 0.0
  %916 = vmatpush1.msra.mxu0 %v69
  %917 = vmatprep.subr.mxu0 0.0
  %918 = vmatpush1.msra.mxu0 %v70
  %919 = vmatprep.subr.mxu0 0.0
  %920 = vmatpush1.msra.mxu0 %v71
  %921 = vmatprep.subr.mxu0 0.0
  %922 = vmatpush1.msra.mxu0 %v72
  %923 = vmatprep.subr.mxu0 0.0
  %924 = vmatpush1.msra.mxu0 %v73
  %925 = vmatprep.subr.mxu0 0.0
  %926 = vmatpush1.msra.mxu0 %v74
  %927 = vmatprep.subr.mxu0 0.0
  %928 = vmatpush1.msra.mxu0 %v75
  %929 = vmatprep.subr.mxu0 0.0
  %930 = vmatpush1.msra.mxu0 %v76
  %931 = vmatprep.subr.mxu0 0.0
  %932 = vmatpush1.msra.mxu0 %v77
  %933 = vmatprep.subr.mxu0 0.0
  %934 = vmatpush1.msra.mxu0 %v78
  %935 = vmatprep.subr.mxu0 0.0
  %936 = vmatpush1.msra.mxu0 %v79
  %937 = vmatprep.subr.mxu0 0.0
  %938 = vmatpush1.msra.mxu0 %v80
  %939 = vmatprep.subr.mxu0 0.0
  %940 = vmatpush1.msra.mxu0 %v81
  %941 = vmatprep.subr.mxu0 0.0
  %942 = vmatpush1.msra.mxu0 %v82
  %943 = vmatprep.subr.mxu0 0.0
  %944 = vmatpush1.msra.mxu0 %v83
  %945 = vmatprep.subr.mxu0 0.0
  %946 = vmatpush1.msra.mxu0 %v84
  %947 = vmatprep.subr.mxu0 0.0
  %948 = vmatpush1.msra.mxu0 %v85
  %949 = vmatprep.subr.mxu0 0.0
  %950 = vmatpush1.msra.mxu0 %v86
  %951 = vmatprep.subr.mxu0 0.0
  %952 = vmatpush1.msra.mxu0 %v87
  %953 = vmatprep.subr.mxu0 0.0
  %954 = vmatpush1.msra.mxu0 %v88
  %955 = vmatprep.subr.mxu0 0.0
  %956 = vmatpush1.msra.mxu0 0.0
  %957 = vmatprep.subr.mxu0 0.0
  %958 = vmatpush1.msra.mxu0 0.0
  %959 = vmatprep.subr.mxu0 0.0
  %960 = vmatpush1.msra.mxu0 0.0
  %961 = vmatprep.subr.mxu0 0.0
  %962 = vmatpush1.msra.mxu0 0.0
  %963 = vmatprep.mubr.f32.mxu0 %v825
  %964 = vmatmul.mubr.f32.gmra.mrb[0].mxu0 %v774
  %v965 = vpop.f32.mrb[0].mxu0
  %v966 = vadd.f32 0.0, %v965
  %v967 = vpop.f32.mrb[0].mxu0
  %968 = vmatprep.mubr.f32.mxu0 %v828
  %969 = vmatmul.mubr.f32.gmra.mrb[0].mxu0 %v776
  %v970 = vpop.f32.mrb[0].mxu0
  %v971 = vadd.f32 0.0, %v970
  %v972 = vpop.f32.mrb[0].mxu0
  %973 = vmatprep.mubr.f32.mxu0 %v831
  %974 = vmatmul.mubr.f32.gmra.mrb[0].mxu0 %v778
  %v975 = vpop.f32.mrb[0].mxu0
  %v976 = vadd.f32 0.0, %v975
  %v977 = vpop.f32.mrb[0].mxu0
  %978 = vmatprep.mubr.f32.mxu0 %v834
  %979 = vmatmul.mubr.f32.gmra.mrb[0].mxu0 %v780
  %v980 = vpop.f32.mrb[0].mxu0
  %v981 = vadd.f32 0.0, %v980
  %v982 = vpop.f32.mrb[0].mxu0
  %983 = vmatprep.mubr.f32.mxu0 %v837
  %984 = vmatmul.mubr.f32.gmra.mrb[0].mxu0 %v782
  %v985 = vpop.f32.mrb[0].mxu0
  %v986 = vadd.f32 0.0, %v985
  %v987 = vpop.f32.mrb[0].mxu0
  %988 = vmatprep.mubr.f32.mxu0 %v840
  %989 = vmatmul.mubr.f32.gmra.mrb[0].mxu0 %v784
  %v990 = vpop.f32.mrb[0].mxu0
  %v991 = vadd.f32 0.0, %v990
  %v992 = vpop.f32.mrb[0].mxu0
  %993 = vmatprep.mubr.f32.mxu0 %v843
  %994 = vmatmul.mubr.f32.gmra.mrb[0].mxu0 %v786
  %v995 = vpop.f32.mrb[0].mxu0
  %v996 = vadd.f32 0.0, %v995
  %v997 = vpop.f32.mrb[0].mxu0
  %998 = vmatprep.mubr.f32.mxu0 %v846
  %999 = vmatmul.mubr.f32.gmra.mrb[0].mxu0 %v788
  %v1000 = vpop.f32.mrb[0].mxu0
  %v1001 = vadd.f32 0.0, %v1000
  %v1002 = vpop.f32.mrb[0].mxu0
  %1003 = vmatprep.mubr.f32.mxu0 %v849
  %1004 = vmatmul.mubr.f32.gmra.mrb[0].mxu0 %v790
  %v1005 = vpop.f32.mrb[0].mxu0
  %v1006 = vadd.f32 0.0, %v1005
  %v1007 = vpop.f32.mrb[0].mxu0
  %1008 = vmatprep.mubr.f32.mxu0 %v852
  %1009 = vmatmul.mubr.f32.gmra.mrb[0].mxu0 %v792
  %v1010 = vpop.f32.mrb[0].mxu0
  %v1011 = vadd.f32 0.0, %v1010
  %v1012 = vpop.f32.mrb[0].mxu0
  %1013 = vmatprep.mubr.f32.mxu0 %v855
  %1014 = vmatmul.mubr.f32.gmra.mrb[0].mxu0 %v794
  %v1015 = vpop.f32.mrb[0].mxu0
  %v1016 = vadd.f32 0.0, %v1015
  %v1017 = vpop.f32.mrb[0].mxu0
  %1018 = vmatprep.mubr.f32.mxu0 %v858
  %1019 = vmatmul.mubr.f32.gmra.mrb[0].mxu0 %v796
  %v1020 = vpop.f32.mrb[0].mxu0
  %v1021 = vadd.f32 0.0, %v1020
  %v1022 = vpop.f32.mrb[0].mxu0
  %1023 = vmatprep.mubr.f32.mxu0 %v861
  %1024 = vmatmul.mubr.f32.gmra.mrb[0].mxu0 %v798
  %v1025 = vpop.f32.mrb[0].mxu0
  %v1026 = vadd.f32 0.0, %v1025
  %v1027 = vpop.f32.mrb[0].mxu0
  %1028 = vmatprep.mubr.f32.mxu0 %v864
  %1029 = vmatmul.mubr.f32.gmra.mrb[0].mxu0 %v800
  %v1030 = vpop.f32.mrb[0].mxu0
  %v1031 = vadd.f32 0.0, %v1030
  %v1032 = vpop.f32.mrb[0].mxu0
  %1033 = vmatprep.mubr.f32.mxu0 %v867
  %1034 = vmatmul.mubr.f32.gmra.mrb[0].mxu0 %v802
  %v1035 = vpop.f32.mrb[0].mxu0
  %v1036 = vadd.f32 0.0, %v1035
  %v1037 = vpop.f32.mrb[0].mxu0
  %1038 = vmatprep.mubr.f32.mxu0 %v870
  %1039 = vmatmul.mubr.f32.gmra.mrb[0].mxu0 %v804
  %v1040 = vpop.f32.mrb[0].mxu0
  %v1041 = vadd.f32 0.0, %v1040
  %v1042 = vpop.f32.mrb[0].mxu0
  %1043 = vmatprep.mubr.f32.mxu0 %v873
  %1044 = vmatmul.mubr.f32.gmra.mrb[0].mxu0 %v806
  %v1045 = vpop.f32.mrb[0].mxu0
  %v1046 = vadd.f32 0.0, %v1045
  %v1047 = vpop.f32.mrb[0].mxu0
  %1048 = vmatprep.mubr.f32.mxu0 %v876
  %1049 = vmatmul.mubr.f32.gmra.mrb[0].mxu0 %v808
  %v1050 = vpop.f32.mrb[0].mxu0
  %v1051 = vadd.f32 0.0, %v1050
  %v1052 = vpop.f32.mrb[0].mxu0
  %1053 = vmatprep.mubr.f32.mxu0 %v879
  %1054 = vmatmul.mubr.f32.gmra.mrb[0].mxu0 %v810
  %v1055 = vpop.f32.mrb[0].mxu0
  %v1056 = vadd.f32 0.0, %v1055
  %v1057 = vpop.f32.mrb[0].mxu0
  %1058 = vmatprep.mubr.f32.mxu0 %v882
  %1059 = vmatmul.mubr.f32.gmra.mrb[0].mxu0 %v812
  %v1060 = vpop.f32.mrb[0].mxu0
  %v1061 = vadd.f32 0.0, %v1060
  %v1062 = vpop.f32.mrb[0].mxu0
  %1063 = vmatprep.mubr.f32.mxu0 %v885
  %1064 = vmatmul.mubr.f32.gmra.mrb[0].mxu0 %v814
  %v1065 = vpop.f32.mrb[0].mxu0
  %v1066 = vadd.f32 0.0, %v1065
  %v1067 = vpop.f32.mrb[0].mxu0
  %1068 = vmatprep.mubr.f32.mxu0 %v888
  %1069 = vmatmul.mubr.f32.gmra.mrb[0].mxu0 %v816
  %v1070 = vpop.f32.mrb[0].mxu0
  %v1071 = vadd.f32 0.0, %v1070
  %v1072 = vpop.f32.mrb[0].mxu0
  %1073 = vmatprep.mubr.f32.mxu0 %v891
  %1074 = vmatmul.mubr.f32.gmra.mrb[0].mxu0 %v818
  %v1075 = vpop.f32.mrb[0].mxu0
  %v1076 = vadd.f32 0.0, %v1075
  %v1077 = vpop.f32.mrb[0].mxu0
  %1078 = vmatprep.mubr.f32.mxu0 %v894
  %1079 = vmatmul.mubr.f32.gmra.mrb[0].mxu0 %v820
  %v1080 = vpop.f32.mrb[0].mxu0
  %v1081 = vadd.f32 0.0, %v1080
  %v1082 = vpop.f32.mrb[0].mxu0
  %1083 = vmatprep.mubr.f32.mxu0 %v897
  %1084 = vmatmul.mubr.f32.gmra.mrb[0].mxu0 %v822
  %v1085 = vpop.f32.mrb[0].mxu0
  %v1086 = vadd.f32 0.0, %v1085
  %v1087 = vpop.f32.mrb[0].mxu0
  %1088 = vdwg.mxu0
  %s1089 = scalar_lea.vmem %s2, 64
  %v1090 = vld [vmem:[%s1089] sm:$0xff]
  %v1091 = vld [vmem:[%s1089 + $0x8] sm:$0xff]
  %v1092 = vld [vmem:[%s1089 + $0x10] sm:$0xff]
  %v1093 = vld [vmem:[%s1089 + $0x18] sm:$0xff]
  %v1094 = vld [vmem:[%s1089 + $0x20] sm:$0xff]
  %v1095 = vld [vmem:[%s1089 + $0x28] sm:$0xff]
  %v1096 = vld [vmem:[%s1089 + $0x30] sm:$0xf]
  %v1097 = vld [vmem:[%s1089 + $0x38] sm:$0xf]
  %v1099 = vsel %vm414, %v966, 0
  %v1102 = vsel %vm414, %v971, 0
  %v1105 = vsel %vm414, %v976, 0
  %v1108 = vsel %vm414, %v981, 0
  %v1111 = vsel %vm414, %v986, 0
  %v1114 = vsel %vm414, %v991, 0
  %v1117 = vsel %vm414, %v996, 0
  %v1120 = vsel %vm414, %v1001, 0
  %v1123 = vsel %vm414, %v1006, 0
  %v1126 = vsel %vm414, %v1011, 0
  %v1129 = vsel %vm414, %v1016, 0
  %v1132 = vsel %vm414, %v1021, 0
  %v1135 = vsel %vm414, %v1026, 0
  %v1138 = vsel %vm414, %v1031, 0
  %v1141 = vsel %vm414, %v1036, 0
  %v1144 = vsel %vm414, %v1041, 0
  %v1147 = vsel %vm414, %v1046, 0
  %v1150 = vsel %vm414, %v1051, 0
  %v1153 = vsel %vm414, %v1056, 0
  %v1156 = vsel %vm414, %v1061, 0
  %v1159 = vsel %vm414, %v1066, 0
  %v1162 = vsel %vm414, %v1071, 0
  %v1165 = vsel %vm414, %v1076, 0
  %v1168 = vsel %vm414, %v1081, 0
  %v1171 = vsel %vm414, %v1086, 0
  %v1174 = vsel %vm490, %v1096, 0
  %v1177 = vsel %vm490, %v1097, 0
  %1179 = vmatprep.subr.mxu0 %v1091
  %1180 = vmatpush1.msra.mxu0 %v1090
  %1181 = vmatprep.subr.mxu0 %v1093
  %1182 = vmatpush1.msra.mxu0 %v1092
  %1183 = vmatprep.subr.mxu0 %v1095
  %1184 = vmatpush1.msra.mxu0 %v1094
  %1185 = vmatprep.subr.mxu0 %v1177
  %1186 = vmatpush1.msra.mxu0 %v1174
  %1187 = vmatprep.subr.mxu0 0.0
  %1188 = vmatpush1.msra.mxu0 0.0
  %1189 = vmatprep.subr.mxu0 0.0
  %1190 = vmatpush1.msra.mxu0 0.0
  %1191 = vmatprep.subr.mxu0 0.0
  %1192 = vmatpush1.msra.mxu0 0.0
  %1193 = vmatprep.subr.mxu0 0.0
  %1194 = vmatpush1.msra.mxu0 0.0
  %1195 = vmatprep.subr.mxu0 0.0
  %1196 = vmatpush1.msra.mxu0 0.0
  %1197 = vmatprep.subr.mxu0 0.0
  %1198 = vmatpush1.msra.mxu0 0.0
  %1199 = vmatprep.subr.mxu0 0.0
  %1200 = vmatpush1.msra.mxu0 0.0
  %1201 = vmatprep.subr.mxu0 0.0
  %1202 = vmatpush1.msra.mxu0 0.0
  %1203 = vmatprep.subr.mxu0 0.0
  %1204 = vmatpush1.msra.mxu0 0.0
  %1205 = vmatprep.subr.mxu0 0.0
  %1206 = vmatpush1.msra.mxu0 0.0
  %1207 = vmatprep.subr.mxu0 0.0
  %1208 = vmatpush1.msra.mxu0 0.0
  %1209 = vmatprep.subr.mxu0 0.0
  %1210 = vmatpush1.msra.mxu0 0.0
  %1211 = vmatprep.subr.mxu0 0.0
  %1212 = vmatpush1.msra.mxu0 0.0
  %1213 = vmatprep.subr.mxu0 0.0
  %1214 = vmatpush1.msra.mxu0 0.0
  %1215 = vmatprep.subr.mxu0 0.0
  %1216 = vmatpush1.msra.mxu0 0.0
  %1217 = vmatprep.subr.mxu0 0.0
  %1218 = vmatpush1.msra.mxu0 0.0
  %1219 = vmatprep.subr.mxu0 0.0
  %1220 = vmatpush1.msra.mxu0 0.0
  %1221 = vmatprep.subr.mxu0 0.0
  %1222 = vmatpush1.msra.mxu0 0.0
  %1223 = vmatprep.subr.mxu0 0.0
  %1224 = vmatpush1.msra.mxu0 0.0
  %1225 = vmatprep.subr.mxu0 0.0
  %1226 = vmatpush1.msra.mxu0 0.0
  %1227 = vmatprep.subr.mxu0 0.0
  %1228 = vmatpush1.msra.mxu0 0.0
  %1229 = vmatprep.subr.mxu0 0.0
  %1230 = vmatpush1.msra.mxu0 0.0
  %1231 = vmatprep.subr.mxu0 0.0
  %1232 = vmatpush1.msra.mxu0 0.0
  %1233 = vmatprep.subr.mxu0 0.0
  %1234 = vmatpush1.msra.mxu0 0.0
  %1235 = vmatprep.subr.mxu0 0.0
  %1236 = vmatpush1.msra.mxu0 0.0
  %1237 = vmatprep.subr.mxu0 0.0
  %1238 = vmatpush1.msra.mxu0 0.0
  %1239 = vmatprep.subr.mxu0 0.0
  %1240 = vmatpush1.msra.mxu0 0.0
  %1241 = vmatprep.subr.mxu0 0.0
  %1242 = vmatpush1.msra.mxu0 0.0
  %1243 = vmatprep.mubr.f32.mxu0 0.0
  %1244 = vmatmul.mubr.f32.gmra.mrb[0].mxu0 %v1099
  %v1245 = vpop.f32.mrb[0].mxu0
  %v1246 = vadd.f32 0.0, %v1245
  %v1247 = vpop.f32.mrb[0].mxu0
  %v1248 = vadd.f32 0.0, %v1247
  %1249 = vmatprep.mubr.f32.mxu0 0.0
  %1250 = vmatmul.mubr.f32.gmra.mrb[0].mxu0 %v1102
  %v1251 = vpop.f32.mrb[0].mxu0
  %v1252 = vadd.f32 0.0, %v1251
  %v1253 = vpop.f32.mrb[0].mxu0
  %v1254 = vadd.f32 0.0, %v1253
  %1255 = vmatprep.mubr.f32.mxu0 0.0
  %1256 = vmatmul.mubr.f32.gmra.mrb[0].mxu0 %v1105
  %v1257 = vpop.f32.mrb[0].mxu0
  %v1258 = vadd.f32 0.0, %v1257
  %v1259 = vpop.f32.mrb[0].mxu0
  %v1260 = vadd.f32 0.0, %v1259
  %1261 = vmatprep.mubr.f32.mxu0 0.0
  %1262 = vmatmul.mubr.f32.gmra.mrb[0].mxu0 %v1108
  %v1263 = vpop.f32.mrb[0].mxu0
  %v1264 = vadd.f32 0.0, %v1263
  %v1265 = vpop.f32.mrb[0].mxu0
  %v1266 = vadd.f32 0.0, %v1265
  %1267 = vmatprep.mubr.f32.mxu0 0.0
  %1268 = vmatmul.mubr.f32.gmra.mrb[0].mxu0 %v1111
  %v1269 = vpop.f32.mrb[0].mxu0
  %v1270 = vadd.f32 0.0, %v1269
  %v1271 = vpop.f32.mrb[0].mxu0
  %v1272 = vadd.f32 0.0, %v1271
  %1273 = vmatprep.mubr.f32.mxu0 0.0
  %1274 = vmatmul.mubr.f32.gmra.mrb[0].mxu0 %v1114
  %v1275 = vpop.f32.mrb[0].mxu0
  %v1276 = vadd.f32 0.0, %v1275
  %v1277 = vpop.f32.mrb[0].mxu0
  %v1278 = vadd.f32 0.0, %v1277
  %1279 = vmatprep.mubr.f32.mxu0 0.0
  %1280 = vmatmul.mubr.f32.gmra.mrb[0].mxu0 %v1117
  %v1281 = vpop.f32.mrb[0].mxu0
  %v1282 = vadd.f32 0.0, %v1281
  %v1283 = vpop.f32.mrb[0].mxu0
  %v1284 = vadd.f32 0.0, %v1283
  %1285 = vmatprep.mubr.f32.mxu0 0.0
  %1286 = vmatmul.mubr.f32.gmra.mrb[0].mxu0 %v1120
  %v1287 = vpop.f32.mrb[0].mxu0
  %v1288 = vadd.f32 0.0, %v1287
  %v1289 = vpop.f32.mrb[0].mxu0
  %v1290 = vadd.f32 0.0, %v1289
  %1291 = vmatprep.mubr.f32.mxu0 0.0
  %1292 = vmatmul.mubr.f32.gmra.mrb[0].mxu0 %v1123
  %v1293 = vpop.f32.mrb[0].mxu0
  %v1294 = vadd.f32 0.0, %v1293
  %v1295 = vpop.f32.mrb[0].mxu0
  %v1296 = vadd.f32 0.0, %v1295
  %1297 = vmatprep.mubr.f32.mxu0 0.0
  %1298 = vmatmul.mubr.f32.gmra.mrb[0].mxu0 %v1126
  %v1299 = vpop.f32.mrb[0].mxu0
  %v1300 = vadd.f32 0.0, %v1299
  %v1301 = vpop.f32.mrb[0].mxu0
  %v1302 = vadd.f32 0.0, %v1301
  %1303 = vmatprep.mubr.f32.mxu0 0.0
  %1304 = vmatmul.mubr.f32.gmra.mrb[0].mxu0 %v1129
  %v1305 = vpop.f32.mrb[0].mxu0
  %v1306 = vadd.f32 0.0, %v1305
  %v1307 = vpop.f32.mrb[0].mxu0
  %v1308 = vadd.f32 0.0, %v1307
  %1309 = vmatprep.mubr.f32.mxu0 0.0
  %1310 = vmatmul.mubr.f32.gmra.mrb[0].mxu0 %v1132
  %v1311 = vpop.f32.mrb[0].mxu0
  %v1312 = vadd.f32 0.0, %v1311
  %v1313 = vpop.f32.mrb[0].mxu0
  %v1314 = vadd.f32 0.0, %v1313
  %1315 = vmatprep.mubr.f32.mxu0 0.0
  %1316 = vmatmul.mubr.f32.gmra.mrb[0].mxu0 %v1135
  %v1317 = vpop.f32.mrb[0].mxu0
  %v1318 = vadd.f32 0.0, %v1317
  %v1319 = vpop.f32.mrb[0].mxu0
  %v1320 = vadd.f32 0.0, %v1319
  %1321 = vmatprep.mubr.f32.mxu0 0.0
  %1322 = vmatmul.mubr.f32.gmra.mrb[0].mxu0 %v1138
  %v1323 = vpop.f32.mrb[0].mxu0
  %v1324 = vadd.f32 0.0, %v1323
  %v1325 = vpop.f32.mrb[0].mxu0
  %v1326 = vadd.f32 0.0, %v1325
  %1327 = vmatprep.mubr.f32.mxu0 0.0
  %1328 = vmatmul.mubr.f32.gmra.mrb[0].mxu0 %v1141
  %v1329 = vpop.f32.mrb[0].mxu0
  %v1330 = vadd.f32 0.0, %v1329
  %v1331 = vpop.f32.mrb[0].mxu0
  %v1332 = vadd.f32 0.0, %v1331
  %1333 = vmatprep.mubr.f32.mxu0 0.0
  %1334 = vmatmul.mubr.f32.gmra.mrb[0].mxu0 %v1144
  %v1335 = vpop.f32.mrb[0].mxu0
  %v1336 = vadd.f32 0.0, %v1335
  %v1337 = vpop.f32.mrb[0].mxu0
  %v1338 = vadd.f32 0.0, %v1337
  %1339 = vmatprep.mubr.f32.mxu0 0.0
  %1340 = vmatmul.mubr.f32.gmra.mrb[0].mxu0 %v1147
  %v1341 = vpop.f32.mrb[0].mxu0
  %v1342 = vadd.f32 0.0, %v1341
  %v1343 = vpop.f32.mrb[0].mxu0
  %v1344 = vadd.f32 0.0, %v1343
  %1345 = vmatprep.mubr.f32.mxu0 0.0
  %1346 = vmatmul.mubr.f32.gmra.mrb[0].mxu0 %v1150
  %v1347 = vpop.f32.mrb[0].mxu0
  %v1348 = vadd.f32 0.0, %v1347
  %v1349 = vpop.f32.mrb[0].mxu0
  %v1350 = vadd.f32 0.0, %v1349
  %1351 = vmatprep.mubr.f32.mxu0 0.0
  %1352 = vmatmul.mubr.f32.gmra.mrb[0].mxu0 %v1153
  %v1353 = vpop.f32.mrb[0].mxu0
  %v1354 = vadd.f32 0.0, %v1353
  %v1355 = vpop.f32.mrb[0].mxu0
  %v1356 = vadd.f32 0.0, %v1355
  %1357 = vmatprep.mubr.f32.mxu0 0.0
  %1358 = vmatmul.mubr.f32.gmra.mrb[0].mxu0 %v1156
  %v1359 = vpop.f32.mrb[0].mxu0
  %v1360 = vadd.f32 0.0, %v1359
  %v1361 = vpop.f32.mrb[0].mxu0
  %v1362 = vadd.f32 0.0, %v1361
  %1363 = vmatprep.mubr.f32.mxu0 0.0
  %1364 = vmatmul.mubr.f32.gmra.mrb[0].mxu0 %v1159
  %v1365 = vpop.f32.mrb[0].mxu0
  %v1366 = vadd.f32 0.0, %v1365
  %v1367 = vpop.f32.mrb[0].mxu0
  %v1368 = vadd.f32 0.0, %v1367
  %1369 = vmatprep.mubr.f32.mxu0 0.0
  %1370 = vmatmul.mubr.f32.gmra.mrb[0].mxu0 %v1162
  %v1371 = vpop.f32.mrb[0].mxu0
  %v1372 = vadd.f32 0.0, %v1371
  %v1373 = vpop.f32.mrb[0].mxu0
  %v1374 = vadd.f32 0.0, %v1373
  %1375 = vmatprep.mubr.f32.mxu0 0.0
  %1376 = vmatmul.mubr.f32.gmra.mrb[0].mxu0 %v1165
  %v1377 = vpop.f32.mrb[0].mxu0
  %v1378 = vadd.f32 0.0, %v1377
  %v1379 = vpop.f32.mrb[0].mxu0
  %v1380 = vadd.f32 0.0, %v1379
  %1381 = vmatprep.mubr.f32.mxu0 0.0
  %1382 = vmatmul.mubr.f32.gmra.mrb[0].mxu0 %v1168
  %v1383 = vpop.f32.mrb[0].mxu0
  %v1384 = vadd.f32 0.0, %v1383
  %v1385 = vpop.f32.mrb[0].mxu0
  %v1386 = vadd.f32 0.0, %v1385
  %1387 = vmatprep.mubr.f32.mxu0 0.0
  %1388 = vmatmul.mubr.f32.gmra.mrb[0].mxu0 %v1171
  %v1389 = vpop.f32.mrb[0].mxu0
  %v1390 = vadd.f32 0.0, %v1389
  %v1391 = vpop.f32.mrb[0].mxu0
  %v1392 = vadd.f32 0.0, %v1391
  %1393 = vdwg.mxu0
  %v1394 = vadd.f32 %v723, %v1246
  %v1395 = vadd.f32 %v724, %v1248
  %v1396 = vadd.f32 %v725, %v1252
  %v1397 = vadd.f32 %v726, %v1254
  %v1398 = vadd.f32 %v727, %v1258
  %v1399 = vadd.f32 %v728, %v1260
  %v1400 = vadd.f32 %v729, %v1264
  %v1401 = vadd.f32 %v730, %v1266
  %v1402 = vadd.f32 %v731, %v1270
  %v1403 = vadd.f32 %v732, %v1272
  %v1404 = vadd.f32 %v733, %v1276
  %v1405 = vadd.f32 %v734, %v1278
  %v1406 = vadd.f32 %v735, %v1282
  %v1407 = vadd.f32 %v736, %v1284
  %v1408 = vadd.f32 %v737, %v1288
  %v1409 = vadd.f32 %v738, %v1290
  %v1410 = vadd.f32 %v739, %v1294
  %v1411 = vadd.f32 %v740, %v1296
  %v1412 = vadd.f32 %v741, %v1300
  %v1413 = vadd.f32 %v742, %v1302
  %v1414 = vadd.f32 %v743, %v1306
  %v1415 = vadd.f32 %v744, %v1308
  %v1416 = vadd.f32 %v745, %v1312
  %v1417 = vadd.f32 %v746, %v1314
  %v1418 = vadd.f32 %v747, %v1318
  %v1419 = vadd.f32 %v748, %v1320
  %v1420 = vadd.f32 %v749, %v1324
  %v1421 = vadd.f32 %v750, %v1326
  %v1422 = vadd.f32 %v751, %v1330
  %v1423 = vadd.f32 %v752, %v1332
  %v1424 = vadd.f32 %v753, %v1336
  %v1425 = vadd.f32 %v754, %v1338
  %v1426 = vadd.f32 %v755, %v1342
  %v1427 = vadd.f32 %v756, %v1344
  %v1428 = vadd.f32 %v757, %v1348
  %v1429 = vadd.f32 %v758, %v1350
  %v1430 = vadd.f32 %v759, %v1354
  %v1431 = vadd.f32 %v760, %v1356
  %v1432 = vadd.f32 %v761, %v1360
  %v1433 = vadd.f32 %v762, %v1362
  %v1434 = vadd.f32 %v763, %v1366
  %v1435 = vadd.f32 %v764, %v1368
  %v1436 = vadd.f32 %v765, %v1372
  %v1437 = vadd.f32 %v766, %v1374
  %v1438 = vadd.f32 %v767, %v1378
  %v1439 = vadd.f32 %v768, %v1380
  %v1440 = vadd.f32 %v769, %v1384
  %v1441 = vadd.f32 %v770, %v1386
  %v1442 = vadd.f32 %v771, %v1390
  %v1443 = vadd.f32 %v772, %v1392
  %s1444 = scalar_lea.vmem %s1, 800
  %v1445 = vld [vmem:[%s1444] sm:$0xff]
  %v1446 = vld [vmem:[%s1444 + $0x8] sm:$0xff]
  %v1447 = vld [vmem:[%s1444 + $0x10] sm:$0xff]
  %v1448 = vld [vmem:[%s1444 + $0x18] sm:$0xff]
  %v1449 = vld [vmem:[%s1444 + $0x20] sm:$0xff]
  %v1450 = vld [vmem:[%s1444 + $0x28] sm:$0xff]
  %v1451 = vld [vmem:[%s1444 + $0x30] sm:$0xff]
  %v1452 = vld [vmem:[%s1444 + $0x38] sm:$0xff]
  %v1453 = vld [vmem:[%s1444 + $0x40] sm:$0xff]
  %v1454 = vld [vmem:[%s1444 + $0x48] sm:$0xff]
  %v1455 = vld [vmem:[%s1444 + $0x50] sm:$0xff]
  %v1456 = vld [vmem:[%s1444 + $0x58] sm:$0xff]
  %v1457 = vld [vmem:[%s1444 + $0x60] sm:$0xff]
  %v1458 = vld [vmem:[%s1444 + $0x68] sm:$0xff]
  %v1459 = vld [vmem:[%s1444 + $0x70] sm:$0xff]
  %v1460 = vld [vmem:[%s1444 + $0x78] sm:$0xff]
  %v1461 = vld [vmem:[%s1444 + $0x80] sm:$0xff]
  %v1462 = vld [vmem:[%s1444 + $0x88] sm:$0xff]
  %v1463 = vld [vmem:[%s1444 + $0x90] sm:$0xff]
  %v1464 = vld [vmem:[%s1444 + $0x98] sm:$0xff]
  %v1465 = vld [vmem:[%s1444 + $0xa0] sm:$0xff]
  %v1466 = vld [vmem:[%s1444 + $0xa8] sm:$0xff]
  %v1467 = vld [vmem:[%s1444 + $0xb0] sm:$0xff]
  %v1468 = vld [vmem:[%s1444 + $0xb8] sm:$0xff]
  %v1469 = vld [vmem:[%s1444 + $0xc0] sm:$0xff]
  %v1470 = vld [vmem:[%s1444 + $0xc8] sm:$0xff]
  %v1471 = vld [vmem:[%s1444 + $0xd0] sm:$0xff]
  %v1472 = vld [vmem:[%s1444 + $0xd8] sm:$0xff]
  %v1473 = vld [vmem:[%s1444 + $0xe0] sm:$0xff]
  %v1474 = vld [vmem:[%s1444 + $0xe8] sm:$0xff]
  %v1475 = vld [vmem:[%s1444 + $0xf0] sm:$0xff]
  %v1476 = vld [vmem:[%s1444 + $0xf8] sm:$0xff]
  %v1477 = vld [vmem:[%s1444 + $0x100] sm:$0xff]
  %v1478 = vld [vmem:[%s1444 + $0x108] sm:$0xff]
  %v1479 = vld [vmem:[%s1444 + $0x110] sm:$0xff]
  %v1480 = vld [vmem:[%s1444 + $0x118] sm:$0xff]
  %v1481 = vld [vmem:[%s1444 + $0x120] sm:$0xff]
  %v1482 = vld [vmem:[%s1444 + $0x128] sm:$0xff]
  %v1483 = vld [vmem:[%s1444 + $0x130] sm:$0xff]
  %v1484 = vld [vmem:[%s1444 + $0x138] sm:$0xff]
  %v1485 = vld [vmem:[%s1444 + $0x140] sm:$0xff]
  %v1486 = vld [vmem:[%s1444 + $0x148] sm:$0xff]
  %v1487 = vld [vmem:[%s1444 + $0x150] sm:$0xff]
  %v1488 = vld [vmem:[%s1444 + $0x158] sm:$0xff]
  %v1489 = vld [vmem:[%s1444 + $0x160] sm:$0xff]
  %v1490 = vld [vmem:[%s1444 + $0x168] sm:$0xff]
  %v1491 = vld [vmem:[%s1444 + $0x170] sm:$0xff]
  %v1492 = vld [vmem:[%s1444 + $0x178] sm:$0xff]
  %v1493 = vld [vmem:[%s1444 + $0x180] sm:$0xff]
  %v1494 = vld [vmem:[%s1444 + $0x188] sm:$0xff]
  %v1496 = vsel %vm140, %v1446, 0
  %v1499 = vsel %vm140, %v1448, 0
  %v1502 = vsel %vm140, %v1450, 0
  %v1505 = vsel %vm140, %v1452, 0
  %v1508 = vsel %vm140, %v1454, 0
  %v1511 = vsel %vm140, %v1456, 0
  %v1514 = vsel %vm140, %v1458, 0
  %v1517 = vsel %vm140, %v1460, 0
  %v1520 = vsel %vm140, %v1462, 0
  %v1523 = vsel %vm140, %v1464, 0
  %v1526 = vsel %vm140, %v1466, 0
  %v1529 = vsel %vm140, %v1468, 0
  %v1532 = vsel %vm140, %v1470, 0
  %v1535 = vsel %vm140, %v1472, 0
  %v1538 = vsel %vm140, %v1474, 0
  %v1541 = vsel %vm140, %v1476, 0
  %v1544 = vsel %vm140, %v1478, 0
  %v1547 = vsel %vm140, %v1480, 0
  %v1550 = vsel %vm140, %v1482, 0
  %v1553 = vsel %vm140, %v1484, 0
  %v1556 = vsel %vm140, %v1486, 0
  %v1559 = vsel %vm140, %v1488, 0
  %v1562 = vsel %vm140, %v1490, 0
  %v1565 = vsel %vm140, %v1492, 0
  %v1568 = vsel %vm140, %v1494, 0
  %1570 = vmatprep.subr.mxu0 0.0
  %1571 = vmatpush1.msra.mxu0 %v61
  %1572 = vmatprep.subr.mxu0 0.0
  %1573 = vmatpush1.msra.mxu0 %v62
  %1574 = vmatprep.subr.mxu0 0.0
  %1575 = vmatpush1.msra.mxu0 %v63
  %1576 = vmatprep.subr.mxu0 0.0
  %1577 = vmatpush1.msra.mxu0 %v64
  %1578 = vmatprep.subr.mxu0 0.0
  %1579 = vmatpush1.msra.mxu0 %v65
  %1580 = vmatprep.subr.mxu0 0.0
  %1581 = vmatpush1.msra.mxu0 %v66
  %1582 = vmatprep.subr.mxu0 0.0
  %1583 = vmatpush1.msra.mxu0 %v67
  %1584 = vmatprep.subr.mxu0 0.0
  %1585 = vmatpush1.msra.mxu0 %v68
  %1586 = vmatprep.subr.mxu0 0.0
  %1587 = vmatpush1.msra.mxu0 %v69
  %1588 = vmatprep.subr.mxu0 0.0
  %1589 = vmatpush1.msra.mxu0 %v70
  %1590 = vmatprep.subr.mxu0 0.0
  %1591 = vmatpush1.msra.mxu0 %v71
  %1592 = vmatprep.subr.mxu0 0.0
  %1593 = vmatpush1.msra.mxu0 %v72
  %1594 = vmatprep.subr.mxu0 0.0
  %1595 = vmatpush1.msra.mxu0 %v73
  %1596 = vmatprep.subr.mxu0 0.0
  %1597 = vmatpush1.msra.mxu0 %v74
  %1598 = vmatprep.subr.mxu0 0.0
  %1599 = vmatpush1.msra.mxu0 %v75
  %1600 = vmatprep.subr.mxu0 0.0
  %1601 = vmatpush1.msra.mxu0 %v76
  %1602 = vmatprep.subr.mxu0 0.0
  %1603 = vmatpush1.msra.mxu0 %v77
  %1604 = vmatprep.subr.mxu0 0.0
  %1605 = vmatpush1.msra.mxu0 %v78
  %1606 = vmatprep.subr.mxu0 0.0
  %1607 = vmatpush1.msra.mxu0 %v79
  %1608 = vmatprep.subr.mxu0 0.0
  %1609 = vmatpush1.msra.mxu0 %v80
  %1610 = vmatprep.subr.mxu0 0.0
  %1611 = vmatpush1.msra.mxu0 %v81
  %1612 = vmatprep.subr.mxu0 0.0
  %1613 = vmatpush1.msra.mxu0 %v82
  %1614 = vmatprep.subr.mxu0 0.0
  %1615 = vmatpush1.msra.mxu0 %v83
  %1616 = vmatprep.subr.mxu0 0.0
  %1617 = vmatpush1.msra.mxu0 %v84
  %1618 = vmatprep.subr.mxu0 0.0
  %1619 = vmatpush1.msra.mxu0 %v85
  %1620 = vmatprep.subr.mxu0 0.0
  %1621 = vmatpush1.msra.mxu0 %v86
  %1622 = vmatprep.subr.mxu0 0.0
  %1623 = vmatpush1.msra.mxu0 %v87
  %1624 = vmatprep.subr.mxu0 0.0
  %1625 = vmatpush1.msra.mxu0 %v88
  %1626 = vmatprep.subr.mxu0 0.0
  %1627 = vmatpush1.msra.mxu0 0.0
  %1628 = vmatprep.subr.mxu0 0.0
  %1629 = vmatpush1.msra.mxu0 0.0
  %1630 = vmatprep.subr.mxu0 0.0
  %1631 = vmatpush1.msra.mxu0 0.0
  %1632 = vmatprep.subr.mxu0 0.0
  %1633 = vmatpush1.msra.mxu0 0.0
  %1634 = vmatprep.mubr.f32.mxu0 %v1496
  %1635 = vmatmul.mubr.f32.gmra.mrb[0].mxu0 %v1445
  %v1636 = vpop.f32.mrb[0].mxu0
  %v1637 = vadd.f32 0.0, %v1636
  %v1638 = vpop.f32.mrb[0].mxu0
  %1639 = vmatprep.mubr.f32.mxu0 %v1499
  %1640 = vmatmul.mubr.f32.gmra.mrb[0].mxu0 %v1447
  %v1641 = vpop.f32.mrb[0].mxu0
  %v1642 = vadd.f32 0.0, %v1641
  %v1643 = vpop.f32.mrb[0].mxu0
  %1644 = vmatprep.mubr.f32.mxu0 %v1502
  %1645 = vmatmul.mubr.f32.gmra.mrb[0].mxu0 %v1449
  %v1646 = vpop.f32.mrb[0].mxu0
  %v1647 = vadd.f32 0.0, %v1646
  %v1648 = vpop.f32.mrb[0].mxu0
  %1649 = vmatprep.mubr.f32.mxu0 %v1505
  %1650 = vmatmul.mubr.f32.gmra.mrb[0].mxu0 %v1451
  %v1651 = vpop.f32.mrb[0].mxu0
  %v1652 = vadd.f32 0.0, %v1651
  %v1653 = vpop.f32.mrb[0].mxu0
  %1654 = vmatprep.mubr.f32.mxu0 %v1508
  %1655 = vmatmul.mubr.f32.gmra.mrb[0].mxu0 %v1453
  %v1656 = vpop.f32.mrb[0].mxu0
  %v1657 = vadd.f32 0.0, %v1656
  %v1658 = vpop.f32.mrb[0].mxu0
  %1659 = vmatprep.mubr.f32.mxu0 %v1511
  %1660 = vmatmul.mubr.f32.gmra.mrb[0].mxu0 %v1455
  %v1661 = vpop.f32.mrb[0].mxu0
  %v1662 = vadd.f32 0.0, %v1661
  %v1663 = vpop.f32.mrb[0].mxu0
  %1664 = vmatprep.mubr.f32.mxu0 %v1514
  %1665 = vmatmul.mubr.f32.gmra.mrb[0].mxu0 %v1457
  %v1666 = vpop.f32.mrb[0].mxu0
  %v1667 = vadd.f32 0.0, %v1666
  %v1668 = vpop.f32.mrb[0].mxu0
  %1669 = vmatprep.mubr.f32.mxu0 %v1517
  %1670 = vmatmul.mubr.f32.gmra.mrb[0].mxu0 %v1459
  %v1671 = vpop.f32.mrb[0].mxu0
  %v1672 = vadd.f32 0.0, %v1671
  %v1673 = vpop.f32.mrb[0].mxu0
  %1674 = vmatprep.mubr.f32.mxu0 %v1520
  %1675 = vmatmul.mubr.f32.gmra.mrb[0].mxu0 %v1461
  %v1676 = vpop.f32.mrb[0].mxu0
  %v1677 = vadd.f32 0.0, %v1676
  %v1678 = vpop.f32.mrb[0].mxu0
  %1679 = vmatprep.mubr.f32.mxu0 %v1523
  %1680 = vmatmul.mubr.f32.gmra.mrb[0].mxu0 %v1463
  %v1681 = vpop.f32.mrb[0].mxu0
  %v1682 = vadd.f32 0.0, %v1681
  %v1683 = vpop.f32.mrb[0].mxu0
  %1684 = vmatprep.mubr.f32.mxu0 %v1526
  %1685 = vmatmul.mubr.f32.gmra.mrb[0].mxu0 %v1465
  %v1686 = vpop.f32.mrb[0].mxu0
  %v1687 = vadd.f32 0.0, %v1686
  %v1688 = vpop.f32.mrb[0].mxu0
  %1689 = vmatprep.mubr.f32.mxu0 %v1529
  %1690 = vmatmul.mubr.f32.gmra.mrb[0].mxu0 %v1467
  %v1691 = vpop.f32.mrb[0].mxu0
  %v1692 = vadd.f32 0.0, %v1691
  %v1693 = vpop.f32.mrb[0].mxu0
  %1694 = vmatprep.mubr.f32.mxu0 %v1532
  %1695 = vmatmul.mubr.f32.gmra.mrb[0].mxu0 %v1469
  %v1696 = vpop.f32.mrb[0].mxu0
  %v1697 = vadd.f32 0.0, %v1696
  %v1698 = vpop.f32.mrb[0].mxu0
  %1699 = vmatprep.mubr.f32.mxu0 %v1535
  %1700 = vmatmul.mubr.f32.gmra.mrb[0].mxu0 %v1471
  %v1701 = vpop.f32.mrb[0].mxu0
  %v1702 = vadd.f32 0.0, %v1701
  %v1703 = vpop.f32.mrb[0].mxu0
  %1704 = vmatprep.mubr.f32.mxu0 %v1538
  %1705 = vmatmul.mubr.f32.gmra.mrb[0].mxu0 %v1473
  %v1706 = vpop.f32.mrb[0].mxu0
  %v1707 = vadd.f32 0.0, %v1706
  %v1708 = vpop.f32.mrb[0].mxu0
  %1709 = vmatprep.mubr.f32.mxu0 %v1541
  %1710 = vmatmul.mubr.f32.gmra.mrb[0].mxu0 %v1475
  %v1711 = vpop.f32.mrb[0].mxu0
  %v1712 = vadd.f32 0.0, %v1711
  %v1713 = vpop.f32.mrb[0].mxu0
  %1714 = vmatprep.mubr.f32.mxu0 %v1544
  %1715 = vmatmul.mubr.f32.gmra.mrb[0].mxu0 %v1477
  %v1716 = vpop.f32.mrb[0].mxu0
  %v1717 = vadd.f32 0.0, %v1716
  %v1718 = vpop.f32.mrb[0].mxu0
  %1719 = vmatprep.mubr.f32.mxu0 %v1547
  %1720 = vmatmul.mubr.f32.gmra.mrb[0].mxu0 %v1479
  %v1721 = vpop.f32.mrb[0].mxu0
  %v1722 = vadd.f32 0.0, %v1721
  %v1723 = vpop.f32.mrb[0].mxu0
  %1724 = vmatprep.mubr.f32.mxu0 %v1550
  %1725 = vmatmul.mubr.f32.gmra.mrb[0].mxu0 %v1481
  %v1726 = vpop.f32.mrb[0].mxu0
  %v1727 = vadd.f32 0.0, %v1726
  %v1728 = vpop.f32.mrb[0].mxu0
  %1729 = vmatprep.mubr.f32.mxu0 %v1553
  %1730 = vmatmul.mubr.f32.gmra.mrb[0].mxu0 %v1483
  %v1731 = vpop.f32.mrb[0].mxu0
  %v1732 = vadd.f32 0.0, %v1731
  %v1733 = vpop.f32.mrb[0].mxu0
  %1734 = vmatprep.mubr.f32.mxu0 %v1556
  %1735 = vmatmul.mubr.f32.gmra.mrb[0].mxu0 %v1485
  %v1736 = vpop.f32.mrb[0].mxu0
  %v1737 = vadd.f32 0.0, %v1736
  %v1738 = vpop.f32.mrb[0].mxu0
  %1739 = vmatprep.mubr.f32.mxu0 %v1559
  %1740 = vmatmul.mubr.f32.gmra.mrb[0].mxu0 %v1487
  %v1741 = vpop.f32.mrb[0].mxu0
  %v1742 = vadd.f32 0.0, %v1741
  %v1743 = vpop.f32.mrb[0].mxu0
  %1744 = vmatprep.mubr.f32.mxu0 %v1562
  %1745 = vmatmul.mubr.f32.gmra.mrb[0].mxu0 %v1489
  %v1746 = vpop.f32.mrb[0].mxu0
  %v1747 = vadd.f32 0.0, %v1746
  %v1748 = vpop.f32.mrb[0].mxu0
  %1749 = vmatprep.mubr.f32.mxu0 %v1565
  %1750 = vmatmul.mubr.f32.gmra.mrb[0].mxu0 %v1491
  %v1751 = vpop.f32.mrb[0].mxu0
  %v1752 = vadd.f32 0.0, %v1751
  %v1753 = vpop.f32.mrb[0].mxu0
  %1754 = vmatprep.mubr.f32.mxu0 %v1568
  %1755 = vmatmul.mubr.f32.gmra.mrb[0].mxu0 %v1493
  %v1756 = vpop.f32.mrb[0].mxu0
  %v1757 = vadd.f32 0.0, %v1756
  %v1758 = vpop.f32.mrb[0].mxu0
  %1759 = vdwg.mxu0
  %s1760 = scalar_lea.vmem %s2, 128
  %v1761 = vld [vmem:[%s1760] sm:$0xff]
  %v1762 = vld [vmem:[%s1760 + $0x8] sm:$0xff]
  %v1763 = vld [vmem:[%s1760 + $0x10] sm:$0xff]
  %v1764 = vld [vmem:[%s1760 + $0x18] sm:$0xff]
  %v1765 = vld [vmem:[%s1760 + $0x20] sm:$0xff]
  %v1766 = vld [vmem:[%s1760 + $0x28] sm:$0xff]
  %v1767 = vld [vmem:[%s1760 + $0x30] sm:$0xf]
  %v1768 = vld [vmem:[%s1760 + $0x38] sm:$0xf]
  %v1770 = vsel %vm414, %v1637, 0
  %v1773 = vsel %vm414, %v1642, 0
  %v1776 = vsel %vm414, %v1647, 0
  %v1779 = vsel %vm414, %v1652, 0
  %v1782 = vsel %vm414, %v1657, 0
  %v1785 = vsel %vm414, %v1662, 0
  %v1788 = vsel %vm414, %v1667, 0
  %v1791 = vsel %vm414, %v1672, 0
  %v1794 = vsel %vm414, %v1677, 0
  %v1797 = vsel %vm414, %v1682, 0
  %v1800 = vsel %vm414, %v1687, 0
  %v1803 = vsel %vm414, %v1692, 0
  %v1806 = vsel %vm414, %v1697, 0
  %v1809 = vsel %vm414, %v1702, 0
  %v1812 = vsel %vm414, %v1707, 0
  %v1815 = vsel %vm414, %v1712, 0
  %v1818 = vsel %vm414, %v1717, 0
  %v1821 = vsel %vm414, %v1722, 0
  %v1824 = vsel %vm414, %v1727, 0
  %v1827 = vsel %vm414, %v1732, 0
  %v1830 = vsel %vm414, %v1737, 0
  %v1833 = vsel %vm414, %v1742, 0
  %v1836 = vsel %vm414, %v1747, 0
  %v1839 = vsel %vm414, %v1752, 0
  %v1842 = vsel %vm414, %v1757, 0
  %v1845 = vsel %vm490, %v1767, 0
  %v1848 = vsel %vm490, %v1768, 0
  %1850 = vmatprep.subr.mxu0 %v1762
  %1851 = vmatpush1.msra.mxu0 %v1761
  %1852 = vmatprep.subr.mxu0 %v1764
  %1853 = vmatpush1.msra.mxu0 %v1763
  %1854 = vmatprep.subr.mxu0 %v1766
  %1855 = vmatpush1.msra.mxu0 %v1765
  %1856 = vmatprep.subr.mxu0 %v1848
  %1857 = vmatpush1.msra.mxu0 %v1845
  %1858 = vmatprep.subr.mxu0 0.0
  %1859 = vmatpush1.msra.mxu0 0.0
  %1860 = vmatprep.subr.mxu0 0.0
  %1861 = vmatpush1.msra.mxu0 0.0
  %1862 = vmatprep.subr.mxu0 0.0
  %1863 = vmatpush1.msra.mxu0 0.0
  %1864 = vmatprep.subr.mxu0 0.0
  %1865 = vmatpush1.msra.mxu0 0.0
  %1866 = vmatprep.subr.mxu0 0.0
  %1867 = vmatpush1.msra.mxu0 0.0
  %1868 = vmatprep.subr.mxu0 0.0
  %1869 = vmatpush1.msra.mxu0 0.0
  %1870 = vmatprep.subr.mxu0 0.0
  %1871 = vmatpush1.msra.mxu0 0.0
  %1872 = vmatprep.subr.mxu0 0.0
  %1873 = vmatpush1.msra.mxu0 0.0
  %1874 = vmatprep.subr.mxu0 0.0
  %1875 = vmatpush1.msra.mxu0 0.0
  %1876 = vmatprep.subr.mxu0 0.0
  %1877 = vmatpush1.msra.mxu0 0.0
  %1878 = vmatprep.subr.mxu0 0.0
  %1879 = vmatpush1.msra.mxu0 0.0
  %1880 = vmatprep.subr.mxu0 0.0
  %1881 = vmatpush1.msra.mxu0 0.0
  %1882 = vmatprep.subr.mxu0 0.0
  %1883 = vmatpush1.msra.mxu0 0.0
  %1884 = vmatprep.subr.mxu0 0.0
  %1885 = vmatpush1.msra.mxu0 0.0
  %1886 = vmatprep.subr.mxu0 0.0
  %1887 = vmatpush1.msra.mxu0 0.0
  %1888 = vmatprep.subr.mxu0 0.0
  %1889 = vmatpush1.msra.mxu0 0.0
  %1890 = vmatprep.subr.mxu0 0.0
  %1891 = vmatpush1.msra.mxu0 0.0
  %1892 = vmatprep.subr.mxu0 0.0
  %1893 = vmatpush1.msra.mxu0 0.0
  %1894 = vmatprep.subr.mxu0 0.0
  %1895 = vmatpush1.msra.mxu0 0.0
  %1896 = vmatprep.subr.mxu0 0.0
  %1897 = vmatpush1.msra.mxu0 0.0
  %1898 = vmatprep.subr.mxu0 0.0
  %1899 = vmatpush1.msra.mxu0 0.0
  %1900 = vmatprep.subr.mxu0 0.0
  %1901 = vmatpush1.msra.mxu0 0.0
  %1902 = vmatprep.subr.mxu0 0.0
  %1903 = vmatpush1.msra.mxu0 0.0
  %1904 = vmatprep.subr.mxu0 0.0
  %1905 = vmatpush1.msra.mxu0 0.0
  %1906 = vmatprep.subr.mxu0 0.0
  %1907 = vmatpush1.msra.mxu0 0.0
  %1908 = vmatprep.subr.mxu0 0.0
  %1909 = vmatpush1.msra.mxu0 0.0
  %1910 = vmatprep.subr.mxu0 0.0
  %1911 = vmatpush1.msra.mxu0 0.0
  %1912 = vmatprep.subr.mxu0 0.0
  %1913 = vmatpush1.msra.mxu0 0.0
  %1914 = vmatprep.mubr.f32.mxu0 0.0
  %1915 = vmatmul.mubr.f32.gmra.mrb[0].mxu0 %v1770
  %v1916 = vpop.f32.mrb[0].mxu0
  %v1917 = vadd.f32 0.0, %v1916
  %v1918 = vpop.f32.mrb[0].mxu0
  %v1919 = vadd.f32 0.0, %v1918
  %1920 = vmatprep.mubr.f32.mxu0 0.0
  %1921 = vmatmul.mubr.f32.gmra.mrb[0].mxu0 %v1773
  %v1922 = vpop.f32.mrb[0].mxu0
  %v1923 = vadd.f32 0.0, %v1922
  %v1924 = vpop.f32.mrb[0].mxu0
  %v1925 = vadd.f32 0.0, %v1924
  %1926 = vmatprep.mubr.f32.mxu0 0.0
  %1927 = vmatmul.mubr.f32.gmra.mrb[0].mxu0 %v1776
  %v1928 = vpop.f32.mrb[0].mxu0
  %v1929 = vadd.f32 0.0, %v1928
  %v1930 = vpop.f32.mrb[0].mxu0
  %v1931 = vadd.f32 0.0, %v1930
  %1932 = vmatprep.mubr.f32.mxu0 0.0
  %1933 = vmatmul.mubr.f32.gmra.mrb[0].mxu0 %v1779
  %v1934 = vpop.f32.mrb[0].mxu0
  %v1935 = vadd.f32 0.0, %v1934
  %v1936 = vpop.f32.mrb[0].mxu0
  %v1937 = vadd.f32 0.0, %v1936
  %1938 = vmatprep.mubr.f32.mxu0 0.0
  %1939 = vmatmul.mubr.f32.gmra.mrb[0].mxu0 %v1782
  %v1940 = vpop.f32.mrb[0].mxu0
  %v1941 = vadd.f32 0.0, %v1940
  %v1942 = vpop.f32.mrb[0].mxu0
  %v1943 = vadd.f32 0.0, %v1942
  %1944 = vmatprep.mubr.f32.mxu0 0.0
  %1945 = vmatmul.mubr.f32.gmra.mrb[0].mxu0 %v1785
  %v1946 = vpop.f32.mrb[0].mxu0
  %v1947 = vadd.f32 0.0, %v1946
  %v1948 = vpop.f32.mrb[0].mxu0
  %v1949 = vadd.f32 0.0, %v1948
  %1950 = vmatprep.mubr.f32.mxu0 0.0
  %1951 = vmatmul.mubr.f32.gmra.mrb[0].mxu0 %v1788
  %v1952 = vpop.f32.mrb[0].mxu0
  %v1953 = vadd.f32 0.0, %v1952
  %v1954 = vpop.f32.mrb[0].mxu0
  %v1955 = vadd.f32 0.0, %v1954
  %1956 = vmatprep.mubr.f32.mxu0 0.0
  %1957 = vmatmul.mubr.f32.gmra.mrb[0].mxu0 %v1791
  %v1958 = vpop.f32.mrb[0].mxu0
  %v1959 = vadd.f32 0.0, %v1958
  %v1960 = vpop.f32.mrb[0].mxu0
  %v1961 = vadd.f32 0.0, %v1960
  %1962 = vmatprep.mubr.f32.mxu0 0.0
  %1963 = vmatmul.mubr.f32.gmra.mrb[0].mxu0 %v1794
  %v1964 = vpop.f32.mrb[0].mxu0
  %v1965 = vadd.f32 0.0, %v1964
  %v1966 = vpop.f32.mrb[0].mxu0
  %v1967 = vadd.f32 0.0, %v1966
  %1968 = vmatprep.mubr.f32.mxu0 0.0
  %1969 = vmatmul.mubr.f32.gmra.mrb[0].mxu0 %v1797
  %v1970 = vpop.f32.mrb[0].mxu0
  %v1971 = vadd.f32 0.0, %v1970
  %v1972 = vpop.f32.mrb[0].mxu0
  %v1973 = vadd.f32 0.0, %v1972
  %1974 = vmatprep.mubr.f32.mxu0 0.0
  %1975 = vmatmul.mubr.f32.gmra.mrb[0].mxu0 %v1800
  %v1976 = vpop.f32.mrb[0].mxu0
  %v1977 = vadd.f32 0.0, %v1976
  %v1978 = vpop.f32.mrb[0].mxu0
  %v1979 = vadd.f32 0.0, %v1978
  %1980 = vmatprep.mubr.f32.mxu0 0.0
  %1981 = vmatmul.mubr.f32.gmra.mrb[0].mxu0 %v1803
  %v1982 = vpop.f32.mrb[0].mxu0
  %v1983 = vadd.f32 0.0, %v1982
  %v1984 = vpop.f32.mrb[0].mxu0
  %v1985 = vadd.f32 0.0, %v1984
  %1986 = vmatprep.mubr.f32.mxu0 0.0
  %1987 = vmatmul.mubr.f32.gmra.mrb[0].mxu0 %v1806
  %v1988 = vpop.f32.mrb[0].mxu0
  %v1989 = vadd.f32 0.0, %v1988
  %v1990 = vpop.f32.mrb[0].mxu0
  %v1991 = vadd.f32 0.0, %v1990
  %1992 = vmatprep.mubr.f32.mxu0 0.0
  %1993 = vmatmul.mubr.f32.gmra.mrb[0].mxu0 %v1809
  %v1994 = vpop.f32.mrb[0].mxu0
  %v1995 = vadd.f32 0.0, %v1994
  %v1996 = vpop.f32.mrb[0].mxu0
  %v1997 = vadd.f32 0.0, %v1996
  %1998 = vmatprep.mubr.f32.mxu0 0.0
  %1999 = vmatmul.mubr.f32.gmra.mrb[0].mxu0 %v1812
  %v2000 = vpop.f32.mrb[0].mxu0
  %v2001 = vadd.f32 0.0, %v2000
  %v2002 = vpop.f32.mrb[0].mxu0
  %v2003 = vadd.f32 0.0, %v2002
  %2004 = vmatprep.mubr.f32.mxu0 0.0
  %2005 = vmatmul.mubr.f32.gmra.mrb[0].mxu0 %v1815
  %v2006 = vpop.f32.mrb[0].mxu0
  %v2007 = vadd.f32 0.0, %v2006
  %v2008 = vpop.f32.mrb[0].mxu0
  %v2009 = vadd.f32 0.0, %v2008
  %2010 = vmatprep.mubr.f32.mxu0 0.0
  %2011 = vmatmul.mubr.f32.gmra.mrb[0].mxu0 %v1818
  %v2012 = vpop.f32.mrb[0].mxu0
  %v2013 = vadd.f32 0.0, %v2012
  %v2014 = vpop.f32.mrb[0].mxu0
  %v2015 = vadd.f32 0.0, %v2014
  %2016 = vmatprep.mubr.f32.mxu0 0.0
  %2017 = vmatmul.mubr.f32.gmra.mrb[0].mxu0 %v1821
  %v2018 = vpop.f32.mrb[0].mxu0
  %v2019 = vadd.f32 0.0, %v2018
  %v2020 = vpop.f32.mrb[0].mxu0
  %v2021 = vadd.f32 0.0, %v2020
  %2022 = vmatprep.mubr.f32.mxu0 0.0
  %2023 = vmatmul.mubr.f32.gmra.mrb[0].mxu0 %v1824
  %v2024 = vpop.f32.mrb[0].mxu0
  %v2025 = vadd.f32 0.0, %v2024
  %v2026 = vpop.f32.mrb[0].mxu0
  %v2027 = vadd.f32 0.0, %v2026
  %2028 = vmatprep.mubr.f32.mxu0 0.0
  %2029 = vmatmul.mubr.f32.gmra.mrb[0].mxu0 %v1827
  %v2030 = vpop.f32.mrb[0].mxu0
  %v2031 = vadd.f32 0.0, %v2030
  %v2032 = vpop.f32.mrb[0].mxu0
  %v2033 = vadd.f32 0.0, %v2032
  %2034 = vmatprep.mubr.f32.mxu0 0.0
  %2035 = vmatmul.mubr.f32.gmra.mrb[0].mxu0 %v1830
  %v2036 = vpop.f32.mrb[0].mxu0
  %v2037 = vadd.f32 0.0, %v2036
  %v2038 = vpop.f32.mrb[0].mxu0
  %v2039 = vadd.f32 0.0, %v2038
  %2040 = vmatprep.mubr.f32.mxu0 0.0
  %2041 = vmatmul.mubr.f32.gmra.mrb[0].mxu0 %v1833
  %v2042 = vpop.f32.mrb[0].mxu0
  %v2043 = vadd.f32 0.0, %v2042
  %v2044 = vpop.f32.mrb[0].mxu0
  %v2045 = vadd.f32 0.0, %v2044
  %2046 = vmatprep.mubr.f32.mxu0 0.0
  %2047 = vmatmul.mubr.f32.gmra.mrb[0].mxu0 %v1836
  %v2048 = vpop.f32.mrb[0].mxu0
  %v2049 = vadd.f32 0.0, %v2048
  %v2050 = vpop.f32.mrb[0].mxu0
  %v2051 = vadd.f32 0.0, %v2050
  %2052 = vmatprep.mubr.f32.mxu0 0.0
  %2053 = vmatmul.mubr.f32.gmra.mrb[0].mxu0 %v1839
  %v2054 = vpop.f32.mrb[0].mxu0
  %v2055 = vadd.f32 0.0, %v2054
  %v2056 = vpop.f32.mrb[0].mxu0
  %v2057 = vadd.f32 0.0, %v2056
  %2058 = vmatprep.mubr.f32.mxu0 0.0
  %2059 = vmatmul.mubr.f32.gmra.mrb[0].mxu0 %v1842
  %v2060 = vpop.f32.mrb[0].mxu0
  %v2061 = vadd.f32 0.0, %v2060
  %v2062 = vpop.f32.mrb[0].mxu0
  %v2063 = vadd.f32 0.0, %v2062
  %2064 = vdwg.mxu0
  %v2065 = vadd.f32 %v1394, %v1917
  %v2066 = vadd.f32 %v1395, %v1919
  %v2067 = vadd.f32 %v1396, %v1923
  %v2068 = vadd.f32 %v1397, %v1925
  %v2069 = vadd.f32 %v1398, %v1929
  %v2070 = vadd.f32 %v1399, %v1931
  %v2071 = vadd.f32 %v1400, %v1935
  %v2072 = vadd.f32 %v1401, %v1937
  %v2073 = vadd.f32 %v1402, %v1941
  %v2074 = vadd.f32 %v1403, %v1943
  %v2075 = vadd.f32 %v1404, %v1947
  %v2076 = vadd.f32 %v1405, %v1949
  %v2077 = vadd.f32 %v1406, %v1953
  %v2078 = vadd.f32 %v1407, %v1955
  %v2079 = vadd.f32 %v1408, %v1959
  %v2080 = vadd.f32 %v1409, %v1961
  %v2081 = vadd.f32 %v1410, %v1965
  %v2082 = vadd.f32 %v1411, %v1967
  %v2083 = vadd.f32 %v1412, %v1971
  %v2084 = vadd.f32 %v1413, %v1973
  %v2085 = vadd.f32 %v1414, %v1977
  %v2086 = vadd.f32 %v1415, %v1979
  %v2087 = vadd.f32 %v1416, %v1983
  %v2088 = vadd.f32 %v1417, %v1985
  %v2089 = vadd.f32 %v1418, %v1989
  %v2090 = vadd.f32 %v1419, %v1991
  %v2091 = vadd.f32 %v1420, %v1995
  %v2092 = vadd.f32 %v1421, %v1997
  %v2093 = vadd.f32 %v1422, %v2001
  %v2094 = vadd.f32 %v1423, %v2003
  %v2095 = vadd.f32 %v1424, %v2007
  %v2096 = vadd.f32 %v1425, %v2009
  %v2097 = vadd.f32 %v1426, %v2013
  %v2098 = vadd.f32 %v1427, %v2015
  %v2099 = vadd.f32 %v1428, %v2019
  %v2100 = vadd.f32 %v1429, %v2021
  %v2101 = vadd.f32 %v1430, %v2025
  %v2102 = vadd.f32 %v1431, %v2027
  %v2103 = vadd.f32 %v1432, %v2031
  %v2104 = vadd.f32 %v1433, %v2033
  %v2105 = vadd.f32 %v1434, %v2037
  %v2106 = vadd.f32 %v1435, %v2039
  %v2107 = vadd.f32 %v1436, %v2043
  %v2108 = vadd.f32 %v1437, %v2045
  %v2109 = vadd.f32 %v1438, %v2049
  %v2110 = vadd.f32 %v1439, %v2051
  %v2111 = vadd.f32 %v1440, %v2055
  %v2112 = vadd.f32 %v1441, %v2057
  %v2113 = vadd.f32 %v1442, %v2061
  %v2114 = vadd.f32 %v1443, %v2063
  %s2115 = scalar_lea.vmem %s1, 1200
  %v2116 = vld [vmem:[%s2115] sm:$0xff]
  %v2117 = vld [vmem:[%s2115 + $0x8] sm:$0xff]
  %v2118 = vld [vmem:[%s2115 + $0x10] sm:$0xff]
  %v2119 = vld [vmem:[%s2115 + $0x18] sm:$0xff]
  %v2120 = vld [vmem:[%s2115 + $0x20] sm:$0xff]
  %v2121 = vld [vmem:[%s2115 + $0x28] sm:$0xff]
  %v2122 = vld [vmem:[%s2115 + $0x30] sm:$0xff]
  %v2123 = vld [vmem:[%s2115 + $0x38] sm:$0xff]
  %v2124 = vld [vmem:[%s2115 + $0x40] sm:$0xff]
  %v2125 = vld [vmem:[%s2115 + $0x48] sm:$0xff]
  %v2126 = vld [vmem:[%s2115 + $0x50] sm:$0xff]
  %v2127 = vld [vmem:[%s2115 + $0x58] sm:$0xff]
  %v2128 = vld [vmem:[%s2115 + $0x60] sm:$0xff]
  %v2129 = vld [vmem:[%s2115 + $0x68] sm:$0xff]
  %v2130 = vld [vmem:[%s2115 + $0x70] sm:$0xff]
  %v2131 = vld [vmem:[%s2115 + $0x78] sm:$0xff]
  %v2132 = vld [vmem:[%s2115 + $0x80] sm:$0xff]
  %v2133 = vld [vmem:[%s2115 + $0x88] sm:$0xff]
  %v2134 = vld [vmem:[%s2115 + $0x90] sm:$0xff]
  %v2135 = vld [vmem:[%s2115 + $0x98] sm:$0xff]
  %v2136 = vld [vmem:[%s2115 + $0xa0] sm:$0xff]
  %v2137 = vld [vmem:[%s2115 + $0xa8] sm:$0xff]
  %v2138 = vld [vmem:[%s2115 + $0xb0] sm:$0xff]
  %v2139 = vld [vmem:[%s2115 + $0xb8] sm:$0xff]
  %v2140 = vld [vmem:[%s2115 + $0xc0] sm:$0xff]
  %v2141 = vld [vmem:[%s2115 + $0xc8] sm:$0xff]
  %v2142 = vld [vmem:[%s2115 + $0xd0] sm:$0xff]
  %v2143 = vld [vmem:[%s2115 + $0xd8] sm:$0xff]
  %v2144 = vld [vmem:[%s2115 + $0xe0] sm:$0xff]
  %v2145 = vld [vmem:[%s2115 + $0xe8] sm:$0xff]
  %v2146 = vld [vmem:[%s2115 + $0xf0] sm:$0xff]
  %v2147 = vld [vmem:[%s2115 + $0xf8] sm:$0xff]
  %v2148 = vld [vmem:[%s2115 + $0x100] sm:$0xff]
  %v2149 = vld [vmem:[%s2115 + $0x108] sm:$0xff]
  %v2150 = vld [vmem:[%s2115 + $0x110] sm:$0xff]
  %v2151 = vld [vmem:[%s2115 + $0x118] sm:$0xff]
  %v2152 = vld [vmem:[%s2115 + $0x120] sm:$0xff]
  %v2153 = vld [vmem:[%s2115 + $0x128] sm:$0xff]
  %v2154 = vld [vmem:[%s2115 + $0x130] sm:$0xff]
  %v2155 = vld [vmem:[%s2115 + $0x138] sm:$0xff]
  %v2156 = vld [vmem:[%s2115 + $0x140] sm:$0xff]
  %v2157 = vld [vmem:[%s2115 + $0x148] sm:$0xff]
  %v2158 = vld [vmem:[%s2115 + $0x150] sm:$0xff]
  %v2159 = vld [vmem:[%s2115 + $0x158] sm:$0xff]
  %v2160 = vld [vmem:[%s2115 + $0x160] sm:$0xff]
  %v2161 = vld [vmem:[%s2115 + $0x168] sm:$0xff]
  %v2162 = vld [vmem:[%s2115 + $0x170] sm:$0xff]
  %v2163 = vld [vmem:[%s2115 + $0x178] sm:$0xff]
  %v2164 = vld [vmem:[%s2115 + $0x180] sm:$0xff]
  %v2165 = vld [vmem:[%s2115 + $0x188] sm:$0xff]
  %v2167 = vsel %vm140, %v2117, 0
  %v2170 = vsel %vm140, %v2119, 0
  %v2173 = vsel %vm140, %v2121, 0
  %v2176 = vsel %vm140, %v2123, 0
  %v2179 = vsel %vm140, %v2125, 0
  %v2182 = vsel %vm140, %v2127, 0
  %v2185 = vsel %vm140, %v2129, 0
  %v2188 = vsel %vm140, %v2131, 0
  %v2191 = vsel %vm140, %v2133, 0
  %v2194 = vsel %vm140, %v2135, 0
  %v2197 = vsel %vm140, %v2137, 0
  %v2200 = vsel %vm140, %v2139, 0
  %v2203 = vsel %vm140, %v2141, 0
  %v2206 = vsel %vm140, %v2143, 0
  %v2209 = vsel %vm140, %v2145, 0
  %v2212 = vsel %vm140, %v2147, 0
  %v2215 = vsel %vm140, %v2149, 0
  %v2218 = vsel %vm140, %v2151, 0
  %v2221 = vsel %vm140, %v2153, 0
  %v2224 = vsel %vm140, %v2155, 0
  %v2227 = vsel %vm140, %v2157, 0
  %v2230 = vsel %vm140, %v2159, 0
  %v2233 = vsel %vm140, %v2161, 0
  %v2236 = vsel %vm140, %v2163, 0
  %v2239 = vsel %vm140, %v2165, 0
  %2241 = vmatprep.subr.mxu0 0.0
  %2242 = vmatpush1.msra.mxu0 %v61
  %2243 = vmatprep.subr.mxu0 0.0
  %2244 = vmatpush1.msra.mxu0 %v62
  %2245 = vmatprep.subr.mxu0 0.0
  %2246 = vmatpush1.msra.mxu0 %v63
  %2247 = vmatprep.subr.mxu0 0.0
  %2248 = vmatpush1.msra.mxu0 %v64
  %2249 = vmatprep.subr.mxu0 0.0
  %2250 = vmatpush1.msra.mxu0 %v65
  %2251 = vmatprep.subr.mxu0 0.0
  %2252 = vmatpush1.msra.mxu0 %v66
  %2253 = vmatprep.subr.mxu0 0.0
  %2254 = vmatpush1.msra.mxu0 %v67
  %2255 = vmatprep.subr.mxu0 0.0
  %2256 = vmatpush1.msra.mxu0 %v68
  %2257 = vmatprep.subr.mxu0 0.0
  %2258 = vmatpush1.msra.mxu0 %v69
  %2259 = vmatprep.subr.mxu0 0.0
  %2260 = vmatpush1.msra.mxu0 %v70
  %2261 = vmatprep.subr.mxu0 0.0
  %2262 = vmatpush1.msra.mxu0 %v71
  %2263 = vmatprep.subr.mxu0 0.0
  %2264 = vmatpush1.msra.mxu0 %v72
  %2265 = vmatprep.subr.mxu0 0.0
  %2266 = vmatpush1.msra.mxu0 %v73
  %2267 = vmatprep.subr.mxu0 0.0
  %2268 = vmatpush1.msra.mxu0 %v74
  %2269 = vmatprep.subr.mxu0 0.0
  %2270 = vmatpush1.msra.mxu0 %v75
  %2271 = vmatprep.subr.mxu0 0.0
  %2272 = vmatpush1.msra.mxu0 %v76
  %2273 = vmatprep.subr.mxu0 0.0
  %2274 = vmatpush1.msra.mxu0 %v77
  %2275 = vmatprep.subr.mxu0 0.0
  %2276 = vmatpush1.msra.mxu0 %v78
  %2277 = vmatprep.subr.mxu0 0.0
  %2278 = vmatpush1.msra.mxu0 %v79
  %2279 = vmatprep.subr.mxu0 0.0
  %2280 = vmatpush1.msra.mxu0 %v80
  %2281 = vmatprep.subr.mxu0 0.0
  %2282 = vmatpush1.msra.mxu0 %v81
  %2283 = vmatprep.subr.mxu0 0.0
  %2284 = vmatpush1.msra.mxu0 %v82
  %2285 = vmatprep.subr.mxu0 0.0
  %2286 = vmatpush1.msra.mxu0 %v83
  %2287 = vmatprep.subr.mxu0 0.0
  %2288 = vmatpush1.msra.mxu0 %v84
  %2289 = vmatprep.subr.mxu0 0.0
  %2290 = vmatpush1.msra.mxu0 %v85
  %2291 = vmatprep.subr.mxu0 0.0
  %2292 = vmatpush1.msra.mxu0 %v86
  %2293 = vmatprep.subr.mxu0 0.0
  %2294 = vmatpush1.msra.mxu0 %v87
  %2295 = vmatprep.subr.mxu0 0.0
  %2296 = vmatpush1.msra.mxu0 %v88
  %2297 = vmatprep.subr.mxu0 0.0
  %2298 = vmatpush1.msra.mxu0 0.0
  %2299 = vmatprep.subr.mxu0 0.0
  %2300 = vmatpush1.msra.mxu0 0.0
  %2301 = vmatprep.subr.mxu0 0.0
  %2302 = vmatpush1.msra.mxu0 0.0
  %2303 = vmatprep.subr.mxu0 0.0
  %2304 = vmatpush1.msra.mxu0 0.0
  %2305 = vmatprep.mubr.f32.mxu0 %v2167
  %2306 = vmatmul.mubr.f32.gmra.mrb[0].mxu0 %v2116
  %v2307 = vpop.f32.mrb[0].mxu0
  %v2308 = vadd.f32 0.0, %v2307
  %v2309 = vpop.f32.mrb[0].mxu0
  %2310 = vmatprep.mubr.f32.mxu0 %v2170
  %2311 = vmatmul.mubr.f32.gmra.mrb[0].mxu0 %v2118
  %v2312 = vpop.f32.mrb[0].mxu0
  %v2313 = vadd.f32 0.0, %v2312
  %v2314 = vpop.f32.mrb[0].mxu0
  %2315 = vmatprep.mubr.f32.mxu0 %v2173
  %2316 = vmatmul.mubr.f32.gmra.mrb[0].mxu0 %v2120
  %v2317 = vpop.f32.mrb[0].mxu0
  %v2318 = vadd.f32 0.0, %v2317
  %v2319 = vpop.f32.mrb[0].mxu0
  %2320 = vmatprep.mubr.f32.mxu0 %v2176
  %2321 = vmatmul.mubr.f32.gmra.mrb[0].mxu0 %v2122
  %v2322 = vpop.f32.mrb[0].mxu0
  %v2323 = vadd.f32 0.0, %v2322
  %v2324 = vpop.f32.mrb[0].mxu0
  %2325 = vmatprep.mubr.f32.mxu0 %v2179
  %2326 = vmatmul.mubr.f32.gmra.mrb[0].mxu0 %v2124
  %v2327 = vpop.f32.mrb[0].mxu0
  %v2328 = vadd.f32 0.0, %v2327
  %v2329 = vpop.f32.mrb[0].mxu0
  %2330 = vmatprep.mubr.f32.mxu0 %v2182
  %2331 = vmatmul.mubr.f32.gmra.mrb[0].mxu0 %v2126
  %v2332 = vpop.f32.mrb[0].mxu0
  %v2333 = vadd.f32 0.0, %v2332
  %v2334 = vpop.f32.mrb[0].mxu0
  %2335 = vmatprep.mubr.f32.mxu0 %v2185
  %2336 = vmatmul.mubr.f32.gmra.mrb[0].mxu0 %v2128
  %v2337 = vpop.f32.mrb[0].mxu0
  %v2338 = vadd.f32 0.0, %v2337
  %v2339 = vpop.f32.mrb[0].mxu0
  %2340 = vmatprep.mubr.f32.mxu0 %v2188
  %2341 = vmatmul.mubr.f32.gmra.mrb[0].mxu0 %v2130
  %v2342 = vpop.f32.mrb[0].mxu0
  %v2343 = vadd.f32 0.0, %v2342
  %v2344 = vpop.f32.mrb[0].mxu0
  %2345 = vmatprep.mubr.f32.mxu0 %v2191
  %2346 = vmatmul.mubr.f32.gmra.mrb[0].mxu0 %v2132
  %v2347 = vpop.f32.mrb[0].mxu0
  %v2348 = vadd.f32 0.0, %v2347
  %v2349 = vpop.f32.mrb[0].mxu0
  %2350 = vmatprep.mubr.f32.mxu0 %v2194
  %2351 = vmatmul.mubr.f32.gmra.mrb[0].mxu0 %v2134
  %v2352 = vpop.f32.mrb[0].mxu0
  %v2353 = vadd.f32 0.0, %v2352
  %v2354 = vpop.f32.mrb[0].mxu0
  %2355 = vmatprep.mubr.f32.mxu0 %v2197
  %2356 = vmatmul.mubr.f32.gmra.mrb[0].mxu0 %v2136
  %v2357 = vpop.f32.mrb[0].mxu0
  %v2358 = vadd.f32 0.0, %v2357
  %v2359 = vpop.f32.mrb[0].mxu0
  %2360 = vmatprep.mubr.f32.mxu0 %v2200
  %2361 = vmatmul.mubr.f32.gmra.mrb[0].mxu0 %v2138
  %v2362 = vpop.f32.mrb[0].mxu0
  %v2363 = vadd.f32 0.0, %v2362
  %v2364 = vpop.f32.mrb[0].mxu0
  %2365 = vmatprep.mubr.f32.mxu0 %v2203
  %2366 = vmatmul.mubr.f32.gmra.mrb[0].mxu0 %v2140
  %v2367 = vpop.f32.mrb[0].mxu0
  %v2368 = vadd.f32 0.0, %v2367
  %v2369 = vpop.f32.mrb[0].mxu0
  %2370 = vmatprep.mubr.f32.mxu0 %v2206
  %2371 = vmatmul.mubr.f32.gmra.mrb[0].mxu0 %v2142
  %v2372 = vpop.f32.mrb[0].mxu0
  %v2373 = vadd.f32 0.0, %v2372
  %v2374 = vpop.f32.mrb[0].mxu0
  %2375 = vmatprep.mubr.f32.mxu0 %v2209
  %2376 = vmatmul.mubr.f32.gmra.mrb[0].mxu0 %v2144
  %v2377 = vpop.f32.mrb[0].mxu0
  %v2378 = vadd.f32 0.0, %v2377
  %v2379 = vpop.f32.mrb[0].mxu0
  %2380 = vmatprep.mubr.f32.mxu0 %v2212
  %2381 = vmatmul.mubr.f32.gmra.mrb[0].mxu0 %v2146
  %v2382 = vpop.f32.mrb[0].mxu0
  %v2383 = vadd.f32 0.0, %v2382
  %v2384 = vpop.f32.mrb[0].mxu0
  %2385 = vmatprep.mubr.f32.mxu0 %v2215
  %2386 = vmatmul.mubr.f32.gmra.mrb[0].mxu0 %v2148
  %v2387 = vpop.f32.mrb[0].mxu0
  %v2388 = vadd.f32 0.0, %v2387
  %v2389 = vpop.f32.mrb[0].mxu0
  %2390 = vmatprep.mubr.f32.mxu0 %v2218
  %2391 = vmatmul.mubr.f32.gmra.mrb[0].mxu0 %v2150
  %v2392 = vpop.f32.mrb[0].mxu0
  %v2393 = vadd.f32 0.0, %v2392
  %v2394 = vpop.f32.mrb[0].mxu0
  %2395 = vmatprep.mubr.f32.mxu0 %v2221
  %2396 = vmatmul.mubr.f32.gmra.mrb[0].mxu0 %v2152
  %v2397 = vpop.f32.mrb[0].mxu0
  %v2398 = vadd.f32 0.0, %v2397
  %v2399 = vpop.f32.mrb[0].mxu0
  %2400 = vmatprep.mubr.f32.mxu0 %v2224
  %2401 = vmatmul.mubr.f32.gmra.mrb[0].mxu0 %v2154
  %v2402 = vpop.f32.mrb[0].mxu0
  %v2403 = vadd.f32 0.0, %v2402
  %v2404 = vpop.f32.mrb[0].mxu0
  %2405 = vmatprep.mubr.f32.mxu0 %v2227
  %2406 = vmatmul.mubr.f32.gmra.mrb[0].mxu0 %v2156
  %v2407 = vpop.f32.mrb[0].mxu0
  %v2408 = vadd.f32 0.0, %v2407
  %v2409 = vpop.f32.mrb[0].mxu0
  %2410 = vmatprep.mubr.f32.mxu0 %v2230
  %2411 = vmatmul.mubr.f32.gmra.mrb[0].mxu0 %v2158
  %v2412 = vpop.f32.mrb[0].mxu0
  %v2413 = vadd.f32 0.0, %v2412
  %v2414 = vpop.f32.mrb[0].mxu0
  %2415 = vmatprep.mubr.f32.mxu0 %v2233
  %2416 = vmatmul.mubr.f32.gmra.mrb[0].mxu0 %v2160
  %v2417 = vpop.f32.mrb[0].mxu0
  %v2418 = vadd.f32 0.0, %v2417
  %v2419 = vpop.f32.mrb[0].mxu0
  %2420 = vmatprep.mubr.f32.mxu0 %v2236
  %2421 = vmatmul.mubr.f32.gmra.mrb[0].mxu0 %v2162
  %v2422 = vpop.f32.mrb[0].mxu0
  %v2423 = vadd.f32 0.0, %v2422
  %v2424 = vpop.f32.mrb[0].mxu0
  %2425 = vmatprep.mubr.f32.mxu0 %v2239
  %2426 = vmatmul.mubr.f32.gmra.mrb[0].mxu0 %v2164
  %v2427 = vpop.f32.mrb[0].mxu0
  %v2428 = vadd.f32 0.0, %v2427
  %v2429 = vpop.f32.mrb[0].mxu0
  %2430 = vdwg.mxu0
  %s2431 = scalar_lea.vmem %s2, 192
  %v2432 = vld [vmem:[%s2431] sm:$0xff]
  %v2433 = vld [vmem:[%s2431 + $0x8] sm:$0xff]
  %v2434 = vld [vmem:[%s2431 + $0x10] sm:$0xff]
  %v2435 = vld [vmem:[%s2431 + $0x18] sm:$0xff]
  %v2436 = vld [vmem:[%s2431 + $0x20] sm:$0xff]
  %v2437 = vld [vmem:[%s2431 + $0x28] sm:$0xff]
  %v2438 = vld [vmem:[%s2431 + $0x30] sm:$0xf]
  %v2439 = vld [vmem:[%s2431 + $0x38] sm:$0xf]
  %v2441 = vsel %vm414, %v2308, 0
  %v2444 = vsel %vm414, %v2313, 0
  %v2447 = vsel %vm414, %v2318, 0
  %v2450 = vsel %vm414, %v2323, 0
  %v2453 = vsel %vm414, %v2328, 0
  %v2456 = vsel %vm414, %v2333, 0
  %v2459 = vsel %vm414, %v2338, 0
  %v2462 = vsel %vm414, %v2343, 0
  %v2465 = vsel %vm414, %v2348, 0
  %v2468 = vsel %vm414, %v2353, 0
  %v2471 = vsel %vm414, %v2358, 0
  %v2474 = vsel %vm414, %v2363, 0
  %v2477 = vsel %vm414, %v2368, 0
  %v2480 = vsel %vm414, %v2373, 0
  %v2483 = vsel %vm414, %v2378, 0
  %v2486 = vsel %vm414, %v2383, 0
  %v2489 = vsel %vm414, %v2388, 0
  %v2492 = vsel %vm414, %v2393, 0
  %v2495 = vsel %vm414, %v2398, 0
  %v2498 = vsel %vm414, %v2403, 0
  %v2501 = vsel %vm414, %v2408, 0
  %v2504 = vsel %vm414, %v2413, 0
  %v2507 = vsel %vm414, %v2418, 0
  %v2510 = vsel %vm414, %v2423, 0
  %v2513 = vsel %vm414, %v2428, 0
  %v2516 = vsel %vm490, %v2438, 0
  %v2519 = vsel %vm490, %v2439, 0
  %2521 = vmatprep.subr.mxu0 %v2433
  %2522 = vmatpush1.msra.mxu0 %v2432
  %2523 = vmatprep.subr.mxu0 %v2435
  %2524 = vmatpush1.msra.mxu0 %v2434
  %2525 = vmatprep.subr.mxu0 %v2437
  %2526 = vmatpush1.msra.mxu0 %v2436
  %2527 = vmatprep.subr.mxu0 %v2519
  %2528 = vmatpush1.msra.mxu0 %v2516
  %2529 = vmatprep.subr.mxu0 0.0
  %2530 = vmatpush1.msra.mxu0 0.0
  %2531 = vmatprep.subr.mxu0 0.0
  %2532 = vmatpush1.msra.mxu0 0.0
  %2533 = vmatprep.subr.mxu0 0.0
  %2534 = vmatpush1.msra.mxu0 0.0
  %2535 = vmatprep.subr.mxu0 0.0
  %2536 = vmatpush1.msra.mxu0 0.0
  %2537 = vmatprep.subr.mxu0 0.0
  %2538 = vmatpush1.msra.mxu0 0.0
  %2539 = vmatprep.subr.mxu0 0.0
  %2540 = vmatpush1.msra.mxu0 0.0
  %2541 = vmatprep.subr.mxu0 0.0
  %2542 = vmatpush1.msra.mxu0 0.0
  %2543 = vmatprep.subr.mxu0 0.0
  %2544 = vmatpush1.msra.mxu0 0.0
  %2545 = vmatprep.subr.mxu0 0.0
  %2546 = vmatpush1.msra.mxu0 0.0
  %2547 = vmatprep.subr.mxu0 0.0
  %2548 = vmatpush1.msra.mxu0 0.0
  %2549 = vmatprep.subr.mxu0 0.0
  %2550 = vmatpush1.msra.mxu0 0.0
  %2551 = vmatprep.subr.mxu0 0.0
  %2552 = vmatpush1.msra.mxu0 0.0
  %2553 = vmatprep.subr.mxu0 0.0
  %2554 = vmatpush1.msra.mxu0 0.0
  %2555 = vmatprep.subr.mxu0 0.0
  %2556 = vmatpush1.msra.mxu0 0.0
  %2557 = vmatprep.subr.mxu0 0.0
  %2558 = vmatpush1.msra.mxu0 0.0
  %2559 = vmatprep.subr.mxu0 0.0
  %2560 = vmatpush1.msra.mxu0 0.0
  %2561 = vmatprep.subr.mxu0 0.0
  %2562 = vmatpush1.msra.mxu0 0.0
  %2563 = vmatprep.subr.mxu0 0.0
  %2564 = vmatpush1.msra.mxu0 0.0
  %2565 = vmatprep.subr.mxu0 0.0
  %2566 = vmatpush1.msra.mxu0 0.0
  %2567 = vmatprep.subr.mxu0 0.0
  %2568 = vmatpush1.msra.mxu0 0.0
  %2569 = vmatprep.subr.mxu0 0.0
  %2570 = vmatpush1.msra.mxu0 0.0
  %2571 = vmatprep.subr.mxu0 0.0
  %2572 = vmatpush1.msra.mxu0 0.0
  %2573 = vmatprep.subr.mxu0 0.0
  %2574 = vmatpush1.msra.mxu0 0.0
  %2575 = vmatprep.subr.mxu0 0.0
  %2576 = vmatpush1.msra.mxu0 0.0
  %2577 = vmatprep.subr.mxu0 0.0
  %2578 = vmatpush1.msra.mxu0 0.0
  %2579 = vmatprep.subr.mxu0 0.0
  %2580 = vmatpush1.msra.mxu0 0.0
  %2581 = vmatprep.subr.mxu0 0.0
  %2582 = vmatpush1.msra.mxu0 0.0
  %2583 = vmatprep.subr.mxu0 0.0
  %2584 = vmatpush1.msra.mxu0 0.0
  %2585 = vmatprep.mubr.f32.mxu0 0.0
  %2586 = vmatmul.mubr.f32.gmra.mrb[0].mxu0 %v2441
  %v2587 = vpop.f32.mrb[0].mxu0
  %v2588 = vadd.f32 0.0, %v2587
  %v2589 = vpop.f32.mrb[0].mxu0
  %v2590 = vadd.f32 0.0, %v2589
  %2591 = vmatprep.mubr.f32.mxu0 0.0
  %2592 = vmatmul.mubr.f32.gmra.mrb[0].mxu0 %v2444
  %v2593 = vpop.f32.mrb[0].mxu0
  %v2594 = vadd.f32 0.0, %v2593
  %v2595 = vpop.f32.mrb[0].mxu0
  %v2596 = vadd.f32 0.0, %v2595
  %2597 = vmatprep.mubr.f32.mxu0 0.0
  %2598 = vmatmul.mubr.f32.gmra.mrb[0].mxu0 %v2447
  %v2599 = vpop.f32.mrb[0].mxu0
  %v2600 = vadd.f32 0.0, %v2599
  %v2601 = vpop.f32.mrb[0].mxu0
  %v2602 = vadd.f32 0.0, %v2601
  %2603 = vmatprep.mubr.f32.mxu0 0.0
  %2604 = vmatmul.mubr.f32.gmra.mrb[0].mxu0 %v2450
  %v2605 = vpop.f32.mrb[0].mxu0
  %v2606 = vadd.f32 0.0, %v2605
  %v2607 = vpop.f32.mrb[0].mxu0
  %v2608 = vadd.f32 0.0, %v2607
  %2609 = vmatprep.mubr.f32.mxu0 0.0
  %2610 = vmatmul.mubr.f32.gmra.mrb[0].mxu0 %v2453
  %v2611 = vpop.f32.mrb[0].mxu0
  %v2612 = vadd.f32 0.0, %v2611
  %v2613 = vpop.f32.mrb[0].mxu0
  %v2614 = vadd.f32 0.0, %v2613
  %2615 = vmatprep.mubr.f32.mxu0 0.0
  %2616 = vmatmul.mubr.f32.gmra.mrb[0].mxu0 %v2456
  %v2617 = vpop.f32.mrb[0].mxu0
  %v2618 = vadd.f32 0.0, %v2617
  %v2619 = vpop.f32.mrb[0].mxu0
  %v2620 = vadd.f32 0.0, %v2619
  %2621 = vmatprep.mubr.f32.mxu0 0.0
  %2622 = vmatmul.mubr.f32.gmra.mrb[0].mxu0 %v2459
  %v2623 = vpop.f32.mrb[0].mxu0
  %v2624 = vadd.f32 0.0, %v2623
  %v2625 = vpop.f32.mrb[0].mxu0
  %v2626 = vadd.f32 0.0, %v2625
  %2627 = vmatprep.mubr.f32.mxu0 0.0
  %2628 = vmatmul.mubr.f32.gmra.mrb[0].mxu0 %v2462
  %v2629 = vpop.f32.mrb[0].mxu0
  %v2630 = vadd.f32 0.0, %v2629
  %v2631 = vpop.f32.mrb[0].mxu0
  %v2632 = vadd.f32 0.0, %v2631
  %2633 = vmatprep.mubr.f32.mxu0 0.0
  %2634 = vmatmul.mubr.f32.gmra.mrb[0].mxu0 %v2465
  %v2635 = vpop.f32.mrb[0].mxu0
  %v2636 = vadd.f32 0.0, %v2635
  %v2637 = vpop.f32.mrb[0].mxu0
  %v2638 = vadd.f32 0.0, %v2637
  %2639 = vmatprep.mubr.f32.mxu0 0.0
  %2640 = vmatmul.mubr.f32.gmra.mrb[0].mxu0 %v2468
  %v2641 = vpop.f32.mrb[0].mxu0
  %v2642 = vadd.f32 0.0, %v2641
  %v2643 = vpop.f32.mrb[0].mxu0
  %v2644 = vadd.f32 0.0, %v2643
  %2645 = vmatprep.mubr.f32.mxu0 0.0
  %2646 = vmatmul.mubr.f32.gmra.mrb[0].mxu0 %v2471
  %v2647 = vpop.f32.mrb[0].mxu0
  %v2648 = vadd.f32 0.0, %v2647
  %v2649 = vpop.f32.mrb[0].mxu0
  %v2650 = vadd.f32 0.0, %v2649
  %2651 = vmatprep.mubr.f32.mxu0 0.0
  %2652 = vmatmul.mubr.f32.gmra.mrb[0].mxu0 %v2474
  %v2653 = vpop.f32.mrb[0].mxu0
  %v2654 = vadd.f32 0.0, %v2653
  %v2655 = vpop.f32.mrb[0].mxu0
  %v2656 = vadd.f32 0.0, %v2655
  %2657 = vmatprep.mubr.f32.mxu0 0.0
  %2658 = vmatmul.mubr.f32.gmra.mrb[0].mxu0 %v2477
  %v2659 = vpop.f32.mrb[0].mxu0
  %v2660 = vadd.f32 0.0, %v2659
  %v2661 = vpop.f32.mrb[0].mxu0
  %v2662 = vadd.f32 0.0, %v2661
  %2663 = vmatprep.mubr.f32.mxu0 0.0
  %2664 = vmatmul.mubr.f32.gmra.mrb[0].mxu0 %v2480
  %v2665 = vpop.f32.mrb[0].mxu0
  %v2666 = vadd.f32 0.0, %v2665
  %v2667 = vpop.f32.mrb[0].mxu0
  %v2668 = vadd.f32 0.0, %v2667
  %2669 = vmatprep.mubr.f32.mxu0 0.0
  %2670 = vmatmul.mubr.f32.gmra.mrb[0].mxu0 %v2483
  %v2671 = vpop.f32.mrb[0].mxu0
  %v2672 = vadd.f32 0.0, %v2671
  %v2673 = vpop.f32.mrb[0].mxu0
  %v2674 = vadd.f32 0.0, %v2673
  %2675 = vmatprep.mubr.f32.mxu0 0.0
  %2676 = vmatmul.mubr.f32.gmra.mrb[0].mxu0 %v2486
  %v2677 = vpop.f32.mrb[0].mxu0
  %v2678 = vadd.f32 0.0, %v2677
  %v2679 = vpop.f32.mrb[0].mxu0
  %v2680 = vadd.f32 0.0, %v2679
  %2681 = vmatprep.mubr.f32.mxu0 0.0
  %2682 = vmatmul.mubr.f32.gmra.mrb[0].mxu0 %v2489
  %v2683 = vpop.f32.mrb[0].mxu0
  %v2684 = vadd.f32 0.0, %v2683
  %v2685 = vpop.f32.mrb[0].mxu0
  %v2686 = vadd.f32 0.0, %v2685
  %2687 = vmatprep.mubr.f32.mxu0 0.0
  %2688 = vmatmul.mubr.f32.gmra.mrb[0].mxu0 %v2492
  %v2689 = vpop.f32.mrb[0].mxu0
  %v2690 = vadd.f32 0.0, %v2689
  %v2691 = vpop.f32.mrb[0].mxu0
  %v2692 = vadd.f32 0.0, %v2691
  %2693 = vmatprep.mubr.f32.mxu0 0.0
  %2694 = vmatmul.mubr.f32.gmra.mrb[0].mxu0 %v2495
  %v2695 = vpop.f32.mrb[0].mxu0
  %v2696 = vadd.f32 0.0, %v2695
  %v2697 = vpop.f32.mrb[0].mxu0
  %v2698 = vadd.f32 0.0, %v2697
  %2699 = vmatprep.mubr.f32.mxu0 0.0
  %2700 = vmatmul.mubr.f32.gmra.mrb[0].mxu0 %v2498
  %v2701 = vpop.f32.mrb[0].mxu0
  %v2702 = vadd.f32 0.0, %v2701
  %v2703 = vpop.f32.mrb[0].mxu0
  %v2704 = vadd.f32 0.0, %v2703
  %2705 = vmatprep.mubr.f32.mxu0 0.0
  %2706 = vmatmul.mubr.f32.gmra.mrb[0].mxu0 %v2501
  %v2707 = vpop.f32.mrb[0].mxu0
  %v2708 = vadd.f32 0.0, %v2707
  %v2709 = vpop.f32.mrb[0].mxu0
  %v2710 = vadd.f32 0.0, %v2709
  %2711 = vmatprep.mubr.f32.mxu0 0.0
  %2712 = vmatmul.mubr.f32.gmra.mrb[0].mxu0 %v2504
  %v2713 = vpop.f32.mrb[0].mxu0
  %v2714 = vadd.f32 0.0, %v2713
  %v2715 = vpop.f32.mrb[0].mxu0
  %v2716 = vadd.f32 0.0, %v2715
  %2717 = vmatprep.mubr.f32.mxu0 0.0
  %2718 = vmatmul.mubr.f32.gmra.mrb[0].mxu0 %v2507
  %v2719 = vpop.f32.mrb[0].mxu0
  %v2720 = vadd.f32 0.0, %v2719
  %v2721 = vpop.f32.mrb[0].mxu0
  %v2722 = vadd.f32 0.0, %v2721
  %2723 = vmatprep.mubr.f32.mxu0 0.0
  %2724 = vmatmul.mubr.f32.gmra.mrb[0].mxu0 %v2510
  %v2725 = vpop.f32.mrb[0].mxu0
  %v2726 = vadd.f32 0.0, %v2725
  %v2727 = vpop.f32.mrb[0].mxu0
  %v2728 = vadd.f32 0.0, %v2727
  %2729 = vmatprep.mubr.f32.mxu0 0.0
  %2730 = vmatmul.mubr.f32.gmra.mrb[0].mxu0 %v2513
  %v2731 = vpop.f32.mrb[0].mxu0
  %v2732 = vadd.f32 0.0, %v2731
  %v2733 = vpop.f32.mrb[0].mxu0
  %v2734 = vadd.f32 0.0, %v2733
  %2735 = vdwg.mxu0
  %v2736 = vadd.f32 %v2065, %v2588
  %v2737 = vadd.f32 %v2066, %v2590
  %v2738 = vadd.f32 %v2067, %v2594
  %v2739 = vadd.f32 %v2068, %v2596
  %v2740 = vadd.f32 %v2069, %v2600
  %v2741 = vadd.f32 %v2070, %v2602
  %v2742 = vadd.f32 %v2071, %v2606
  %v2743 = vadd.f32 %v2072, %v2608
  %v2744 = vadd.f32 %v2073, %v2612
  %v2745 = vadd.f32 %v2074, %v2614
  %v2746 = vadd.f32 %v2075, %v2618
  %v2747 = vadd.f32 %v2076, %v2620
  %v2748 = vadd.f32 %v2077, %v2624
  %v2749 = vadd.f32 %v2078, %v2626
  %v2750 = vadd.f32 %v2079, %v2630
  %v2751 = vadd.f32 %v2080, %v2632
  %v2752 = vadd.f32 %v2081, %v2636
  %v2753 = vadd.f32 %v2082, %v2638
  %v2754 = vadd.f32 %v2083, %v2642
  %v2755 = vadd.f32 %v2084, %v2644
  %v2756 = vadd.f32 %v2085, %v2648
  %v2757 = vadd.f32 %v2086, %v2650
  %v2758 = vadd.f32 %v2087, %v2654
  %v2759 = vadd.f32 %v2088, %v2656
  %v2760 = vadd.f32 %v2089, %v2660
  %v2761 = vadd.f32 %v2090, %v2662
  %v2762 = vadd.f32 %v2091, %v2666
  %v2763 = vadd.f32 %v2092, %v2668
  %v2764 = vadd.f32 %v2093, %v2672
  %v2765 = vadd.f32 %v2094, %v2674
  %v2766 = vadd.f32 %v2095, %v2678
  %v2767 = vadd.f32 %v2096, %v2680
  %v2768 = vadd.f32 %v2097, %v2684
  %v2769 = vadd.f32 %v2098, %v2686
  %v2770 = vadd.f32 %v2099, %v2690
  %v2771 = vadd.f32 %v2100, %v2692
  %v2772 = vadd.f32 %v2101, %v2696
  %v2773 = vadd.f32 %v2102, %v2698
  %v2774 = vadd.f32 %v2103, %v2702
  %v2775 = vadd.f32 %v2104, %v2704
  %v2776 = vadd.f32 %v2105, %v2708
  %v2777 = vadd.f32 %v2106, %v2710
  %v2778 = vadd.f32 %v2107, %v2714
  %v2779 = vadd.f32 %v2108, %v2716
  %v2780 = vadd.f32 %v2109, %v2720
  %v2781 = vadd.f32 %v2110, %v2722
  %v2782 = vadd.f32 %v2111, %v2726
  %v2783 = vadd.f32 %v2112, %v2728
  %v2784 = vadd.f32 %v2113, %v2732
  %v2785 = vadd.f32 %v2114, %v2734
  %v2786 = vtanh.pop %v2736
  %v2787 = vtanh.pop %v2737
  %v2788 = vtanh.pop %v2738
  %v2789 = vtanh.pop %v2739
  %v2790 = vtanh.pop %v2740
  %v2791 = vtanh.pop %v2741
  %v2792 = vtanh.pop %v2742
  %v2793 = vtanh.pop %v2743
  %v2794 = vtanh.pop %v2744
  %v2795 = vtanh.pop %v2745
  %v2796 = vtanh.pop %v2746
  %v2797 = vtanh.pop %v2747
  %v2798 = vtanh.pop %v2748
  %v2799 = vtanh.pop %v2749
  %v2800 = vtanh.pop %v2750
  %v2801 = vtanh.pop %v2751
  %v2802 = vtanh.pop %v2752
  %v2803 = vtanh.pop %v2753
  %v2804 = vtanh.pop %v2754
  %v2805 = vtanh.pop %v2755
  %v2806 = vtanh.pop %v2756
  %v2807 = vtanh.pop %v2757
  %v2808 = vtanh.pop %v2758
  %v2809 = vtanh.pop %v2759
  %v2810 = vtanh.pop %v2760
  %v2811 = vtanh.pop %v2761
  %v2812 = vtanh.pop %v2762
  %v2813 = vtanh.pop %v2763
  %v2814 = vtanh.pop %v2764
  %v2815 = vtanh.pop %v2765
  %v2816 = vtanh.pop %v2766
  %v2817 = vtanh.pop %v2767
  %v2818 = vtanh.pop %v2768
  %v2819 = vtanh.pop %v2769
  %v2820 = vtanh.pop %v2770
  %v2821 = vtanh.pop %v2771
  %v2822 = vtanh.pop %v2772
  %v2823 = vtanh.pop %v2773
  %v2824 = vtanh.pop %v2774
  %v2825 = vtanh.pop %v2775
  %v2826 = vtanh.pop %v2776
  %v2827 = vtanh.pop %v2777
  %v2828 = vtanh.pop %v2778
  %v2829 = vtanh.pop %v2779
  %v2830 = vtanh.pop %v2780
  %v2831 = vtanh.pop %v2781
  %v2832 = vtanh.pop %v2782
  %v2833 = vtanh.pop %v2783
  %v2834 = vtanh.pop %v2784
  %v2835 = vtanh.pop %v2785
  %v2836 = vld [vmem:[%s4] sm:$0xff]
  %v2837 = vld [vmem:[%s4 + $0x8] sm:$0xff]
  %v2838 = vld [vmem:[%s4 + $0x10] sm:$0xff]
  %v2839 = vld [vmem:[%s4 + $0x18] sm:$0xff]
  %v2840 = vld [vmem:[%s4 + $0x20] sm:$0xff]
  %v2841 = vld [vmem:[%s4 + $0x28] sm:$0xff]
  %v2842 = vld [vmem:[%s4 + $0x30] sm:$0xff]
  %v2843 = vld [vmem:[%s4 + $0x38] sm:$0xff]
  %v2844 = vld [vmem:[%s4 + $0x40] sm:$0xff]
  %v2845 = vld [vmem:[%s4 + $0x48] sm:$0xff]
  %v2846 = vld [vmem:[%s4 + $0x50] sm:$0xff]
  %v2847 = vld [vmem:[%s4 + $0x58] sm:$0xff]
  %v2848 = vld [vmem:[%s4 + $0x60] sm:$0xff]
  %v2849 = vld [vmem:[%s4 + $0x68] sm:$0xff]
  %v2850 = vld [vmem:[%s4 + $0x70] sm:$0xff]
  %v2851 = vld [vmem:[%s4 + $0x78] sm:$0xff]
  %v2852 = vld [vmem:[%s4 + $0x80] sm:$0xff]
  %v2853 = vld [vmem:[%s4 + $0x88] sm:$0xff]
  %v2854 = vld [vmem:[%s4 + $0x90] sm:$0xff]
  %v2855 = vld [vmem:[%s4 + $0x98] sm:$0xff]
  %v2856 = vld [vmem:[%s4 + $0xa0] sm:$0xff]
  %v2857 = vld [vmem:[%s4 + $0xa8] sm:$0xff]
  %v2858 = vld [vmem:[%s4 + $0xb0] sm:$0xff]
  %v2859 = vld [vmem:[%s4 + $0xb8] sm:$0xff]
  %vm2860 = vcmask 588800
  %v2862 = vsel %vm2860, %v2837, 0
  %v2865 = vsel %vm2860, %v2839, 0
  %v2868 = vsel %vm2860, %v2841, 0
  %v2871 = vsel %vm2860, %v2843, 0
  %v2874 = vsel %vm2860, %v2845, 0
  %v2877 = vsel %vm2860, %v2847, 0
  %v2880 = vsel %vm2860, %v2849, 0
  %v2883 = vsel %vm2860, %v2851, 0
  %v2886 = vsel %vm2860, %v2853, 0
  %v2889 = vsel %vm2860, %v2855, 0
  %v2892 = vsel %vm2860, %v2857, 0
  %v2895 = vsel %vm2860, %v2859, 0
  %2897 = vmatprep.subr.mxu0 %v2787
  %2898 = vmatpush1.msra.mxu0 %v2786
  %2899 = vmatprep.subr.mxu0 %v2789
  %2900 = vmatpush1.msra.mxu0 %v2788
  %2901 = vmatprep.subr.mxu0 %v2791
  %2902 = vmatpush1.msra.mxu0 %v2790
  %2903 = vmatprep.subr.mxu0 %v2793
  %2904 = vmatpush1.msra.mxu0 %v2792
  %2905 = vmatprep.subr.mxu0 %v2795
  %2906 = vmatpush1.msra.mxu0 %v2794
  %2907 = vmatprep.subr.mxu0 %v2797
  %2908 = vmatpush1.msra.mxu0 %v2796
  %2909 = vmatprep.subr.mxu0 %v2799
  %2910 = vmatpush1.msra.mxu0 %v2798
  %2911 = vmatprep.subr.mxu0 %v2801
  %2912 = vmatpush1.msra.mxu0 %v2800
  %2913 = vmatprep.subr.mxu0 %v2803
  %2914 = vmatpush1.msra.mxu0 %v2802
  %2915 = vmatprep.subr.mxu0 %v2805
  %2916 = vmatpush1.msra.mxu0 %v2804
  %2917 = vmatprep.subr.mxu0 %v2807
  %2918 = vmatpush1.msra.mxu0 %v2806
  %2919 = vmatprep.subr.mxu0 %v2809
  %2920 = vmatpush1.msra.mxu0 %v2808
  %2921 = vmatprep.subr.mxu0 %v2811
  %2922 = vmatpush1.msra.mxu0 %v2810
  %2923 = vmatprep.subr.mxu0 %v2813
  %2924 = vmatpush1.msra.mxu0 %v2812
  %2925 = vmatprep.subr.mxu0 %v2815
  %2926 = vmatpush1.msra.mxu0 %v2814
  %2927 = vmatprep.subr.mxu0 %v2817
  %2928 = vmatpush1.msra.mxu0 %v2816
  %2929 = vmatprep.subr.mxu0 %v2819
  %2930 = vmatpush1.msra.mxu0 %v2818
  %2931 = vmatprep.subr.mxu0 %v2821
  %2932 = vmatpush1.msra.mxu0 %v2820
  %2933 = vmatprep.subr.mxu0 %v2823
  %2934 = vmatpush1.msra.mxu0 %v2822
  %2935 = vmatprep.subr.mxu0 %v2825
  %2936 = vmatpush1.msra.mxu0 %v2824
  %2937 = vmatprep.subr.mxu0 %v2827
  %2938 = vmatpush1.msra.mxu0 %v2826
  %2939 = vmatprep.subr.mxu0 %v2829
  %2940 = vmatpush1.msra.mxu0 %v2828
  %2941 = vmatprep.subr.mxu0 %v2831
  %2942 = vmatpush1.msra.mxu0 %v2830
  %2943 = vmatprep.subr.mxu0 %v2833
  %2944 = vmatpush1.msra.mxu0 %v2832
  %2945 = vmatprep.subr.mxu0 %v2835
  %2946 = vmatpush1.msra.mxu0 %v2834
  %2947 = vmatprep.subr.mxu0 0.0
  %2948 = vmatpush1.msra.mxu0 0.0
  %2949 = vmatprep.subr.mxu0 0.0
  %2950 = vmatpush1.msra.mxu0 0.0
  %2951 = vmatprep.subr.mxu0 0.0
  %2952 = vmatpush1.msra.mxu0 0.0
  %2953 = vmatprep.subr.mxu0 0.0
  %2954 = vmatpush1.msra.mxu0 0.0
  %2955 = vmatprep.subr.mxu0 0.0
  %2956 = vmatpush1.msra.mxu0 0.0
  %2957 = vmatprep.subr.mxu0 0.0
  %2958 = vmatpush1.msra.mxu0 0.0
  %2959 = vmatprep.subr.mxu0 0.0
  %2960 = vmatpush1.msra.mxu0 0.0
  %2961 = vmatprep.mubr.f32.mxu0 %v2862
  %2962 = vmatmul.mubr.f32.gmra.mrb[0].mxu0 %v2836
  %v2963 = vpop.f32.mrb[0].mxu0
  %v2964 = vadd.f32 0.0, %v2963
  %v2965 = vpop.f32.mrb[0].mxu0
  %v2966 = vadd.f32 0.0, %v2965
  %2967 = vmatprep.mubr.f32.mxu0 %v2865
  %2968 = vmatmul.mubr.f32.gmra.mrb[0].mxu0 %v2838
  %v2969 = vpop.f32.mrb[0].mxu0
  %v2970 = vadd.f32 0.0, %v2969
  %v2971 = vpop.f32.mrb[0].mxu0
  %v2972 = vadd.f32 0.0, %v2971
  %2973 = vmatprep.mubr.f32.mxu0 %v2868
  %2974 = vmatmul.mubr.f32.gmra.mrb[0].mxu0 %v2840
  %v2975 = vpop.f32.mrb[0].mxu0
  %v2976 = vadd.f32 0.0, %v2975
  %v2977 = vpop.f32.mrb[0].mxu0
  %v2978 = vadd.f32 0.0, %v2977
  %2979 = vmatprep.mubr.f32.mxu0 %v2871
  %2980 = vmatmul.mubr.f32.gmra.mrb[0].mxu0 %v2842
  %v2981 = vpop.f32.mrb[0].mxu0
  %v2982 = vadd.f32 0.0, %v2981
  %v2983 = vpop.f32.mrb[0].mxu0
  %v2984 = vadd.f32 0.0, %v2983
  %2985 = vmatprep.mubr.f32.mxu0 %v2874
  %2986 = vmatmul.mubr.f32.gmra.mrb[0].mxu0 %v2844
  %v2987 = vpop.f32.mrb[0].mxu0
  %v2988 = vadd.f32 0.0, %v2987
  %v2989 = vpop.f32.mrb[0].mxu0
  %v2990 = vadd.f32 0.0, %v2989
  %2991 = vmatprep.mubr.f32.mxu0 %v2877
  %2992 = vmatmul.mubr.f32.gmra.mrb[0].mxu0 %v2846
  %v2993 = vpop.f32.mrb[0].mxu0
  %v2994 = vadd.f32 0.0, %v2993
  %v2995 = vpop.f32.mrb[0].mxu0
  %v2996 = vadd.f32 0.0, %v2995
  %2997 = vmatprep.mubr.f32.mxu0 %v2880
  %2998 = vmatmul.mubr.f32.gmra.mrb[0].mxu0 %v2848
  %v2999 = vpop.f32.mrb[0].mxu0
  %v3000 = vadd.f32 0.0, %v2999
  %v3001 = vpop.f32.mrb[0].mxu0
  %v3002 = vadd.f32 0.0, %v3001
  %3003 = vmatprep.mubr.f32.mxu0 %v2883
  %3004 = vmatmul.mubr.f32.gmra.mrb[0].mxu0 %v2850
  %v3005 = vpop.f32.mrb[0].mxu0
  %v3006 = vadd.f32 0.0, %v3005
  %v3007 = vpop.f32.mrb[0].mxu0
  %v3008 = vadd.f32 0.0, %v3007
  %3009 = vmatprep.mubr.f32.mxu0 %v2886
  %3010 = vmatmul.mubr.f32.gmra.mrb[0].mxu0 %v2852
  %v3011 = vpop.f32.mrb[0].mxu0
  %v3012 = vadd.f32 0.0, %v3011
  %v3013 = vpop.f32.mrb[0].mxu0
  %v3014 = vadd.f32 0.0, %v3013
  %3015 = vmatprep.mubr.f32.mxu0 %v2889
  %3016 = vmatmul.mubr.f32.gmra.mrb[0].mxu0 %v2854
  %v3017 = vpop.f32.mrb[0].mxu0
  %v3018 = vadd.f32 0.0, %v3017
  %v3019 = vpop.f32.mrb[0].mxu0
  %v3020 = vadd.f32 0.0, %v3019
  %3021 = vmatprep.mubr.f32.mxu0 %v2892
  %3022 = vmatmul.mubr.f32.gmra.mrb[0].mxu0 %v2856
  %v3023 = vpop.f32.mrb[0].mxu0
  %v3024 = vadd.f32 0.0, %v3023
  %v3025 = vpop.f32.mrb[0].mxu0
  %v3026 = vadd.f32 0.0, %v3025
  %3027 = vmatprep.mubr.f32.mxu0 %v2895
  %3028 = vmatmul.mubr.f32.gmra.mrb[0].mxu0 %v2858
  %v3029 = vpop.f32.mrb[0].mxu0
  %v3030 = vadd.f32 0.0, %v3029
  %v3031 = vpop.f32.mrb[0].mxu0
  %v3032 = vadd.f32 0.0, %v3031
  %3033 = vdwg.mxu0
  %v3034 = vld [vmem:[%s5] sm:$0xff]
  %v3035 = vld [vmem:[%s5 + $0x8] sm:$0xff]
  %v3036 = vld [vmem:[%s5 + $0x10] sm:$0xff]
  %v3037 = vld [vmem:[%s5 + $0x18] sm:$0xff]
  %v3038 = vld [vmem:[%s5 + $0x20] sm:$0xff]
  %v3039 = vld [vmem:[%s5 + $0x28] sm:$0xff]
  %v3040 = vld [vmem:[%s5 + $0x30] sm:$0xff]
  %v3041 = vld [vmem:[%s5 + $0x38] sm:$0xff]
  %v3042 = vld [vmem:[%s5 + $0x40] sm:$0xff]
  %v3043 = vld [vmem:[%s5 + $0x48] sm:$0xff]
  %v3044 = vld [vmem:[%s5 + $0x50] sm:$0xff]
  %v3045 = vld [vmem:[%s5 + $0x58] sm:$0xff]
  %v3046 = vld [vmem:[%s5 + $0x60] sm:$0xff]
  %v3047 = vld [vmem:[%s5 + $0x68] sm:$0xff]
  %v3048 = vld [vmem:[%s5 + $0x70] sm:$0xff]
  %v3049 = vld [vmem:[%s5 + $0x78] sm:$0xff]
  %v3050 = vld [vmem:[%s5 + $0x80] sm:$0xff]
  %v3051 = vld [vmem:[%s5 + $0x88] sm:$0xff]
  %v3052 = vld [vmem:[%s5 + $0x90] sm:$0x3f]
  %vm3053 = vcmask 179200
  %v3055 = vsel %vm3053, %v2966, 0
  %v3058 = vsel %vm3053, %v2972, 0
  %v3061 = vsel %vm3053, %v2978, 0
  %v3064 = vsel %vm3053, %v2984, 0
  %v3067 = vsel %vm3053, %v2990, 0
  %v3070 = vsel %vm3053, %v2996, 0
  %v3073 = vsel %vm3053, %v3002, 0
  %v3076 = vsel %vm3053, %v3008, 0
  %v3079 = vsel %vm3053, %v3014, 0
  %v3082 = vsel %vm3053, %v3020, 0
  %v3085 = vsel %vm3053, %v3026, 0
  %v3088 = vsel %vm3053, %v3032, 0
  %vm3090 = vcmask 1045504
  %v3092 = vsel %vm3090, %v3052, 0
  %3094 = vmatprep.subr.mxu0 0.0
  %3095 = vmatpush1.msra.mxu0 %v3034
  %3096 = vmatprep.subr.mxu0 0.0
  %3097 = vmatpush1.msra.mxu0 %v3035
  %3098 = vmatprep.subr.mxu0 0.0
  %3099 = vmatpush1.msra.mxu0 %v3036
  %3100 = vmatprep.subr.mxu0 0.0
  %3101 = vmatpush1.msra.mxu0 %v3037
  %3102 = vmatprep.subr.mxu0 0.0
  %3103 = vmatpush1.msra.mxu0 %v3038
  %3104 = vmatprep.subr.mxu0 0.0
  %3105 = vmatpush1.msra.mxu0 %v3039
  %3106 = vmatprep.subr.mxu0 0.0
  %3107 = vmatpush1.msra.mxu0 %v3040
  %3108 = vmatprep.subr.mxu0 0.0
  %3109 = vmatpush1.msra.mxu0 %v3041
  %3110 = vmatprep.subr.mxu0 0.0
  %3111 = vmatpush1.msra.mxu0 %v3042
  %3112 = vmatprep.subr.mxu0 0.0
  %3113 = vmatpush1.msra.mxu0 %v3043
  %3114 = vmatprep.subr.mxu0 0.0
  %3115 = vmatpush1.msra.mxu0 %v3044
  %3116 = vmatprep.subr.mxu0 0.0
  %3117 = vmatpush1.msra.mxu0 %v3045
  %3118 = vmatprep.subr.mxu0 0.0
  %3119 = vmatpush1.msra.mxu0 %v3046
  %3120 = vmatprep.subr.mxu0 0.0
  %3121 = vmatpush1.msra.mxu0 %v3047
  %3122 = vmatprep.subr.mxu0 0.0
  %3123 = vmatpush1.msra.mxu0 %v3048
  %3124 = vmatprep.subr.mxu0 0.0
  %3125 = vmatpush1.msra.mxu0 %v3049
  %3126 = vmatprep.subr.mxu0 0.0
  %3127 = vmatpush1.msra.mxu0 %v3050
  %3128 = vmatprep.subr.mxu0 0.0
  %3129 = vmatpush1.msra.mxu0 %v3051
  %3130 = vmatprep.subr.mxu0 0.0
  %3131 = vmatpush1.msra.mxu0 %v3092
  %3132 = vmatprep.subr.mxu0 0.0
  %3133 = vmatpush1.msra.mxu0 0.0
  %3134 = vmatprep.subr.mxu0 0.0
  %3135 = vmatpush1.msra.mxu0 0.0
  %3136 = vmatprep.subr.mxu0 0.0
  %3137 = vmatpush1.msra.mxu0 0.0
  %3138 = vmatprep.subr.mxu0 0.0
  %3139 = vmatpush1.msra.mxu0 0.0
  %3140 = vmatprep.subr.mxu0 0.0
  %3141 = vmatpush1.msra.mxu0 0.0
  %3142 = vmatprep.subr.mxu0 0.0
  %3143 = vmatpush1.msra.mxu0 0.0
  %3144 = vmatprep.subr.mxu0 0.0
  %3145 = vmatpush1.msra.mxu0 0.0
  %3146 = vmatprep.subr.mxu0 0.0
  %3147 = vmatpush1.msra.mxu0 0.0
  %3148 = vmatprep.subr.mxu0 0.0
  %3149 = vmatpush1.msra.mxu0 0.0
  %3150 = vmatprep.subr.mxu0 0.0
  %3151 = vmatpush1.msra.mxu0 0.0
  %3152 = vmatprep.subr.mxu0 0.0
  %3153 = vmatpush1.msra.mxu0 0.0
  %3154 = vmatprep.subr.mxu0 0.0
  %3155 = vmatpush1.msra.mxu0 0.0
  %3156 = vmatprep.subr.mxu0 0.0
  %3157 = vmatpush1.msra.mxu0 0.0
  %3158 = vmatprep.mubr.f32.mxu0 %v3055
  %3159 = vmatmul.mubr.f32.gmra.mrb[0].mxu0 %v2964
  %v3160 = vpop.f32.mrb[0].mxu0
  %v3161 = vadd.f32 0.0, %v3160
  %v3162 = vpop.f32.mrb[0].mxu0
  %3163 = vmatprep.mubr.f32.mxu0 %v3058
  %3164 = vmatmul.mubr.f32.gmra.mrb[0].mxu0 %v2970
  %v3165 = vpop.f32.mrb[0].mxu0
  %v3166 = vadd.f32 0.0, %v3165
  %v3167 = vpop.f32.mrb[0].mxu0
  %3168 = vmatprep.mubr.f32.mxu0 %v3061
  %3169 = vmatmul.mubr.f32.gmra.mrb[0].mxu0 %v2976
  %v3170 = vpop.f32.mrb[0].mxu0
  %v3171 = vadd.f32 0.0, %v3170
  %v3172 = vpop.f32.mrb[0].mxu0
  %3173 = vmatprep.mubr.f32.mxu0 %v3064
  %3174 = vmatmul.mubr.f32.gmra.mrb[0].mxu0 %v2982
  %v3175 = vpop.f32.mrb[0].mxu0
  %v3176 = vadd.f32 0.0, %v3175
  %v3177 = vpop.f32.mrb[0].mxu0
  %3178 = vmatprep.mubr.f32.mxu0 %v3067
  %3179 = vmatmul.mubr.f32.gmra.mrb[0].mxu0 %v2988
  %v3180 = vpop.f32.mrb[0].mxu0
  %v3181 = vadd.f32 0.0, %v3180
  %v3182 = vpop.f32.mrb[0].mxu0
  %3183 = vmatprep.mubr.f32.mxu0 %v3070
  %3184 = vmatmul.mubr.f32.gmra.mrb[0].mxu0 %v2994
  %v3185 = vpop.f32.mrb[0].mxu0
  %v3186 = vadd.f32 0.0, %v3185
  %v3187 = vpop.f32.mrb[0].mxu0
  %3188 = vmatprep.mubr.f32.mxu0 %v3073
  %3189 = vmatmul.mubr.f32.gmra.mrb[0].mxu0 %v3000
  %v3190 = vpop.f32.mrb[0].mxu0
  %v3191 = vadd.f32 0.0, %v3190
  %v3192 = vpop.f32.mrb[0].mxu0
  %3193 = vmatprep.mubr.f32.mxu0 %v3076
  %3194 = vmatmul.mubr.f32.gmra.mrb[0].mxu0 %v3006
  %v3195 = vpop.f32.mrb[0].mxu0
  %v3196 = vadd.f32 0.0, %v3195
  %v3197 = vpop.f32.mrb[0].mxu0
  %3198 = vmatprep.mubr.f32.mxu0 %v3079
  %3199 = vmatmul.mubr.f32.gmra.mrb[0].mxu0 %v3012
  %v3200 = vpop.f32.mrb[0].mxu0
  %v3201 = vadd.f32 0.0, %v3200
  %v3202 = vpop.f32.mrb[0].mxu0
  %3203 = vmatprep.mubr.f32.mxu0 %v3082
  %3204 = vmatmul.mubr.f32.gmra.mrb[0].mxu0 %v3018
  %v3205 = vpop.f32.mrb[0].mxu0
  %v3206 = vadd.f32 0.0, %v3205
  %v3207 = vpop.f32.mrb[0].mxu0
  %3208 = vmatprep.mubr.f32.mxu0 %v3085
  %3209 = vmatmul.mubr.f32.gmra.mrb[0].mxu0 %v3024
  %v3210 = vpop.f32.mrb[0].mxu0
  %v3211 = vadd.f32 0.0, %v3210
  %v3212 = vpop.f32.mrb[0].mxu0
  %3213 = vmatprep.mubr.f32.mxu0 %v3088
  %3214 = vmatmul.mubr.f32.gmra.mrb[0].mxu0 %v3030
  %v3215 = vpop.f32.mrb[0].mxu0
  %v3216 = vadd.f32 0.0, %v3215
  %v3217 = vpop.f32.mrb[0].mxu0
  %3218 = vdwg.mxu0
  %v3219 = vld [vmem:[%s8] sm:$0x3]
  %v3220 = vld [vmem:[%s6] sm:$0xff]
  %v3221 = vld [vmem:[%s6 + $0x8] sm:$0xff]
  %v3222 = vld [vmem:[%s6 + $0x10] sm:$0xff]
  %v3223 = vld [vmem:[%s6 + $0x18] sm:$0xff]
  %v3224 = vld [vmem:[%s6 + $0x20] sm:$0xff]
  %v3225 = vld [vmem:[%s6 + $0x28] sm:$0xff]
  %v3226 = vld [vmem:[%s6 + $0x30] sm:$0xff]
  %v3227 = vld [vmem:[%s6 + $0x38] sm:$0xff]
  %v3228 = vld [vmem:[%s6 + $0x40] sm:$0xff]
  %v3230 = vsel %vm140, %v3220, 0
  %v3233 = vsel %vm140, %v3221, 0
  %v3236 = vsel %vm140, %v3222, 0
  %v3239 = vsel %vm140, %v3223, 0
  %v3242 = vsel %vm140, %v3224, 0
  %v3245 = vsel %vm140, %v3225, 0
  %v3248 = vsel %vm140, %v3226, 0
  %v3251 = vsel %vm140, %v3227, 0
  %v3254 = vsel %vm140, %v3228, 0
  %3256 = vmatprep.subr.mxu0 0.0
  %3257 = vmatpush1.msra.mxu0 %v3161
  %3258 = vmatprep.subr.mxu0 0.0
  %3259 = vmatpush1.msra.mxu0 %v3166
  %3260 = vmatprep.subr.mxu0 0.0
  %3261 = vmatpush1.msra.mxu0 %v3171
  %3262 = vmatprep.subr.mxu0 0.0
  %3263 = vmatpush1.msra.mxu0 %v3176
  %3264 = vmatprep.subr.mxu0 0.0
  %3265 = vmatpush1.msra.mxu0 %v3181
  %3266 = vmatprep.subr.mxu0 0.0
  %3267 = vmatpush1.msra.mxu0 %v3186
  %3268 = vmatprep.subr.mxu0 0.0
  %3269 = vmatpush1.msra.mxu0 %v3191
  %3270 = vmatprep.subr.mxu0 0.0
  %3271 = vmatpush1.msra.mxu0 %v3196
  %3272 = vmatprep.subr.mxu0 0.0
  %3273 = vmatpush1.msra.mxu0 %v3201
  %3274 = vmatprep.subr.mxu0 0.0
  %3275 = vmatpush1.msra.mxu0 %v3206
  %3276 = vmatprep.subr.mxu0 0.0
  %3277 = vmatpush1.msra.mxu0 %v3211
  %3278 = vmatprep.subr.mxu0 0.0
  %3279 = vmatpush1.msra.mxu0 %v3216
  %3280 = vmatprep.subr.mxu0 0.0
  %3281 = vmatpush1.msra.mxu0 0.0
  %3282 = vmatprep.subr.mxu0 0.0
  %3283 = vmatpush1.msra.mxu0 0.0
  %3284 = vmatprep.subr.mxu0 0.0
  %3285 = vmatpush1.msra.mxu0 0.0
  %3286 = vmatprep.subr.mxu0 0.0
  %3287 = vmatpush1.msra.mxu0 0.0
  %3288 = vmatprep.subr.mxu0 0.0
  %3289 = vmatpush1.msra.mxu0 0.0
  %3290 = vmatprep.subr.mxu0 0.0
  %3291 = vmatpush1.msra.mxu0 0.0
  %3292 = vmatprep.subr.mxu0 0.0
  %3293 = vmatpush1.msra.mxu0 0.0
  %3294 = vmatprep.subr.mxu0 0.0
  %3295 = vmatpush1.msra.mxu0 0.0
  %3296 = vmatprep.subr.mxu0 0.0
  %3297 = vmatpush1.msra.mxu0 0.0
  %3298 = vmatprep.subr.mxu0 0.0
  %3299 = vmatpush1.msra.mxu0 0.0
  %3300 = vmatprep.subr.mxu0 0.0
  %3301 = vmatpush1.msra.mxu0 0.0
  %3302 = vmatprep.subr.mxu0 0.0
  %3303 = vmatpush1.msra.mxu0 0.0
  %3304 = vmatprep.subr.mxu0 0.0
  %3305 = vmatpush1.msra.mxu0 0.0
  %3306 = vmatprep.subr.mxu0 0.0
  %3307 = vmatpush1.msra.mxu0 0.0
  %3308 = vmatprep.subr.mxu0 0.0
  %3309 = vmatpush1.msra.mxu0 0.0
  %3310 = vmatprep.subr.mxu0 0.0
  %3311 = vmatpush1.msra.mxu0 0.0
  %3312 = vmatprep.subr.mxu0 0.0
  %3313 = vmatpush1.msra.mxu0 0.0
  %3314 = vmatprep.subr.mxu0 0.0
  %3315 = vmatpush1.msra.mxu0 0.0
  %3316 = vmatprep.subr.mxu0 0.0
  %3317 = vmatpush1.msra.mxu0 0.0
  %3318 = vmatprep.subr.mxu0 0.0
  %3319 = vmatpush1.msra.mxu0 0.0
  %3320 = vmatprep.mubr.f32.mxu0 0.0
  %3321 = vmatmul.mubr.f32.gmra.mrb[0].mxu0 %v3230
  %v3322 = vpop.f32.mrb[0].mxu0
  %v3323 = vadd.f32 0.0, %v3322
  %v3324 = vpop.f32.mrb[0].mxu0
  %3325 = vmatprep.mubr.f32.mxu0 0.0
  %3326 = vmatmul.mubr.f32.gmra.mrb[0].mxu0 %v3233
  %v3327 = vpop.f32.mrb[0].mxu0
  %v3328 = vadd.f32 0.0, %v3327
  %v3329 = vpop.f32.mrb[0].mxu0
  %3330 = vmatprep.mubr.f32.mxu0 0.0
  %3331 = vmatmul.mubr.f32.gmra.mrb[0].mxu0 %v3236
  %v3332 = vpop.f32.mrb[0].mxu0
  %v3333 = vadd.f32 0.0, %v3332
  %v3334 = vpop.f32.mrb[0].mxu0
  %3335 = vmatprep.mubr.f32.mxu0 0.0
  %3336 = vmatmul.mubr.f32.gmra.mrb[0].mxu0 %v3239
  %v3337 = vpop.f32.mrb[0].mxu0
  %v3338 = vadd.f32 0.0, %v3337
  %v3339 = vpop.f32.mrb[0].mxu0
  %3340 = vmatprep.mubr.f32.mxu0 0.0
  %3341 = vmatmul.mubr.f32.gmra.mrb[0].mxu0 %v3242
  %v3342 = vpop.f32.mrb[0].mxu0
  %v3343 = vadd.f32 0.0, %v3342
  %v3344 = vpop.f32.mrb[0].mxu0
  %3345 = vmatprep.mubr.f32.mxu0 0.0
  %3346 = vmatmul.mubr.f32.gmra.mrb[0].mxu0 %v3245
  %v3347 = vpop.f32.mrb[0].mxu0
  %v3348 = vadd.f32 0.0, %v3347
  %v3349 = vpop.f32.mrb[0].mxu0
  %3350 = vmatprep.mubr.f32.mxu0 0.0
  %3351 = vmatmul.mubr.f32.gmra.mrb[0].mxu0 %v3248
  %v3352 = vpop.f32.mrb[0].mxu0
  %v3353 = vadd.f32 0.0, %v3352
  %v3354 = vpop.f32.mrb[0].mxu0
  %3355 = vmatprep.mubr.f32.mxu0 0.0
  %3356 = vmatmul.mubr.f32.gmra.mrb[0].mxu0 %v3251
  %v3357 = vpop.f32.mrb[0].mxu0
  %v3358 = vadd.f32 0.0, %v3357
  %v3359 = vpop.f32.mrb[0].mxu0
  %3360 = vmatprep.mubr.f32.mxu0 0.0
  %3361 = vmatmul.mubr.f32.gmra.mrb[0].mxu0 %v3254
  %v3362 = vpop.f32.mrb[0].mxu0
  %v3363 = vadd.f32 0.0, %v3362
  %v3364 = vpop.f32.mrb[0].mxu0
  %3365 = vdwg.mxu0
  %v3366 = vld [vmem:[%s7] sm:$0xff]
  %v3367 = vld [vmem:[%s7 + $0x8] sm:$0xff]
  %v3368 = vld [vmem:[%s7 + $0x10] sm:$0xff]
  %v3369 = vld [vmem:[%s7 + $0x18] sm:$0xff]
  %v3370 = vld [vmem:[%s7 + $0x20] sm:$0xff]
  %v3371 = vld [vmem:[%s7 + $0x28] sm:$0xff]
  %v3372 = vld [vmem:[%s7 + $0x30] sm:$0xff]
  %v3373 = vld [vmem:[%s7 + $0x38] sm:$0xff]
  %v3374 = vld [vmem:[%s7 + $0x40] sm:$0xff]
  %v3375 = vld [vmem:[%s7 + $0x48] sm:$0xff]
  %v3376 = vld [vmem:[%s7 + $0x50] sm:$0xff]
  %v3377 = vld [vmem:[%s7 + $0x58] sm:$0xff]
  %v3378 = vld [vmem:[%s7 + $0x60] sm:$0xff]
  %v3379 = vld [vmem:[%s7 + $0x68] sm:$0xff]
  %v3380 = vld [vmem:[%s7 + $0x70] sm:$0xff]
  %v3381 = vld [vmem:[%s7 + $0x78] sm:$0xff]
  %v3382 = vld [vmem:[%s7 + $0x80] sm:$0xff]
  %v3383 = vld [vmem:[%s7 + $0x88] sm:$0xff]
  %v3385 = vsel %vm2860, %v3323, 0
  %v3388 = vsel %vm2860, %v3328, 0
  %v3391 = vsel %vm2860, %v3333, 0
  %v3394 = vsel %vm2860, %v3338, 0
  %v3397 = vsel %vm2860, %v3343, 0
  %v3400 = vsel %vm2860, %v3348, 0
  %v3403 = vsel %vm2860, %v3353, 0
  %v3406 = vsel %vm2860, %v3358, 0
  %v3409 = vsel %vm2860, %v3363, 0
  %3411 = vmatprep.subr.mxu0 %v3367
  %3412 = vmatpush1.msra.mxu0 %v3366
  %3413 = vmatprep.subr.mxu0 %v3369
  %3414 = vmatpush1.msra.mxu0 %v3368
  %3415 = vmatprep.subr.mxu0 %v3371
  %3416 = vmatpush1.msra.mxu0 %v3370
  %3417 = vmatprep.subr.mxu0 %v3373
  %3418 = vmatpush1.msra.mxu0 %v3372
  %3419 = vmatprep.subr.mxu0 %v3375
  %3420 = vmatpush1.msra.mxu0 %v3374
  %3421 = vmatprep.subr.mxu0 %v3377
  %3422 = vmatpush1.msra.mxu0 %v3376
  %3423 = vmatprep.subr.mxu0 %v3379
  %3424 = vmatpush1.msra.mxu0 %v3378
  %3425 = vmatprep.subr.mxu0 %v3381
  %3426 = vmatpush1.msra.mxu0 %v3380
  %3427 = vmatprep.subr.mxu0 %v3383
  %3428 = vmatpush1.msra.mxu0 %v3382
  %3429 = vmatprep.subr.mxu0 0.0
  %3430 = vmatpush1.msra.mxu0 0.0
  %3431 = vmatprep.subr.mxu0 0.0
  %3432 = vmatpush1.msra.mxu0 0.0
  %3433 = vmatprep.subr.mxu0 0.0
  %3434 = vmatpush1.msra.mxu0 0.0
  %3435 = vmatprep.subr.mxu0 0.0
  %3436 = vmatpush1.msra.mxu0 0.0
  %3437 = vmatprep.subr.mxu0 0.0
  %3438 = vmatpush1.msra.mxu0 0.0
  %3439 = vmatprep.subr.mxu0 0.0
  %3440 = vmatpush1.msra.mxu0 0.0
  %3441 = vmatprep.subr.mxu0 0.0
  %3442 = vmatpush1.msra.mxu0 0.0
  %3443 = vmatprep.subr.mxu0 0.0
  %3444 = vmatpush1.msra.mxu0 0.0
  %3445 = vmatprep.subr.mxu0 0.0
  %3446 = vmatpush1.msra.mxu0 0.0
  %3447 = vmatprep.subr.mxu0 0.0
  %3448 = vmatpush1.msra.mxu0 0.0
  %3449 = vmatprep.subr.mxu0 0.0
  %3450 = vmatpush1.msra.mxu0 0.0
  %3451 = vmatprep.subr.mxu0 0.0
  %3452 = vmatpush1.msra.mxu0 0.0
  %3453 = vmatprep.subr.mxu0 0.0
  %3454 = vmatpush1.msra.mxu0 0.0
  %3455 = vmatprep.subr.mxu0 0.0
  %3456 = vmatpush1.msra.mxu0 0.0
  %3457 = vmatprep.subr.mxu0 0.0
  %3458 = vmatpush1.msra.mxu0 0.0
  %3459 = vmatprep.subr.mxu0 0.0
  %3460 = vmatpush1.msra.mxu0 0.0
  %3461 = vmatprep.subr.mxu0 0.0
  %3462 = vmatpush1.msra.mxu0 0.0
  %3463 = vmatprep.subr.mxu0 0.0
  %3464 = vmatpush1.msra.mxu0 0.0
  %3465 = vmatprep.subr.mxu0 0.0
  %3466 = vmatpush1.msra.mxu0 0.0
  %3467 = vmatprep.subr.mxu0 0.0
  %3468 = vmatpush1.msra.mxu0 0.0
  %3469 = vmatprep.subr.mxu0 0.0
  %3470 = vmatpush1.msra.mxu0 0.0
  %3471 = vmatprep.subr.mxu0 0.0
  %3472 = vmatpush1.msra.mxu0 0.0
  %3473 = vmatprep.subr.mxu0 0.0
  %3474 = vmatpush1.msra.mxu0 0.0
  %3475 = vmatprep.mubr.f32.mxu0 0.0
  %3476 = vmatmul.mubr.f32.gmra.mrb[0].mxu0 %v3385
  %v3477 = vpop.f32.mrb[0].mxu0
  %v3478 = vadd.f32 0.0, %v3477
  %v3479 = vpop.f32.mrb[0].mxu0
  %v3480 = vadd.f32 0.0, %v3479
  %3481 = vmatprep.mubr.f32.mxu0 0.0
  %3482 = vmatmul.mubr.f32.gmra.mrb[0].mxu0 %v3388
  %v3483 = vpop.f32.mrb[0].mxu0
  %v3484 = vadd.f32 0.0, %v3483
  %v3485 = vpop.f32.mrb[0].mxu0
  %v3486 = vadd.f32 0.0, %v3485
  %3487 = vmatprep.mubr.f32.mxu0 0.0
  %3488 = vmatmul.mubr.f32.gmra.mrb[0].mxu0 %v3391
  %v3489 = vpop.f32.mrb[0].mxu0
  %v3490 = vadd.f32 0.0, %v3489
  %v3491 = vpop.f32.mrb[0].mxu0
  %v3492 = vadd.f32 0.0, %v3491
  %3493 = vmatprep.mubr.f32.mxu0 0.0
  %3494 = vmatmul.mubr.f32.gmra.mrb[0].mxu0 %v3394
  %v3495 = vpop.f32.mrb[0].mxu0
  %v3496 = vadd.f32 0.0, %v3495
  %v3497 = vpop.f32.mrb[0].mxu0
  %v3498 = vadd.f32 0.0, %v3497
  %3499 = vmatprep.mubr.f32.mxu0 0.0
  %3500 = vmatmul.mubr.f32.gmra.mrb[0].mxu0 %v3397
  %v3501 = vpop.f32.mrb[0].mxu0
  %v3502 = vadd.f32 0.0, %v3501
  %v3503 = vpop.f32.mrb[0].mxu0
  %v3504 = vadd.f32 0.0, %v3503
  %3505 = vmatprep.mubr.f32.mxu0 0.0
  %3506 = vmatmul.mubr.f32.gmra.mrb[0].mxu0 %v3400
  %v3507 = vpop.f32.mrb[0].mxu0
  %v3508 = vadd.f32 0.0, %v3507
  %v3509 = vpop.f32.mrb[0].mxu0
  %v3510 = vadd.f32 0.0, %v3509
  %3511 = vmatprep.mubr.f32.mxu0 0.0
  %3512 = vmatmul.mubr.f32.gmra.mrb[0].mxu0 %v3403
  %v3513 = vpop.f32.mrb[0].mxu0
  %v3514 = vadd.f32 0.0, %v3513
  %v3515 = vpop.f32.mrb[0].mxu0
  %v3516 = vadd.f32 0.0, %v3515
  %3517 = vmatprep.mubr.f32.mxu0 0.0
  %3518 = vmatmul.mubr.f32.gmra.mrb[0].mxu0 %v3406
  %v3519 = vpop.f32.mrb[0].mxu0
  %v3520 = vadd.f32 0.0, %v3519
  %v3521 = vpop.f32.mrb[0].mxu0
  %v3522 = vadd.f32 0.0, %v3521
  %3523 = vmatprep.mubr.f32.mxu0 0.0
  %3524 = vmatmul.mubr.f32.gmra.mrb[0].mxu0 %v3409
  %v3525 = vpop.f32.mrb[0].mxu0
  %v3526 = vadd.f32 0.0, %v3525
  %v3527 = vpop.f32.mrb[0].mxu0
  %v3528 = vadd.f32 0.0, %v3527
  %3529 = vdwg.mxu0
  %v3531 = vlaneseq
  %v3532 = vshrl.u32 %v3531, 7
  %v3533 = vsub.s32 0, %v3532
  %v3534 = vrot.slane %v3219, %v3533
  %v3535 = vlaneseq
  %v3536 = vshrl.u32 %v3535, 7
  %v3537 = vsub.s32 1, %v3536
  %v3538 = vrot.slane %v3219, %v3537
  %v3541 = vadd.f32 %v3534, %v3478
  %v3542 = vadd.f32 %v3538, %v3480
  %v3543 = vadd.f32 %v3534, %v3484
  %v3544 = vadd.f32 %v3538, %v3486
  %v3545 = vadd.f32 %v3534, %v3490
  %v3546 = vadd.f32 %v3538, %v3492
  %v3547 = vadd.f32 %v3534, %v3496
  %v3548 = vadd.f32 %v3538, %v3498
  %v3549 = vadd.f32 %v3534, %v3502
  %v3550 = vadd.f32 %v3538, %v3504
  %v3551 = vadd.f32 %v3534, %v3508
  %v3552 = vadd.f32 %v3538, %v3510
  %v3553 = vadd.f32 %v3534, %v3514
  %v3554 = vadd.f32 %v3538, %v3516
  %v3555 = vadd.f32 %v3534, %v3520
  %v3556 = vadd.f32 %v3538, %v3522
  %v3557 = vadd.f32 %v3534, %v3526
  %v3558 = vadd.f32 %v3538, %v3528
  %s3559 = scalar_lea.vmem %s6, 72
  %v3560 = vld [vmem:[%s3559] sm:$0xff]
  %v3561 = vld [vmem:[%s3559 + $0x8] sm:$0xff]
  %v3562 = vld [vmem:[%s3559 + $0x10] sm:$0xff]
  %v3563 = vld [vmem:[%s3559 + $0x18] sm:$0xff]
  %v3564 = vld [vmem:[%s3559 + $0x20] sm:$0xff]
  %v3565 = vld [vmem:[%s3559 + $0x28] sm:$0xff]
  %v3566 = vld [vmem:[%s3559 + $0x30] sm:$0xff]
  %v3567 = vld [vmem:[%s3559 + $0x38] sm:$0xff]
  %v3568 = vld [vmem:[%s3559 + $0x40] sm:$0xff]
  %v3570 = vsel %vm140, %v3560, 0
  %v3573 = vsel %vm140, %v3561, 0
  %v3576 = vsel %vm140, %v3562, 0
  %v3579 = vsel %vm140, %v3563, 0
  %v3582 = vsel %vm140, %v3564, 0
  %v3585 = vsel %vm140, %v3565, 0
  %v3588 = vsel %vm140, %v3566, 0
  %v3591 = vsel %vm140, %v3567, 0
  %v3594 = vsel %vm140, %v3568, 0
  %3596 = vmatprep.subr.mxu0 0.0
  %3597 = vmatpush1.msra.mxu0 %v3161
  %3598 = vmatprep.subr.mxu0 0.0
  %3599 = vmatpush1.msra.mxu0 %v3166
  %3600 = vmatprep.subr.mxu0 0.0
  %3601 = vmatpush1.msra.mxu0 %v3171
  %3602 = vmatprep.subr.mxu0 0.0
  %3603 = vmatpush1.msra.mxu0 %v3176
  %3604 = vmatprep.subr.mxu0 0.0
  %3605 = vmatpush1.msra.mxu0 %v3181
  %3606 = vmatprep.subr.mxu0 0.0
  %3607 = vmatpush1.msra.mxu0 %v3186
  %3608 = vmatprep.subr.mxu0 0.0
  %3609 = vmatpush1.msra.mxu0 %v3191
  %3610 = vmatprep.subr.mxu0 0.0
  %3611 = vmatpush1.msra.mxu0 %v3196
  %3612 = vmatprep.subr.mxu0 0.0
  %3613 = vmatpush1.msra.mxu0 %v3201
  %3614 = vmatprep.subr.mxu0 0.0
  %3615 = vmatpush1.msra.mxu0 %v3206
  %3616 = vmatprep.subr.mxu0 0.0
  %3617 = vmatpush1.msra.mxu0 %v3211
  %3618 = vmatprep.subr.mxu0 0.0
  %3619 = vmatpush1.msra.mxu0 %v3216
  %3620 = vmatprep.subr.mxu0 0.0
  %3621 = vmatpush1.msra.mxu0 0.0
  %3622 = vmatprep.subr.mxu0 0.0
  %3623 = vmatpush1.msra.mxu0 0.0
  %3624 = vmatprep.subr.mxu0 0.0
  %3625 = vmatpush1.msra.mxu0 0.0
  %3626 = vmatprep.subr.mxu0 0.0
  %3627 = vmatpush1.msra.mxu0 0.0
  %3628 = vmatprep.subr.mxu0 0.0
  %3629 = vmatpush1.msra.mxu0 0.0
  %3630 = vmatprep.subr.mxu0 0.0
  %3631 = vmatpush1.msra.mxu0 0.0
  %3632 = vmatprep.subr.mxu0 0.0
  %3633 = vmatpush1.msra.mxu0 0.0
  %3634 = vmatprep.subr.mxu0 0.0
  %3635 = vmatpush1.msra.mxu0 0.0
  %3636 = vmatprep.subr.mxu0 0.0
  %3637 = vmatpush1.msra.mxu0 0.0
  %3638 = vmatprep.subr.mxu0 0.0
  %3639 = vmatpush1.msra.mxu0 0.0
  %3640 = vmatprep.subr.mxu0 0.0
  %3641 = vmatpush1.msra.mxu0 0.0
  %3642 = vmatprep.subr.mxu0 0.0
  %3643 = vmatpush1.msra.mxu0 0.0
  %3644 = vmatprep.subr.mxu0 0.0
  %3645 = vmatpush1.msra.mxu0 0.0
  %3646 = vmatprep.subr.mxu0 0.0
  %3647 = vmatpush1.msra.mxu0 0.0
  %3648 = vmatprep.subr.mxu0 0.0
  %3649 = vmatpush1.msra.mxu0 0.0
  %3650 = vmatprep.subr.mxu0 0.0
  %3651 = vmatpush1.msra.mxu0 0.0
  %3652 = vmatprep.subr.mxu0 0.0
  %3653 = vmatpush1.msra.mxu0 0.0
  %3654 = vmatprep.subr.mxu0 0.0
  %3655 = vmatpush1.msra.mxu0 0.0
  %3656 = vmatprep.subr.mxu0 0.0
  %3657 = vmatpush1.msra.mxu0 0.0
  %3658 = vmatprep.subr.mxu0 0.0
  %3659 = vmatpush1.msra.mxu0 0.0
  %3660 = vmatprep.mubr.f32.mxu0 0.0
  %3661 = vmatmul.mubr.f32.gmra.mrb[0].mxu0 %v3570
  %v3662 = vpop.f32.mrb[0].mxu0
  %v3663 = vadd.f32 0.0, %v3662
  %v3664 = vpop.f32.mrb[0].mxu0
  %3665 = vmatprep.mubr.f32.mxu0 0.0
  %3666 = vmatmul.mubr.f32.gmra.mrb[0].mxu0 %v3573
  %v3667 = vpop.f32.mrb[0].mxu0
  %v3668 = vadd.f32 0.0, %v3667
  %v3669 = vpop.f32.mrb[0].mxu0
  %3670 = vmatprep.mubr.f32.mxu0 0.0
  %3671 = vmatmul.mubr.f32.gmra.mrb[0].mxu0 %v3576
  %v3672 = vpop.f32.mrb[0].mxu0
  %v3673 = vadd.f32 0.0, %v3672
  %v3674 = vpop.f32.mrb[0].mxu0
  %3675 = vmatprep.mubr.f32.mxu0 0.0
  %3676 = vmatmul.mubr.f32.gmra.mrb[0].mxu0 %v3579
  %v3677 = vpop.f32.mrb[0].mxu0
  %v3678 = vadd.f32 0.0, %v3677
  %v3679 = vpop.f32.mrb[0].mxu0
  %3680 = vmatprep.mubr.f32.mxu0 0.0
  %3681 = vmatmul.mubr.f32.gmra.mrb[0].mxu0 %v3582
  %v3682 = vpop.f32.mrb[0].mxu0
  %v3683 = vadd.f32 0.0, %v3682
  %v3684 = vpop.f32.mrb[0].mxu0
  %3685 = vmatprep.mubr.f32.mxu0 0.0
  %3686 = vmatmul.mubr.f32.gmra.mrb[0].mxu0 %v3585
  %v3687 = vpop.f32.mrb[0].mxu0
  %v3688 = vadd.f32 0.0, %v3687
  %v3689 = vpop.f32.mrb[0].mxu0
  %3690 = vmatprep.mubr.f32.mxu0 0.0
  %3691 = vmatmul.mubr.f32.gmra.mrb[0].mxu0 %v3588
  %v3692 = vpop.f32.mrb[0].mxu0
  %v3693 = vadd.f32 0.0, %v3692
  %v3694 = vpop.f32.mrb[0].mxu0
  %3695 = vmatprep.mubr.f32.mxu0 0.0
  %3696 = vmatmul.mubr.f32.gmra.mrb[0].mxu0 %v3591
  %v3697 = vpop.f32.mrb[0].mxu0
  %v3698 = vadd.f32 0.0, %v3697
  %v3699 = vpop.f32.mrb[0].mxu0
  %3700 = vmatprep.mubr.f32.mxu0 0.0
  %3701 = vmatmul.mubr.f32.gmra.mrb[0].mxu0 %v3594
  %v3702 = vpop.f32.mrb[0].mxu0
  %v3703 = vadd.f32 0.0, %v3702
  %v3704 = vpop.f32.mrb[0].mxu0
  %3705 = vdwg.mxu0
  %s3706 = scalar_lea.vmem %s7, 144
  %v3707 = vld [vmem:[%s3706] sm:$0xff]
  %v3708 = vld [vmem:[%s3706 + $0x8] sm:$0xff]
  %v3709 = vld [vmem:[%s3706 + $0x10] sm:$0xff]
  %v3710 = vld [vmem:[%s3706 + $0x18] sm:$0xff]
  %v3711 = vld [vmem:[%s3706 + $0x20] sm:$0xff]
  %v3712 = vld [vmem:[%s3706 + $0x28] sm:$0xff]
  %v3713 = vld [vmem:[%s3706 + $0x30] sm:$0xff]
  %v3714 = vld [vmem:[%s3706 + $0x38] sm:$0xff]
  %v3715 = vld [vmem:[%s3706 + $0x40] sm:$0xff]
  %v3716 = vld [vmem:[%s3706 + $0x48] sm:$0xff]
  %v3717 = vld [vmem:[%s3706 + $0x50] sm:$0xff]
  %v3718 = vld [vmem:[%s3706 + $0x58] sm:$0xff]
  %v3719 = vld [vmem:[%s3706 + $0x60] sm:$0xff]
  %v3720 = vld [vmem:[%s3706 + $0x68] sm:$0xff]
  %v3721 = vld [vmem:[%s3706 + $0x70] sm:$0xff]
  %v3722 = vld [vmem:[%s3706 + $0x78] sm:$0xff]
  %v3723 = vld [vmem:[%s3706 + $0x80] sm:$0xff]
  %v3724 = vld [vmem:[%s3706 + $0x88] sm:$0xff]
  %v3726 = vsel %vm2860, %v3663, 0
  %v3729 = vsel %vm2860, %v3668, 0
  %v3732 = vsel %vm2860, %v3673, 0
  %v3735 = vsel %vm2860, %v3678, 0
  %v3738 = vsel %vm2860, %v3683, 0
  %v3741 = vsel %vm2860, %v3688, 0
  %v3744 = vsel %vm2860, %v3693, 0
  %v3747 = vsel %vm2860, %v3698, 0
  %v3750 = vsel %vm2860, %v3703, 0
  %3752 = vmatprep.subr.mxu0 %v3708
  %3753 = vmatpush1.msra.mxu0 %v3707
  %3754 = vmatprep.subr.mxu0 %v3710
  %3755 = vmatpush1.msra.mxu0 %v3709
  %3756 = vmatprep.subr.mxu0 %v3712
  %3757 = vmatpush1.msra.mxu0 %v3711
  %3758 = vmatprep.subr.mxu0 %v3714
  %3759 = vmatpush1.msra.mxu0 %v3713
  %3760 = vmatprep.subr.mxu0 %v3716
  %3761 = vmatpush1.msra.mxu0 %v3715
  %3762 = vmatprep.subr.mxu0 %v3718
  %3763 = vmatpush1.msra.mxu0 %v3717
  %3764 = vmatprep.subr.mxu0 %v3720
  %3765 = vmatpush1.msra.mxu0 %v3719
  %3766 = vmatprep.subr.mxu0 %v3722
  %3767 = vmatpush1.msra.mxu0 %v3721
  %3768 = vmatprep.subr.mxu0 %v3724
  %3769 = vmatpush1.msra.mxu0 %v3723
  %3770 = vmatprep.subr.mxu0 0.0
  %3771 = vmatpush1.msra.mxu0 0.0
  %3772 = vmatprep.subr.mxu0 0.0
  %3773 = vmatpush1.msra.mxu0 0.0
  %3774 = vmatprep.subr.mxu0 0.0
  %3775 = vmatpush1.msra.mxu0 0.0
  %3776 = vmatprep.subr.mxu0 0.0
  %3777 = vmatpush1.msra.mxu0 0.0
  %3778 = vmatprep.subr.mxu0 0.0
  %3779 = vmatpush1.msra.mxu0 0.0
  %3780 = vmatprep.subr.mxu0 0.0
  %3781 = vmatpush1.msra.mxu0 0.0
  %3782 = vmatprep.subr.mxu0 0.0
  %3783 = vmatpush1.msra.mxu0 0.0
  %3784 = vmatprep.subr.mxu0 0.0
  %3785 = vmatpush1.msra.mxu0 0.0
  %3786 = vmatprep.subr.mxu0 0.0
  %3787 = vmatpush1.msra.mxu0 0.0
  %3788 = vmatprep.subr.mxu0 0.0
  %3789 = vmatpush1.msra.mxu0 0.0
  %3790 = vmatprep.subr.mxu0 0.0
  %3791 = vmatpush1.msra.mxu0 0.0
  %3792 = vmatprep.subr.mxu0 0.0
  %3793 = vmatpush1.msra.mxu0 0.0
  %3794 = vmatprep.subr.mxu0 0.0
  %3795 = vmatpush1.msra.mxu0 0.0
  %3796 = vmatprep.subr.mxu0 0.0
  %3797 = vmatpush1.msra.mxu0 0.0
  %3798 = vmatprep.subr.mxu0 0.0
  %3799 = vmatpush1.msra.mxu0 0.0
  %3800 = vmatprep.subr.mxu0 0.0
  %3801 = vmatpush1.msra.mxu0 0.0
  %3802 = vmatprep.subr.mxu0 0.0
  %3803 = vmatpush1.msra.mxu0 0.0
  %3804 = vmatprep.subr.mxu0 0.0
  %3805 = vmatpush1.msra.mxu0 0.0
  %3806 = vmatprep.subr.mxu0 0.0
  %3807 = vmatpush1.msra.mxu0 0.0
  %3808 = vmatprep.subr.mxu0 0.0
  %3809 = vmatpush1.msra.mxu0 0.0
  %3810 = vmatprep.subr.mxu0 0.0
  %3811 = vmatpush1.msra.mxu0 0.0
  %3812 = vmatprep.subr.mxu0 0.0
  %3813 = vmatpush1.msra.mxu0 0.0
  %3814 = vmatprep.subr.mxu0 0.0
  %3815 = vmatpush1.msra.mxu0 0.0
  %3816 = vmatprep.mubr.f32.mxu0 0.0
  %3817 = vmatmul.mubr.f32.gmra.mrb[0].mxu0 %v3726
  %v3818 = vpop.f32.mrb[0].mxu0
  %v3819 = vadd.f32 0.0, %v3818
  %v3820 = vpop.f32.mrb[0].mxu0
  %v3821 = vadd.f32 0.0, %v3820
  %3822 = vmatprep.mubr.f32.mxu0 0.0
  %3823 = vmatmul.mubr.f32.gmra.mrb[0].mxu0 %v3729
  %v3824 = vpop.f32.mrb[0].mxu0
  %v3825 = vadd.f32 0.0, %v3824
  %v3826 = vpop.f32.mrb[0].mxu0
  %v3827 = vadd.f32 0.0, %v3826
  %3828 = vmatprep.mubr.f32.mxu0 0.0
  %3829 = vmatmul.mubr.f32.gmra.mrb[0].mxu0 %v3732
  %v3830 = vpop.f32.mrb[0].mxu0
  %v3831 = vadd.f32 0.0, %v3830
  %v3832 = vpop.f32.mrb[0].mxu0
  %v3833 = vadd.f32 0.0, %v3832
  %3834 = vmatprep.mubr.f32.mxu0 0.0
  %3835 = vmatmul.mubr.f32.gmra.mrb[0].mxu0 %v3735
  %v3836 = vpop.f32.mrb[0].mxu0
  %v3837 = vadd.f32 0.0, %v3836
  %v3838 = vpop.f32.mrb[0].mxu0
  %v3839 = vadd.f32 0.0, %v3838
  %3840 = vmatprep.mubr.f32.mxu0 0.0
  %3841 = vmatmul.mubr.f32.gmra.mrb[0].mxu0 %v3738
  %v3842 = vpop.f32.mrb[0].mxu0
  %v3843 = vadd.f32 0.0, %v3842
  %v3844 = vpop.f32.mrb[0].mxu0
  %v3845 = vadd.f32 0.0, %v3844
  %3846 = vmatprep.mubr.f32.mxu0 0.0
  %3847 = vmatmul.mubr.f32.gmra.mrb[0].mxu0 %v3741
  %v3848 = vpop.f32.mrb[0].mxu0
  %v3849 = vadd.f32 0.0, %v3848
  %v3850 = vpop.f32.mrb[0].mxu0
  %v3851 = vadd.f32 0.0, %v3850
  %3852 = vmatprep.mubr.f32.mxu0 0.0
  %3853 = vmatmul.mubr.f32.gmra.mrb[0].mxu0 %v3744
  %v3854 = vpop.f32.mrb[0].mxu0
  %v3855 = vadd.f32 0.0, %v3854
  %v3856 = vpop.f32.mrb[0].mxu0
  %v3857 = vadd.f32 0.0, %v3856
  %3858 = vmatprep.mubr.f32.mxu0 0.0
  %3859 = vmatmul.mubr.f32.gmra.mrb[0].mxu0 %v3747
  %v3860 = vpop.f32.mrb[0].mxu0
  %v3861 = vadd.f32 0.0, %v3860
  %v3862 = vpop.f32.mrb[0].mxu0
  %v3863 = vadd.f32 0.0, %v3862
  %3864 = vmatprep.mubr.f32.mxu0 0.0
  %3865 = vmatmul.mubr.f32.gmra.mrb[0].mxu0 %v3750
  %v3866 = vpop.f32.mrb[0].mxu0
  %v3867 = vadd.f32 0.0, %v3866
  %v3868 = vpop.f32.mrb[0].mxu0
  %v3869 = vadd.f32 0.0, %v3868
  %3870 = vdwg.mxu0
  %v3871 = vadd.f32 %v3541, %v3819
  %v3872 = vadd.f32 %v3542, %v3821
  %v3873 = vadd.f32 %v3543, %v3825
  %v3874 = vadd.f32 %v3544, %v3827
  %v3875 = vadd.f32 %v3545, %v3831
  %v3876 = vadd.f32 %v3546, %v3833
  %v3877 = vadd.f32 %v3547, %v3837
  %v3878 = vadd.f32 %v3548, %v3839
  %v3879 = vadd.f32 %v3549, %v3843
  %v3880 = vadd.f32 %v3550, %v3845
  %v3881 = vadd.f32 %v3551, %v3849
  %v3882 = vadd.f32 %v3552, %v3851
  %v3883 = vadd.f32 %v3553, %v3855
  %v3884 = vadd.f32 %v3554, %v3857
  %v3885 = vadd.f32 %v3555, %v3861
  %v3886 = vadd.f32 %v3556, %v3863
  %v3887 = vadd.f32 %v3557, %v3867
  %v3888 = vadd.f32 %v3558, %v3869
  %s3889 = scalar_lea.vmem %s6, 144
  %v3890 = vld [vmem:[%s3889] sm:$0xff]
  %v3891 = vld [vmem:[%s3889 + $0x8] sm:$0xff]
  %v3892 = vld [vmem:[%s3889 + $0x10] sm:$0xff]
  %v3893 = vld [vmem:[%s3889 + $0x18] sm:$0xff]
  %v3894 = vld [vmem:[%s3889 + $0x20] sm:$0xff]
  %v3895 = vld [vmem:[%s3889 + $0x28] sm:$0xff]
  %v3896 = vld [vmem:[%s3889 + $0x30] sm:$0xff]
  %v3897 = vld [vmem:[%s3889 + $0x38] sm:$0xff]
  %v3898 = vld [vmem:[%s3889 + $0x40] sm:$0xff]
  %v3900 = vsel %vm140, %v3890, 0
  %v3903 = vsel %vm140, %v3891, 0
  %v3906 = vsel %vm140, %v3892, 0
  %v3909 = vsel %vm140, %v3893, 0
  %v3912 = vsel %vm140, %v3894, 0
  %v3915 = vsel %vm140, %v3895, 0
  %v3918 = vsel %vm140, %v3896, 0
  %v3921 = vsel %vm140, %v3897, 0
  %v3924 = vsel %vm140, %v3898, 0
  %3926 = vmatprep.subr.mxu0 0.0
  %3927 = vmatpush1.msra.mxu0 %v3161
  %3928 = vmatprep.subr.mxu0 0.0
  %3929 = vmatpush1.msra.mxu0 %v3166
  %3930 = vmatprep.subr.mxu0 0.0
  %3931 = vmatpush1.msra.mxu0 %v3171
  %3932 = vmatprep.subr.mxu0 0.0
  %3933 = vmatpush1.msra.mxu0 %v3176
  %3934 = vmatprep.subr.mxu0 0.0
  %3935 = vmatpush1.msra.mxu0 %v3181
  %3936 = vmatprep.subr.mxu0 0.0
  %3937 = vmatpush1.msra.mxu0 %v3186
  %3938 = vmatprep.subr.mxu0 0.0
  %3939 = vmatpush1.msra.mxu0 %v3191
  %3940 = vmatprep.subr.mxu0 0.0
  %3941 = vmatpush1.msra.mxu0 %v3196
  %3942 = vmatprep.subr.mxu0 0.0
  %3943 = vmatpush1.msra.mxu0 %v3201
  %3944 = vmatprep.subr.mxu0 0.0
  %3945 = vmatpush1.msra.mxu0 %v3206
  %3946 = vmatprep.subr.mxu0 0.0
  %3947 = vmatpush1.msra.mxu0 %v3211
  %3948 = vmatprep.subr.mxu0 0.0
  %3949 = vmatpush1.msra.mxu0 %v3216
  %3950 = vmatprep.subr.mxu0 0.0
  %3951 = vmatpush1.msra.mxu0 0.0
  %3952 = vmatprep.subr.mxu0 0.0
  %3953 = vmatpush1.msra.mxu0 0.0
  %3954 = vmatprep.subr.mxu0 0.0
  %3955 = vmatpush1.msra.mxu0 0.0
  %3956 = vmatprep.subr.mxu0 0.0
  %3957 = vmatpush1.msra.mxu0 0.0
  %3958 = vmatprep.subr.mxu0 0.0
  %3959 = vmatpush1.msra.mxu0 0.0
  %3960 = vmatprep.subr.mxu0 0.0
  %3961 = vmatpush1.msra.mxu0 0.0
  %3962 = vmatprep.subr.mxu0 0.0
  %3963 = vmatpush1.msra.mxu0 0.0
  %3964 = vmatprep.subr.mxu0 0.0
  %3965 = vmatpush1.msra.mxu0 0.0
  %3966 = vmatprep.subr.mxu0 0.0
  %3967 = vmatpush1.msra.mxu0 0.0
  %3968 = vmatprep.subr.mxu0 0.0
  %3969 = vmatpush1.msra.mxu0 0.0
  %3970 = vmatprep.subr.mxu0 0.0
  %3971 = vmatpush1.msra.mxu0 0.0
  %3972 = vmatprep.subr.mxu0 0.0
  %3973 = vmatpush1.msra.mxu0 0.0
  %3974 = vmatprep.subr.mxu0 0.0
  %3975 = vmatpush1.msra.mxu0 0.0
  %3976 = vmatprep.subr.mxu0 0.0
  %3977 = vmatpush1.msra.mxu0 0.0
  %3978 = vmatprep.subr.mxu0 0.0
  %3979 = vmatpush1.msra.mxu0 0.0
  %3980 = vmatprep.subr.mxu0 0.0
  %3981 = vmatpush1.msra.mxu0 0.0
  %3982 = vmatprep.subr.mxu0 0.0
  %3983 = vmatpush1.msra.mxu0 0.0
  %3984 = vmatprep.subr.mxu0 0.0
  %3985 = vmatpush1.msra.mxu0 0.0
  %3986 = vmatprep.subr.mxu0 0.0
  %3987 = vmatpush1.msra.mxu0 0.0
  %3988 = vmatprep.subr.mxu0 0.0
  %3989 = vmatpush1.msra.mxu0 0.0
  %3990 = vmatprep.mubr.f32.mxu0 0.0
  %3991 = vmatmul.mubr.f32.gmra.mrb[0].mxu0 %v3900
  %v3992 = vpop.f32.mrb[0].mxu0
  %v3993 = vadd.f32 0.0, %v3992
  %v3994 = vpop.f32.mrb[0].mxu0
  %3995 = vmatprep.mubr.f32.mxu0 0.0
  %3996 = vmatmul.mubr.f32.gmra.mrb[0].mxu0 %v3903
  %v3997 = vpop.f32.mrb[0].mxu0
  %v3998 = vadd.f32 0.0, %v3997
  %v3999 = vpop.f32.mrb[0].mxu0
  %4000 = vmatprep.mubr.f32.mxu0 0.0
  %4001 = vmatmul.mubr.f32.gmra.mrb[0].mxu0 %v3906
  %v4002 = vpop.f32.mrb[0].mxu0
  %v4003 = vadd.f32 0.0, %v4002
  %v4004 = vpop.f32.mrb[0].mxu0
  %4005 = vmatprep.mubr.f32.mxu0 0.0
  %4006 = vmatmul.mubr.f32.gmra.mrb[0].mxu0 %v3909
  %v4007 = vpop.f32.mrb[0].mxu0
  %v4008 = vadd.f32 0.0, %v4007
  %v4009 = vpop.f32.mrb[0].mxu0
  %4010 = vmatprep.mubr.f32.mxu0 0.0
  %4011 = vmatmul.mubr.f32.gmra.mrb[0].mxu0 %v3912
  %v4012 = vpop.f32.mrb[0].mxu0
  %v4013 = vadd.f32 0.0, %v4012
  %v4014 = vpop.f32.mrb[0].mxu0
  %4015 = vmatprep.mubr.f32.mxu0 0.0
  %4016 = vmatmul.mubr.f32.gmra.mrb[0].mxu0 %v3915
  %v4017 = vpop.f32.mrb[0].mxu0
  %v4018 = vadd.f32 0.0, %v4017
  %v4019 = vpop.f32.mrb[0].mxu0
  %4020 = vmatprep.mubr.f32.mxu0 0.0
  %4021 = vmatmul.mubr.f32.gmra.mrb[0].mxu0 %v3918
  %v4022 = vpop.f32.mrb[0].mxu0
  %v4023 = vadd.f32 0.0, %v4022
  %v4024 = vpop.f32.mrb[0].mxu0
  %4025 = vmatprep.mubr.f32.mxu0 0.0
  %4026 = vmatmul.mubr.f32.gmra.mrb[0].mxu0 %v3921
  %v4027 = vpop.f32.mrb[0].mxu0
  %v4028 = vadd.f32 0.0, %v4027
  %v4029 = vpop.f32.mrb[0].mxu0
  %4030 = vmatprep.mubr.f32.mxu0 0.0
  %4031 = vmatmul.mubr.f32.gmra.mrb[0].mxu0 %v3924
  %v4032 = vpop.f32.mrb[0].mxu0
  %v4033 = vadd.f32 0.0, %v4032
  %v4034 = vpop.f32.mrb[0].mxu0
  %4035 = vdwg.mxu0
  %s4036 = scalar_lea.vmem %s7, 288
  %v4037 = vld [vmem:[%s4036] sm:$0xff]
  %v4038 = vld [vmem:[%s4036 + $0x8] sm:$0xff]
  %v4039 = vld [vmem:[%s4036 + $0x10] sm:$0xff]
  %v4040 = vld [vmem:[%s4036 + $0x18] sm:$0xff]
  %v4041 = vld [vmem:[%s4036 + $0x20] sm:$0xff]
  %v4042 = vld [vmem:[%s4036 + $0x28] sm:$0xff]
  %v4043 = vld [vmem:[%s4036 + $0x30] sm:$0xff]
  %v4044 = vld [vmem:[%s4036 + $0x38] sm:$0xff]
  %v4045 = vld [vmem:[%s4036 + $0x40] sm:$0xff]
  %v4046 = vld [vmem:[%s4036 + $0x48] sm:$0xff]
  %v4047 = vld [vmem:[%s4036 + $0x50] sm:$0xff]
  %v4048 = vld [vmem:[%s4036 + $0x58] sm:$0xff]
  %v4049 = vld [vmem:[%s4036 + $0x60] sm:$0xff]
  %v4050 = vld [vmem:[%s4036 + $0x68] sm:$0xff]
  %v4051 = vld [vmem:[%s4036 + $0x70] sm:$0xff]
  %v4052 = vld [vmem:[%s4036 + $0x78] sm:$0xff]
  %v4053 = vld [vmem:[%s4036 + $0x80] sm:$0xff]
  %v4054 = vld [vmem:[%s4036 + $0x88] sm:$0xff]
  %v4056 = vsel %vm2860, %v3993, 0
  %v4059 = vsel %vm2860, %v3998, 0
  %v4062 = vsel %vm2860, %v4003, 0
  %v4065 = vsel %vm2860, %v4008, 0
  %v4068 = vsel %vm2860, %v4013, 0
  %v4071 = vsel %vm2860, %v4018, 0
  %v4074 = vsel %vm2860, %v4023, 0
  %v4077 = vsel %vm2860, %v4028, 0
  %v4080 = vsel %vm2860, %v4033, 0
  %4082 = vmatprep.subr.mxu0 %v4038
  %4083 = vmatpush1.msra.mxu0 %v4037
  %4084 = vmatprep.subr.mxu0 %v4040
  %4085 = vmatpush1.msra.mxu0 %v4039
  %4086 = vmatprep.subr.mxu0 %v4042
  %4087 = vmatpush1.msra.mxu0 %v4041
  %4088 = vmatprep.subr.mxu0 %v4044
  %4089 = vmatpush1.msra.mxu0 %v4043
  %4090 = vmatprep.subr.mxu0 %v4046
  %4091 = vmatpush1.msra.mxu0 %v4045
  %4092 = vmatprep.subr.mxu0 %v4048
  %4093 = vmatpush1.msra.mxu0 %v4047
  %4094 = vmatprep.subr.mxu0 %v4050
  %4095 = vmatpush1.msra.mxu0 %v4049
  %4096 = vmatprep.subr.mxu0 %v4052
  %4097 = vmatpush1.msra.mxu0 %v4051
  %4098 = vmatprep.subr.mxu0 %v4054
  %4099 = vmatpush1.msra.mxu0 %v4053
  %4100 = vmatprep.subr.mxu0 0.0
  %4101 = vmatpush1.msra.mxu0 0.0
  %4102 = vmatprep.subr.mxu0 0.0
  %4103 = vmatpush1.msra.mxu0 0.0
  %4104 = vmatprep.subr.mxu0 0.0
  %4105 = vmatpush1.msra.mxu0 0.0
  %4106 = vmatprep.subr.mxu0 0.0
  %4107 = vmatpush1.msra.mxu0 0.0
  %4108 = vmatprep.subr.mxu0 0.0
  %4109 = vmatpush1.msra.mxu0 0.0
  %4110 = vmatprep.subr.mxu0 0.0
  %4111 = vmatpush1.msra.mxu0 0.0
  %4112 = vmatprep.subr.mxu0 0.0
  %4113 = vmatpush1.msra.mxu0 0.0
  %4114 = vmatprep.subr.mxu0 0.0
  %4115 = vmatpush1.msra.mxu0 0.0
  %4116 = vmatprep.subr.mxu0 0.0
  %4117 = vmatpush1.msra.mxu0 0.0
  %4118 = vmatprep.subr.mxu0 0.0
  %4119 = vmatpush1.msra.mxu0 0.0
  %4120 = vmatprep.subr.mxu0 0.0
  %4121 = vmatpush1.msra.mxu0 0.0
  %4122 = vmatprep.subr.mxu0 0.0
  %4123 = vmatpush1.msra.mxu0 0.0
  %4124 = vmatprep.subr.mxu0 0.0
  %4125 = vmatpush1.msra.mxu0 0.0
  %4126 = vmatprep.subr.mxu0 0.0
  %4127 = vmatpush1.msra.mxu0 0.0
  %4128 = vmatprep.subr.mxu0 0.0
  %4129 = vmatpush1.msra.mxu0 0.0
  %4130 = vmatprep.subr.mxu0 0.0
  %4131 = vmatpush1.msra.mxu0 0.0
  %4132 = vmatprep.subr.mxu0 0.0
  %4133 = vmatpush1.msra.mxu0 0.0
  %4134 = vmatprep.subr.mxu0 0.0
  %4135 = vmatpush1.msra.mxu0 0.0
  %4136 = vmatprep.subr.mxu0 0.0
  %4137 = vmatpush1.msra.mxu0 0.0
  %4138 = vmatprep.subr.mxu0 0.0
  %4139 = vmatpush1.msra.mxu0 0.0
  %4140 = vmatprep.subr.mxu0 0.0
  %4141 = vmatpush1.msra.mxu0 0.0
  %4142 = vmatprep.subr.mxu0 0.0
  %4143 = vmatpush1.msra.mxu0 0.0
  %4144 = vmatprep.subr.mxu0 0.0
  %4145 = vmatpush1.msra.mxu0 0.0
  %4146 = vmatprep.mubr.f32.mxu0 0.0
  %4147 = vmatmul.mubr.f32.gmra.mrb[0].mxu0 %v4056
  %v4148 = vpop.f32.mrb[0].mxu0
  %v4149 = vadd.f32 0.0, %v4148
  %v4150 = vpop.f32.mrb[0].mxu0
  %v4151 = vadd.f32 0.0, %v4150
  %4152 = vmatprep.mubr.f32.mxu0 0.0
  %4153 = vmatmul.mubr.f32.gmra.mrb[0].mxu0 %v4059
  %v4154 = vpop.f32.mrb[0].mxu0
  %v4155 = vadd.f32 0.0, %v4154
  %v4156 = vpop.f32.mrb[0].mxu0
  %v4157 = vadd.f32 0.0, %v4156
  %4158 = vmatprep.mubr.f32.mxu0 0.0
  %4159 = vmatmul.mubr.f32.gmra.mrb[0].mxu0 %v4062
  %v4160 = vpop.f32.mrb[0].mxu0
  %v4161 = vadd.f32 0.0, %v4160
  %v4162 = vpop.f32.mrb[0].mxu0
  %v4163 = vadd.f32 0.0, %v4162
  %4164 = vmatprep.mubr.f32.mxu0 0.0
  %4165 = vmatmul.mubr.f32.gmra.mrb[0].mxu0 %v4065
  %v4166 = vpop.f32.mrb[0].mxu0
  %v4167 = vadd.f32 0.0, %v4166
  %v4168 = vpop.f32.mrb[0].mxu0
  %v4169 = vadd.f32 0.0, %v4168
  %4170 = vmatprep.mubr.f32.mxu0 0.0
  %4171 = vmatmul.mubr.f32.gmra.mrb[0].mxu0 %v4068
  %v4172 = vpop.f32.mrb[0].mxu0
  %v4173 = vadd.f32 0.0, %v4172
  %v4174 = vpop.f32.mrb[0].mxu0
  %v4175 = vadd.f32 0.0, %v4174
  %4176 = vmatprep.mubr.f32.mxu0 0.0
  %4177 = vmatmul.mubr.f32.gmra.mrb[0].mxu0 %v4071
  %v4178 = vpop.f32.mrb[0].mxu0
  %v4179 = vadd.f32 0.0, %v4178
  %v4180 = vpop.f32.mrb[0].mxu0
  %v4181 = vadd.f32 0.0, %v4180
  %4182 = vmatprep.mubr.f32.mxu0 0.0
  %4183 = vmatmul.mubr.f32.gmra.mrb[0].mxu0 %v4074
  %v4184 = vpop.f32.mrb[0].mxu0
  %v4185 = vadd.f32 0.0, %v4184
  %v4186 = vpop.f32.mrb[0].mxu0
  %v4187 = vadd.f32 0.0, %v4186
  %4188 = vmatprep.mubr.f32.mxu0 0.0
  %4189 = vmatmul.mubr.f32.gmra.mrb[0].mxu0 %v4077
  %v4190 = vpop.f32.mrb[0].mxu0
  %v4191 = vadd.f32 0.0, %v4190
  %v4192 = vpop.f32.mrb[0].mxu0
  %v4193 = vadd.f32 0.0, %v4192
  %4194 = vmatprep.mubr.f32.mxu0 0.0
  %4195 = vmatmul.mubr.f32.gmra.mrb[0].mxu0 %v4080
  %v4196 = vpop.f32.mrb[0].mxu0
  %v4197 = vadd.f32 0.0, %v4196
  %v4198 = vpop.f32.mrb[0].mxu0
  %v4199 = vadd.f32 0.0, %v4198
  %4200 = vdwg.mxu0
  %v4201 = vadd.f32 %v3871, %v4149
  %v4202 = vadd.f32 %v3872, %v4151
  %v4203 = vadd.f32 %v3873, %v4155
  %v4204 = vadd.f32 %v3874, %v4157
  %v4205 = vadd.f32 %v3875, %v4161
  %v4206 = vadd.f32 %v3876, %v4163
  %v4207 = vadd.f32 %v3877, %v4167
  %v4208 = vadd.f32 %v3878, %v4169
  %v4209 = vadd.f32 %v3879, %v4173
  %v4210 = vadd.f32 %v3880, %v4175
  %v4211 = vadd.f32 %v3881, %v4179
  %v4212 = vadd.f32 %v3882, %v4181
  %v4213 = vadd.f32 %v3883, %v4185
  %v4214 = vadd.f32 %v3884, %v4187
  %v4215 = vadd.f32 %v3885, %v4191
  %v4216 = vadd.f32 %v3886, %v4193
  %v4217 = vadd.f32 %v3887, %v4197
  %v4218 = vadd.f32 %v3888, %v4199
  %s4219 = scalar_lea.vmem %s6, 216
  %v4220 = vld [vmem:[%s4219] sm:$0xff]
  %v4221 = vld [vmem:[%s4219 + $0x8] sm:$0xff]
  %v4222 = vld [vmem:[%s4219 + $0x10] sm:$0xff]
  %v4223 = vld [vmem:[%s4219 + $0x18] sm:$0xff]
  %v4224 = vld [vmem:[%s4219 + $0x20] sm:$0xff]
  %v4225 = vld [vmem:[%s4219 + $0x28] sm:$0xff]
  %v4226 = vld [vmem:[%s4219 + $0x30] sm:$0xff]
  %v4227 = vld [vmem:[%s4219 + $0x38] sm:$0xff]
  %v4228 = vld [vmem:[%s4219 + $0x40] sm:$0xff]
  %v4230 = vsel %vm140, %v4220, 0
  %v4233 = vsel %vm140, %v4221, 0
  %v4236 = vsel %vm140, %v4222, 0
  %v4239 = vsel %vm140, %v4223, 0
  %v4242 = vsel %vm140, %v4224, 0
  %v4245 = vsel %vm140, %v4225, 0
  %v4248 = vsel %vm140, %v4226, 0
  %v4251 = vsel %vm140, %v4227, 0
  %v4254 = vsel %vm140, %v4228, 0
  %4256 = vmatprep.subr.mxu0 0.0
  %4257 = vmatpush1.msra.mxu0 %v3161
  %4258 = vmatprep.subr.mxu0 0.0
  %4259 = vmatpush1.msra.mxu0 %v3166
  %4260 = vmatprep.subr.mxu0 0.0
  %4261 = vmatpush1.msra.mxu0 %v3171
  %4262 = vmatprep.subr.mxu0 0.0
  %4263 = vmatpush1.msra.mxu0 %v3176
  %4264 = vmatprep.subr.mxu0 0.0
  %4265 = vmatpush1.msra.mxu0 %v3181
  %4266 = vmatprep.subr.mxu0 0.0
  %4267 = vmatpush1.msra.mxu0 %v3186
  %4268 = vmatprep.subr.mxu0 0.0
  %4269 = vmatpush1.msra.mxu0 %v3191
  %4270 = vmatprep.subr.mxu0 0.0
  %4271 = vmatpush1.msra.mxu0 %v3196
  %4272 = vmatprep.subr.mxu0 0.0
  %4273 = vmatpush1.msra.mxu0 %v3201
  %4274 = vmatprep.subr.mxu0 0.0
  %4275 = vmatpush1.msra.mxu0 %v3206
  %4276 = vmatprep.subr.mxu0 0.0
  %4277 = vmatpush1.msra.mxu0 %v3211
  %4278 = vmatprep.subr.mxu0 0.0
  %4279 = vmatpush1.msra.mxu0 %v3216
  %4280 = vmatprep.subr.mxu0 0.0
  %4281 = vmatpush1.msra.mxu0 0.0
  %4282 = vmatprep.subr.mxu0 0.0
  %4283 = vmatpush1.msra.mxu0 0.0
  %4284 = vmatprep.subr.mxu0 0.0
  %4285 = vmatpush1.msra.mxu0 0.0
  %4286 = vmatprep.subr.mxu0 0.0
  %4287 = vmatpush1.msra.mxu0 0.0
  %4288 = vmatprep.subr.mxu0 0.0
  %4289 = vmatpush1.msra.mxu0 0.0
  %4290 = vmatprep.subr.mxu0 0.0
  %4291 = vmatpush1.msra.mxu0 0.0
  %4292 = vmatprep.subr.mxu0 0.0
  %4293 = vmatpush1.msra.mxu0 0.0
  %4294 = vmatprep.subr.mxu0 0.0
  %4295 = vmatpush1.msra.mxu0 0.0
  %4296 = vmatprep.subr.mxu0 0.0
  %4297 = vmatpush1.msra.mxu0 0.0
  %4298 = vmatprep.subr.mxu0 0.0
  %4299 = vmatpush1.msra.mxu0 0.0
  %4300 = vmatprep.subr.mxu0 0.0
  %4301 = vmatpush1.msra.mxu0 0.0
  %4302 = vmatprep.subr.mxu0 0.0
  %4303 = vmatpush1.msra.mxu0 0.0
  %4304 = vmatprep.subr.mxu0 0.0
  %4305 = vmatpush1.msra.mxu0 0.0
  %4306 = vmatprep.subr.mxu0 0.0
  %4307 = vmatpush1.msra.mxu0 0.0
  %4308 = vmatprep.subr.mxu0 0.0
  %4309 = vmatpush1.msra.mxu0 0.0
  %4310 = vmatprep.subr.mxu0 0.0
  %4311 = vmatpush1.msra.mxu0 0.0
  %4312 = vmatprep.subr.mxu0 0.0
  %4313 = vmatpush1.msra.mxu0 0.0
  %4314 = vmatprep.subr.mxu0 0.0
  %4315 = vmatpush1.msra.mxu0 0.0
  %4316 = vmatprep.subr.mxu0 0.0
  %4317 = vmatpush1.msra.mxu0 0.0
  %4318 = vmatprep.subr.mxu0 0.0
  %4319 = vmatpush1.msra.mxu0 0.0
  %4320 = vmatprep.mubr.f32.mxu0 0.0
  %4321 = vmatmul.mubr.f32.gmra.mrb[0].mxu0 %v4230
  %v4322 = vpop.f32.mrb[0].mxu0
  %v4323 = vadd.f32 0.0, %v4322
  %v4324 = vpop.f32.mrb[0].mxu0
  %4325 = vmatprep.mubr.f32.mxu0 0.0
  %4326 = vmatmul.mubr.f32.gmra.mrb[0].mxu0 %v4233
  %v4327 = vpop.f32.mrb[0].mxu0
  %v4328 = vadd.f32 0.0, %v4327
  %v4329 = vpop.f32.mrb[0].mxu0
  %4330 = vmatprep.mubr.f32.mxu0 0.0
  %4331 = vmatmul.mubr.f32.gmra.mrb[0].mxu0 %v4236
  %v4332 = vpop.f32.mrb[0].mxu0
  %v4333 = vadd.f32 0.0, %v4332
  %v4334 = vpop.f32.mrb[0].mxu0
  %4335 = vmatprep.mubr.f32.mxu0 0.0
  %4336 = vmatmul.mubr.f32.gmra.mrb[0].mxu0 %v4239
  %v4337 = vpop.f32.mrb[0].mxu0
  %v4338 = vadd.f32 0.0, %v4337
  %v4339 = vpop.f32.mrb[0].mxu0
  %4340 = vmatprep.mubr.f32.mxu0 0.0
  %4341 = vmatmul.mubr.f32.gmra.mrb[0].mxu0 %v4242
  %v4342 = vpop.f32.mrb[0].mxu0
  %v4343 = vadd.f32 0.0, %v4342
  %v4344 = vpop.f32.mrb[0].mxu0
  %4345 = vmatprep.mubr.f32.mxu0 0.0
  %4346 = vmatmul.mubr.f32.gmra.mrb[0].mxu0 %v4245
  %v4347 = vpop.f32.mrb[0].mxu0
  %v4348 = vadd.f32 0.0, %v4347
  %v4349 = vpop.f32.mrb[0].mxu0
  %4350 = vmatprep.mubr.f32.mxu0 0.0
  %4351 = vmatmul.mubr.f32.gmra.mrb[0].mxu0 %v4248
  %v4352 = vpop.f32.mrb[0].mxu0
  %v4353 = vadd.f32 0.0, %v4352
  %v4354 = vpop.f32.mrb[0].mxu0
  %4355 = vmatprep.mubr.f32.mxu0 0.0
  %4356 = vmatmul.mubr.f32.gmra.mrb[0].mxu0 %v4251
  %v4357 = vpop.f32.mrb[0].mxu0
  %v4358 = vadd.f32 0.0, %v4357
  %v4359 = vpop.f32.mrb[0].mxu0
  %4360 = vmatprep.mubr.f32.mxu0 0.0
  %4361 = vmatmul.mubr.f32.gmra.mrb[0].mxu0 %v4254
  %v4362 = vpop.f32.mrb[0].mxu0
  %v4363 = vadd.f32 0.0, %v4362
  %v4364 = vpop.f32.mrb[0].mxu0
  %4365 = vdwg.mxu0
  %s4366 = scalar_lea.vmem %s7, 432
  %v4367 = vld [vmem:[%s4366] sm:$0xff]
  %v4368 = vld [vmem:[%s4366 + $0x8] sm:$0xff]
  %v4369 = vld [vmem:[%s4366 + $0x10] sm:$0xff]
  %v4370 = vld [vmem:[%s4366 + $0x18] sm:$0xff]
  %v4371 = vld [vmem:[%s4366 + $0x20] sm:$0xff]
  %v4372 = vld [vmem:[%s4366 + $0x28] sm:$0xff]
  %v4373 = vld [vmem:[%s4366 + $0x30] sm:$0xff]
  %v4374 = vld [vmem:[%s4366 + $0x38] sm:$0xff]
  %v4375 = vld [vmem:[%s4366 + $0x40] sm:$0xff]
  %v4376 = vld [vmem:[%s4366 + $0x48] sm:$0xff]
  %v4377 = vld [vmem:[%s4366 + $0x50] sm:$0xff]
  %v4378 = vld [vmem:[%s4366 + $0x58] sm:$0xff]
  %v4379 = vld [vmem:[%s4366 + $0x60] sm:$0xff]
  %v4380 = vld [vmem:[%s4366 + $0x68] sm:$0xff]
  %v4381 = vld [vmem:[%s4366 + $0x70] sm:$0xff]
  %v4382 = vld [vmem:[%s4366 + $0x78] sm:$0xff]
  %v4383 = vld [vmem:[%s4366 + $0x80] sm:$0xff]
  %v4384 = vld [vmem:[%s4366 + $0x88] sm:$0xff]
  %v4386 = vsel %vm2860, %v4323, 0
  %v4389 = vsel %vm2860, %v4328, 0
  %v4392 = vsel %vm2860, %v4333, 0
  %v4395 = vsel %vm2860, %v4338, 0
  %v4398 = vsel %vm2860, %v4343, 0
  %v4401 = vsel %vm2860, %v4348, 0
  %v4404 = vsel %vm2860, %v4353, 0
  %v4407 = vsel %vm2860, %v4358, 0
  %v4410 = vsel %vm2860, %v4363, 0
  %4412 = vmatprep.subr.mxu0 %v4368
  %4413 = vmatpush1.msra.mxu0 %v4367
  %4414 = vmatprep.subr.mxu0 %v4370
  %4415 = vmatpush1.msra.mxu0 %v4369
  %4416 = vmatprep.subr.mxu0 %v4372
  %4417 = vmatpush1.msra.mxu0 %v4371
  %4418 = vmatprep.subr.mxu0 %v4374
  %4419 = vmatpush1.msra.mxu0 %v4373
  %4420 = vmatprep.subr.mxu0 %v4376
  %4421 = vmatpush1.msra.mxu0 %v4375
  %4422 = vmatprep.subr.mxu0 %v4378
  %4423 = vmatpush1.msra.mxu0 %v4377
  %4424 = vmatprep.subr.mxu0 %v4380
  %4425 = vmatpush1.msra.mxu0 %v4379
  %4426 = vmatprep.subr.mxu0 %v4382
  %4427 = vmatpush1.msra.mxu0 %v4381
  %4428 = vmatprep.subr.mxu0 %v4384
  %4429 = vmatpush1.msra.mxu0 %v4383
  %4430 = vmatprep.subr.mxu0 0.0
  %4431 = vmatpush1.msra.mxu0 0.0
  %4432 = vmatprep.subr.mxu0 0.0
  %4433 = vmatpush1.msra.mxu0 0.0
  %4434 = vmatprep.subr.mxu0 0.0
  %4435 = vmatpush1.msra.mxu0 0.0
  %4436 = vmatprep.subr.mxu0 0.0
  %4437 = vmatpush1.msra.mxu0 0.0
  %4438 = vmatprep.subr.mxu0 0.0
  %4439 = vmatpush1.msra.mxu0 0.0
  %4440 = vmatprep.subr.mxu0 0.0
  %4441 = vmatpush1.msra.mxu0 0.0
  %4442 = vmatprep.subr.mxu0 0.0
  %4443 = vmatpush1.msra.mxu0 0.0
  %4444 = vmatprep.subr.mxu0 0.0
  %4445 = vmatpush1.msra.mxu0 0.0
  %4446 = vmatprep.subr.mxu0 0.0
  %4447 = vmatpush1.msra.mxu0 0.0
  %4448 = vmatprep.subr.mxu0 0.0
  %4449 = vmatpush1.msra.mxu0 0.0
  %4450 = vmatprep.subr.mxu0 0.0
  %4451 = vmatpush1.msra.mxu0 0.0
  %4452 = vmatprep.subr.mxu0 0.0
  %4453 = vmatpush1.msra.mxu0 0.0
  %4454 = vmatprep.subr.mxu0 0.0
  %4455 = vmatpush1.msra.mxu0 0.0
  %4456 = vmatprep.subr.mxu0 0.0
  %4457 = vmatpush1.msra.mxu0 0.0
  %4458 = vmatprep.subr.mxu0 0.0
  %4459 = vmatpush1.msra.mxu0 0.0
  %4460 = vmatprep.subr.mxu0 0.0
  %4461 = vmatpush1.msra.mxu0 0.0
  %4462 = vmatprep.subr.mxu0 0.0
  %4463 = vmatpush1.msra.mxu0 0.0
  %4464 = vmatprep.subr.mxu0 0.0
  %4465 = vmatpush1.msra.mxu0 0.0
  %4466 = vmatprep.subr.mxu0 0.0
  %4467 = vmatpush1.msra.mxu0 0.0
  %4468 = vmatprep.subr.mxu0 0.0
  %4469 = vmatpush1.msra.mxu0 0.0
  %4470 = vmatprep.subr.mxu0 0.0
  %4471 = vmatpush1.msra.mxu0 0.0
  %4472 = vmatprep.subr.mxu0 0.0
  %4473 = vmatpush1.msra.mxu0 0.0
  %4474 = vmatprep.subr.mxu0 0.0
  %4475 = vmatpush1.msra.mxu0 0.0
  %4476 = vmatprep.mubr.f32.mxu0 0.0
  %4477 = vmatmul.mubr.f32.gmra.mrb[0].mxu0 %v4386
  %v4478 = vpop.f32.mrb[0].mxu0
  %v4479 = vadd.f32 0.0, %v4478
  %v4480 = vpop.f32.mrb[0].mxu0
  %v4481 = vadd.f32 0.0, %v4480
  %4482 = vmatprep.mubr.f32.mxu0 0.0
  %4483 = vmatmul.mubr.f32.gmra.mrb[0].mxu0 %v4389
  %v4484 = vpop.f32.mrb[0].mxu0
  %v4485 = vadd.f32 0.0, %v4484
  %v4486 = vpop.f32.mrb[0].mxu0
  %v4487 = vadd.f32 0.0, %v4486
  %4488 = vmatprep.mubr.f32.mxu0 0.0
  %4489 = vmatmul.mubr.f32.gmra.mrb[0].mxu0 %v4392
  %v4490 = vpop.f32.mrb[0].mxu0
  %v4491 = vadd.f32 0.0, %v4490
  %v4492 = vpop.f32.mrb[0].mxu0
  %v4493 = vadd.f32 0.0, %v4492
  %4494 = vmatprep.mubr.f32.mxu0 0.0
  %4495 = vmatmul.mubr.f32.gmra.mrb[0].mxu0 %v4395
  %v4496 = vpop.f32.mrb[0].mxu0
  %v4497 = vadd.f32 0.0, %v4496
  %v4498 = vpop.f32.mrb[0].mxu0
  %v4499 = vadd.f32 0.0, %v4498
  %4500 = vmatprep.mubr.f32.mxu0 0.0
  %4501 = vmatmul.mubr.f32.gmra.mrb[0].mxu0 %v4398
  %v4502 = vpop.f32.mrb[0].mxu0
  %v4503 = vadd.f32 0.0, %v4502
  %v4504 = vpop.f32.mrb[0].mxu0
  %v4505 = vadd.f32 0.0, %v4504
  %4506 = vmatprep.mubr.f32.mxu0 0.0
  %4507 = vmatmul.mubr.f32.gmra.mrb[0].mxu0 %v4401
  %v4508 = vpop.f32.mrb[0].mxu0
  %v4509 = vadd.f32 0.0, %v4508
  %v4510 = vpop.f32.mrb[0].mxu0
  %v4511 = vadd.f32 0.0, %v4510
  %4512 = vmatprep.mubr.f32.mxu0 0.0
  %4513 = vmatmul.mubr.f32.gmra.mrb[0].mxu0 %v4404
  %v4514 = vpop.f32.mrb[0].mxu0
  %v4515 = vadd.f32 0.0, %v4514
  %v4516 = vpop.f32.mrb[0].mxu0
  %v4517 = vadd.f32 0.0, %v4516
  %4518 = vmatprep.mubr.f32.mxu0 0.0
  %4519 = vmatmul.mubr.f32.gmra.mrb[0].mxu0 %v4407
  %v4520 = vpop.f32.mrb[0].mxu0
  %v4521 = vadd.f32 0.0, %v4520
  %v4522 = vpop.f32.mrb[0].mxu0
  %v4523 = vadd.f32 0.0, %v4522
  %4524 = vmatprep.mubr.f32.mxu0 0.0
  %4525 = vmatmul.mubr.f32.gmra.mrb[0].mxu0 %v4410
  %v4526 = vpop.f32.mrb[0].mxu0
  %v4527 = vadd.f32 0.0, %v4526
  %v4528 = vpop.f32.mrb[0].mxu0
  %v4529 = vadd.f32 0.0, %v4528
  %4530 = vdwg.mxu0
  %v4531 = vadd.f32 %v4201, %v4479
  %v4532 = vadd.f32 %v4202, %v4481
  %v4533 = vadd.f32 %v4203, %v4485
  %v4534 = vadd.f32 %v4204, %v4487
  %v4535 = vadd.f32 %v4205, %v4491
  %v4536 = vadd.f32 %v4206, %v4493
  %v4537 = vadd.f32 %v4207, %v4497
  %v4538 = vadd.f32 %v4208, %v4499
  %v4539 = vadd.f32 %v4209, %v4503
  %v4540 = vadd.f32 %v4210, %v4505
  %v4541 = vadd.f32 %v4211, %v4509
  %v4542 = vadd.f32 %v4212, %v4511
  %v4543 = vadd.f32 %v4213, %v4515
  %v4544 = vadd.f32 %v4214, %v4517
  %v4545 = vadd.f32 %v4215, %v4521
  %v4546 = vadd.f32 %v4216, %v4523
  %v4547 = vadd.f32 %v4217, %v4527
  %v4548 = vadd.f32 %v4218, %v4529
  %v4549 = vtanh.pop %v4531
  %v4550 = vtanh.pop %v4532
  %v4551 = vtanh.pop %v4533
  %v4552 = vtanh.pop %v4534
  %v4553 = vtanh.pop %v4535
  %v4554 = vtanh.pop %v4536
  %v4555 = vtanh.pop %v4537
  %v4556 = vtanh.pop %v4538
  %v4557 = vtanh.pop %v4539
  %v4558 = vtanh.pop %v4540
  %v4559 = vtanh.pop %v4541
  %v4560 = vtanh.pop %v4542
  %v4561 = vtanh.pop %v4543
  %v4562 = vtanh.pop %v4544
  %v4563 = vtanh.pop %v4545
  %v4564 = vtanh.pop %v4546
  %v4565 = vtanh.pop %v4547
  %v4566 = vtanh.pop %v4548
  %v4567 = vld [vmem:[%s9] sm:$0xff]
  %v4568 = vld [vmem:[%s9 + $0x8] sm:$0xff]
  %v4569 = vld [vmem:[%s9 + $0x10] sm:$0xff]
  %v4570 = vld [vmem:[%s9 + $0x18] sm:$0xff]
  %v4572 = vsel %vm2860, %v4567, 0
  %v4575 = vsel %vm2860, %v4568, 0
  %v4578 = vsel %vm2860, %v4569, 0
  %v4581 = vsel %vm2860, %v4570, 0
  %4583 = vmatprep.subr.mxu0 %v4550
  %4584 = vmatpush1.msra.mxu0 %v4549
  %4585 = vmatprep.subr.mxu0 %v4552
  %4586 = vmatpush1.msra.mxu0 %v4551
  %4587 = vmatprep.subr.mxu0 %v4554
  %4588 = vmatpush1.msra.mxu0 %v4553
  %4589 = vmatprep.subr.mxu0 %v4556
  %4590 = vmatpush1.msra.mxu0 %v4555
  %4591 = vmatprep.subr.mxu0 %v4558
  %4592 = vmatpush1.msra.mxu0 %v4557
  %4593 = vmatprep.subr.mxu0 %v4560
  %4594 = vmatpush1.msra.mxu0 %v4559
  %4595 = vmatprep.subr.mxu0 %v4562
  %4596 = vmatpush1.msra.mxu0 %v4561
  %4597 = vmatprep.subr.mxu0 %v4564
  %4598 = vmatpush1.msra.mxu0 %v4563
  %4599 = vmatprep.subr.mxu0 %v4566
  %4600 = vmatpush1.msra.mxu0 %v4565
  %4601 = vmatprep.subr.mxu0 0.0
  %4602 = vmatpush1.msra.mxu0 0.0
  %4603 = vmatprep.subr.mxu0 0.0
  %4604 = vmatpush1.msra.mxu0 0.0
  %4605 = vmatprep.subr.mxu0 0.0
  %4606 = vmatpush1.msra.mxu0 0.0
  %4607 = vmatprep.subr.mxu0 0.0
  %4608 = vmatpush1.msra.mxu0 0.0
  %4609 = vmatprep.subr.mxu0 0.0
  %4610 = vmatpush1.msra.mxu0 0.0
  %4611 = vmatprep.subr.mxu0 0.0
  %4612 = vmatpush1.msra.mxu0 0.0
  %4613 = vmatprep.subr.mxu0 0.0
  %4614 = vmatpush1.msra.mxu0 0.0
  %4615 = vmatprep.subr.mxu0 0.0
  %4616 = vmatpush1.msra.mxu0 0.0
  %4617 = vmatprep.subr.mxu0 0.0
  %4618 = vmatpush1.msra.mxu0 0.0
  %4619 = vmatprep.subr.mxu0 0.0
  %4620 = vmatpush1.msra.mxu0 0.0
  %4621 = vmatprep.subr.mxu0 0.0
  %4622 = vmatpush1.msra.mxu0 0.0
  %4623 = vmatprep.subr.mxu0 0.0
  %4624 = vmatpush1.msra.mxu0 0.0
  %4625 = vmatprep.subr.mxu0 0.0
  %4626 = vmatpush1.msra.mxu0 0.0
  %4627 = vmatprep.subr.mxu0 0.0
  %4628 = vmatpush1.msra.mxu0 0.0
  %4629 = vmatprep.subr.mxu0 0.0
  %4630 = vmatpush1.msra.mxu0 0.0
  %4631 = vmatprep.subr.mxu0 0.0
  %4632 = vmatpush1.msra.mxu0 0.0
  %4633 = vmatprep.subr.mxu0 0.0
  %4634 = vmatpush1.msra.mxu0 0.0
  %4635 = vmatprep.subr.mxu0 0.0
  %4636 = vmatpush1.msra.mxu0 0.0
  %4637 = vmatprep.subr.mxu0 0.0
  %4638 = vmatpush1.msra.mxu0 0.0
  %4639 = vmatprep.subr.mxu0 0.0
  %4640 = vmatpush1.msra.mxu0 0.0
  %4641 = vmatprep.subr.mxu0 0.0
  %4642 = vmatpush1.msra.mxu0 0.0
  %4643 = vmatprep.subr.mxu0 0.0
  %4644 = vmatpush1.msra.mxu0 0.0
  %4645 = vmatprep.subr.mxu0 0.0
  %4646 = vmatpush1.msra.mxu0 0.0
  %4647 = vmatprep.mubr.f32.mxu0 0.0
  %4648 = vmatmul.mubr.f32.gmra.mrb[0].mxu0 %v4572
  %v4649 = vpop.f32.mrb[0].mxu0
  %v4650 = vadd.f32 0.0, %v4649
  %v4651 = vpop.f32.mrb[0].mxu0
  %v4652 = vadd.f32 0.0, %v4651
  %4653 = vmatprep.mubr.f32.mxu0 0.0
  %4654 = vmatmul.mubr.f32.gmra.mrb[0].mxu0 %v4575
  %v4655 = vpop.f32.mrb[0].mxu0
  %v4656 = vadd.f32 0.0, %v4655
  %v4657 = vpop.f32.mrb[0].mxu0
  %v4658 = vadd.f32 0.0, %v4657
  %4659 = vmatprep.mubr.f32.mxu0 0.0
  %4660 = vmatmul.mubr.f32.gmra.mrb[0].mxu0 %v4578
  %v4661 = vpop.f32.mrb[0].mxu0
  %v4662 = vadd.f32 0.0, %v4661
  %v4663 = vpop.f32.mrb[0].mxu0
  %v4664 = vadd.f32 0.0, %v4663
  %4665 = vmatprep.mubr.f32.mxu0 0.0
  %4666 = vmatmul.mubr.f32.gmra.mrb[0].mxu0 %v4581
  %v4667 = vpop.f32.mrb[0].mxu0
  %v4668 = vadd.f32 0.0, %v4667
  %v4669 = vpop.f32.mrb[0].mxu0
  %v4670 = vadd.f32 0.0, %v4669
  %4671 = vdwg.mxu0
  %v4672 = vld [vmem:[%s10] sm:$0xff]
  %v4673 = vld [vmem:[%s10 + $0x8] sm:$0xff]
  %v4674 = vld [vmem:[%s10 + $0x10] sm:$0xff]
  %v4675 = vld [vmem:[%s10 + $0x18] sm:$0xff]
  %v4676 = vld [vmem:[%s10 + $0x20] sm:$0xff]
  %v4677 = vld [vmem:[%s10 + $0x28] sm:$0xff]
  %v4678 = vld [vmem:[%s10 + $0x30] sm:$0xff]
  %v4679 = vld [vmem:[%s10 + $0x38] sm:$0xff]
  %v4680 = vld [vmem:[%s10 + $0x40] sm:$0xff]
  %v4681 = vld [vmem:[%s10 + $0x48] sm:$0xff]
  %v4682 = vld [vmem:[%s10 + $0x50] sm:$0xff]
  %v4683 = vld [vmem:[%s10 + $0x58] sm:$0xff]
  %v4684 = vld [vmem:[%s10 + $0x60] sm:$0xff]
  %v4685 = vld [vmem:[%s10 + $0x68] sm:$0xff]
  %v4686 = vld [vmem:[%s10 + $0x70] sm:$0xff]
  %v4687 = vld [vmem:[%s10 + $0x78] sm:$0xff]
  %v4688 = vld [vmem:[%s10 + $0x80] sm:$0xff]
  %v4689 = vld [vmem:[%s10 + $0x88] sm:$0xff]
  %vm4690 = vcmask 130048
  %v4692 = vsel %vm4690, %v4652, 0
  %v4695 = vsel %vm4690, %v4658, 0
  %v4698 = vsel %vm4690, %v4664, 0
  %v4701 = vsel %vm4690, %v4670, 0
  %4703 = vmatprep.subr.mxu0 0.0
  %4704 = vmatpush1.msra.mxu0 %v4672
  %4705 = vmatprep.subr.mxu0 0.0
  %4706 = vmatpush1.msra.mxu0 %v4673
  %4707 = vmatprep.subr.mxu0 0.0
  %4708 = vmatpush1.msra.mxu0 %v4674
  %4709 = vmatprep.subr.mxu0 0.0
  %4710 = vmatpush1.msra.mxu0 %v4675
  %4711 = vmatprep.subr.mxu0 0.0
  %4712 = vmatpush1.msra.mxu0 %v4676
  %4713 = vmatprep.subr.mxu0 0.0
  %4714 = vmatpush1.msra.mxu0 %v4677
  %4715 = vmatprep.subr.mxu0 0.0
  %4716 = vmatpush1.msra.mxu0 %v4678
  %4717 = vmatprep.subr.mxu0 0.0
  %4718 = vmatpush1.msra.mxu0 %v4679
  %4719 = vmatprep.subr.mxu0 0.0
  %4720 = vmatpush1.msra.mxu0 %v4680
  %4721 = vmatprep.subr.mxu0 0.0
  %4722 = vmatpush1.msra.mxu0 %v4681
  %4723 = vmatprep.subr.mxu0 0.0
  %4724 = vmatpush1.msra.mxu0 %v4682
  %4725 = vmatprep.subr.mxu0 0.0
  %4726 = vmatpush1.msra.mxu0 %v4683
  %4727 = vmatprep.subr.mxu0 0.0
  %4728 = vmatpush1.msra.mxu0 %v4684
  %4729 = vmatprep.subr.mxu0 0.0
  %4730 = vmatpush1.msra.mxu0 %v4685
  %4731 = vmatprep.subr.mxu0 0.0
  %4732 = vmatpush1.msra.mxu0 %v4686
  %4733 = vmatprep.subr.mxu0 0.0
  %4734 = vmatpush1.msra.mxu0 %v4687
  %4735 = vmatprep.subr.mxu0 0.0
  %4736 = vmatpush1.msra.mxu0 %v4688
  %4737 = vmatprep.subr.mxu0 0.0
  %4738 = vmatpush1.msra.mxu0 %v4689
  %4739 = vmatprep.subr.mxu0 0.0
  %4740 = vmatpush1.msra.mxu0 0.0
  %4741 = vmatprep.subr.mxu0 0.0
  %4742 = vmatpush1.msra.mxu0 0.0
  %4743 = vmatprep.subr.mxu0 0.0
  %4744 = vmatpush1.msra.mxu0 0.0
  %4745 = vmatprep.subr.mxu0 0.0
  %4746 = vmatpush1.msra.mxu0 0.0
  %4747 = vmatprep.subr.mxu0 0.0
  %4748 = vmatpush1.msra.mxu0 0.0
  %4749 = vmatprep.subr.mxu0 0.0
  %4750 = vmatpush1.msra.mxu0 0.0
  %4751 = vmatprep.subr.mxu0 0.0
  %4752 = vmatpush1.msra.mxu0 0.0
  %4753 = vmatprep.subr.mxu0 0.0
  %4754 = vmatpush1.msra.mxu0 0.0
  %4755 = vmatprep.subr.mxu0 0.0
  %4756 = vmatpush1.msra.mxu0 0.0
  %4757 = vmatprep.subr.mxu0 0.0
  %4758 = vmatpush1.msra.mxu0 0.0
  %4759 = vmatprep.subr.mxu0 0.0
  %4760 = vmatpush1.msra.mxu0 0.0
  %4761 = vmatprep.subr.mxu0 0.0
  %4762 = vmatpush1.msra.mxu0 0.0
  %4763 = vmatprep.subr.mxu0 0.0
  %4764 = vmatpush1.msra.mxu0 0.0
  %4765 = vmatprep.subr.mxu0 0.0
  %4766 = vmatpush1.msra.mxu0 0.0
  %4767 = vmatprep.mubr.f32.mxu0 %v4692
  %4768 = vmatmul.mubr.f32.gmra.mrb[0].mxu0 %v4650
  %v4769 = vpop.f32.mrb[0].mxu0
  %v4770 = vadd.f32 0.0, %v4769
  %v4771 = vpop.f32.mrb[0].mxu0
  %4772 = vmatprep.mubr.f32.mxu0 %v4695
  %4773 = vmatmul.mubr.f32.gmra.mrb[0].mxu0 %v4656
  %v4774 = vpop.f32.mrb[0].mxu0
  %v4775 = vadd.f32 0.0, %v4774
  %v4776 = vpop.f32.mrb[0].mxu0
  %4777 = vmatprep.mubr.f32.mxu0 %v4698
  %4778 = vmatmul.mubr.f32.gmra.mrb[0].mxu0 %v4662
  %v4779 = vpop.f32.mrb[0].mxu0
  %v4780 = vadd.f32 0.0, %v4779
  %v4781 = vpop.f32.mrb[0].mxu0
  %4782 = vmatprep.mubr.f32.mxu0 %v4701
  %4783 = vmatmul.mubr.f32.gmra.mrb[0].mxu0 %v4668
  %v4784 = vpop.f32.mrb[0].mxu0
  %v4785 = vadd.f32 0.0, %v4784
  %v4786 = vpop.f32.mrb[0].mxu0
  %4787 = vdwg.mxu0
  %v4788 = vld [vmem:[%s13] sm:$0x1]
  %v4789 = vld [vmem:[%s11] sm:$0xff]
  %vm4790 = vcmask 261120
  %v4792 = vsel %vm4790, %v4789, 0
  %4794 = vmatprep.subr.mxu0 0.0
  %4795 = vmatpush1.msra.mxu0 %v4770
  %4796 = vmatprep.subr.mxu0 0.0
  %4797 = vmatpush1.msra.mxu0 %v4775
  %4798 = vmatprep.subr.mxu0 0.0
  %4799 = vmatpush1.msra.mxu0 %v4780
  %4800 = vmatprep.subr.mxu0 0.0
  %4801 = vmatpush1.msra.mxu0 %v4785
  %4802 = vmatprep.subr.mxu0 0.0
  %4803 = vmatpush1.msra.mxu0 0.0
  %4804 = vmatprep.subr.mxu0 0.0
  %4805 = vmatpush1.msra.mxu0 0.0
  %4806 = vmatprep.subr.mxu0 0.0
  %4807 = vmatpush1.msra.mxu0 0.0
  %4808 = vmatprep.subr.mxu0 0.0
  %4809 = vmatpush1.msra.mxu0 0.0
  %4810 = vmatprep.subr.mxu0 0.0
  %4811 = vmatpush1.msra.mxu0 0.0
  %4812 = vmatprep.subr.mxu0 0.0
  %4813 = vmatpush1.msra.mxu0 0.0
  %4814 = vmatprep.subr.mxu0 0.0
  %4815 = vmatpush1.msra.mxu0 0.0
  %4816 = vmatprep.subr.mxu0 0.0
  %4817 = vmatpush1.msra.mxu0 0.0
  %4818 = vmatprep.subr.mxu0 0.0
  %4819 = vmatpush1.msra.mxu0 0.0
  %4820 = vmatprep.subr.mxu0 0.0
  %4821 = vmatpush1.msra.mxu0 0.0
  %4822 = vmatprep.subr.mxu0 0.0
  %4823 = vmatpush1.msra.mxu0 0.0
  %4824 = vmatprep.subr.mxu0 0.0
  %4825 = vmatpush1.msra.mxu0 0.0
  %4826 = vmatprep.subr.mxu0 0.0
  %4827 = vmatpush1.msra.mxu0 0.0
  %4828 = vmatprep.subr.mxu0 0.0
  %4829 = vmatpush1.msra.mxu0 0.0
  %4830 = vmatprep.subr.mxu0 0.0
  %4831 = vmatpush1.msra.mxu0 0.0
  %4832 = vmatprep.subr.mxu0 0.0
  %4833 = vmatpush1.msra.mxu0 0.0
  %4834 = vmatprep.subr.mxu0 0.0
  %4835 = vmatpush1.msra.mxu0 0.0
  %4836 = vmatprep.subr.mxu0 0.0
  %4837 = vmatpush1.msra.mxu0 0.0
  %4838 = vmatprep.subr.mxu0 0.0
  %4839 = vmatpush1.msra.mxu0 0.0
  %4840 = vmatprep.subr.mxu0 0.0
  %4841 = vmatpush1.msra.mxu0 0.0
  %4842 = vmatprep.subr.mxu0 0.0
  %4843 = vmatpush1.msra.mxu0 0.0
  %4844 = vmatprep.subr.mxu0 0.0
  %4845 = vmatpush1.msra.mxu0 0.0
  %4846 = vmatprep.subr.mxu0 0.0
  %4847 = vmatpush1.msra.mxu0 0.0
  %4848 = vmatprep.subr.mxu0 0.0
  %4849 = vmatpush1.msra.mxu0 0.0
  %4850 = vmatprep.subr.mxu0 0.0
  %4851 = vmatpush1.msra.mxu0 0.0
  %4852 = vmatprep.subr.mxu0 0.0
  %4853 = vmatpush1.msra.mxu0 0.0
  %4854 = vmatprep.subr.mxu0 0.0
  %4855 = vmatpush1.msra.mxu0 0.0
  %4856 = vmatprep.subr.mxu0 0.0
  %4857 = vmatpush1.msra.mxu0 0.0
  %4858 = vmatprep.mubr.f32.mxu0 0.0
  %4859 = vmatmul.mubr.f32.gmra.mrb[0].mxu0 %v4792
  %v4860 = vpop.f32.mrb[0].mxu0
  %v4861 = vadd.f32 0.0, %v4860
  %v4862 = vpop.f32.mrb[0].mxu0
  %4863 = vdwg.mxu0
  %v4864 = vld [vmem:[%s12] sm:$0xff]
  %v4865 = vld [vmem:[%s12 + $0x8] sm:$0xff]
  %v4866 = vld [vmem:[%s12 + $0x10] sm:$0xff]
  %v4867 = vld [vmem:[%s12 + $0x18] sm:$0xff]
  %v4868 = vld [vmem:[%s12 + $0x20] sm:$0xff]
  %v4869 = vld [vmem:[%s12 + $0x28] sm:$0xff]
  %v4870 = vld [vmem:[%s12 + $0x30] sm:$0xff]
  %v4871 = vld [vmem:[%s12 + $0x38] sm:$0xff]
  %vm4872 = vcmask 523264
  %v4874 = vsel %vm4872, %v4861, 0
  %4876 = vmatprep.subr.mxu0 0.0
  %4877 = vmatpush1.msra.mxu0 %v4864
  %4878 = vmatprep.subr.mxu0 0.0
  %4879 = vmatpush1.msra.mxu0 %v4865
  %4880 = vmatprep.subr.mxu0 0.0
  %4881 = vmatpush1.msra.mxu0 %v4866
  %4882 = vmatprep.subr.mxu0 0.0
  %4883 = vmatpush1.msra.mxu0 %v4867
  %4884 = vmatprep.subr.mxu0 0.0
  %4885 = vmatpush1.msra.mxu0 %v4868
  %4886 = vmatprep.subr.mxu0 0.0
  %4887 = vmatpush1.msra.mxu0 %v4869
  %4888 = vmatprep.subr.mxu0 0.0
  %4889 = vmatpush1.msra.mxu0 %v4870
  %4890 = vmatprep.subr.mxu0 0.0
  %4891 = vmatpush1.msra.mxu0 %v4871
  %4892 = vmatprep.subr.mxu0 0.0
  %4893 = vmatpush1.msra.mxu0 0.0
  %4894 = vmatprep.subr.mxu0 0.0
  %4895 = vmatpush1.msra.mxu0 0.0
  %4896 = vmatprep.subr.mxu0 0.0
  %4897 = vmatpush1.msra.mxu0 0.0
  %4898 = vmatprep.subr.mxu0 0.0
  %4899 = vmatpush1.msra.mxu0 0.0
  %4900 = vmatprep.subr.mxu0 0.0
  %4901 = vmatpush1.msra.mxu0 0.0
  %4902 = vmatprep.subr.mxu0 0.0
  %4903 = vmatpush1.msra.mxu0 0.0
  %4904 = vmatprep.subr.mxu0 0.0
  %4905 = vmatpush1.msra.mxu0 0.0
  %4906 = vmatprep.subr.mxu0 0.0
  %4907 = vmatpush1.msra.mxu0 0.0
  %4908 = vmatprep.subr.mxu0 0.0
  %4909 = vmatpush1.msra.mxu0 0.0
  %4910 = vmatprep.subr.mxu0 0.0
  %4911 = vmatpush1.msra.mxu0 0.0
  %4912 = vmatprep.subr.mxu0 0.0
  %4913 = vmatpush1.msra.mxu0 0.0
  %4914 = vmatprep.subr.mxu0 0.0
  %4915 = vmatpush1.msra.mxu0 0.0
  %4916 = vmatprep.subr.mxu0 0.0
  %4917 = vmatpush1.msra.mxu0 0.0
  %4918 = vmatprep.subr.mxu0 0.0
  %4919 = vmatpush1.msra.mxu0 0.0
  %4920 = vmatprep.subr.mxu0 0.0
  %4921 = vmatpush1.msra.mxu0 0.0
  %4922 = vmatprep.subr.mxu0 0.0
  %4923 = vmatpush1.msra.mxu0 0.0
  %4924 = vmatprep.subr.mxu0 0.0
  %4925 = vmatpush1.msra.mxu0 0.0
  %4926 = vmatprep.subr.mxu0 0.0
  %4927 = vmatpush1.msra.mxu0 0.0
  %4928 = vmatprep.subr.mxu0 0.0
  %4929 = vmatpush1.msra.mxu0 0.0
  %4930 = vmatprep.subr.mxu0 0.0
  %4931 = vmatpush1.msra.mxu0 0.0
  %4932 = vmatprep.subr.mxu0 0.0
  %4933 = vmatpush1.msra.mxu0 0.0
  %4934 = vmatprep.subr.mxu0 0.0
  %4935 = vmatpush1.msra.mxu0 0.0
  %4936 = vmatprep.subr.mxu0 0.0
  %4937 = vmatpush1.msra.mxu0 0.0
  %4938 = vmatprep.subr.mxu0 0.0
  %4939 = vmatpush1.msra.mxu0 0.0
  %4940 = vmatprep.mubr.f32.mxu0 0.0
  %4941 = vmatmul.mubr.f32.gmra.mrb[0].mxu0 %v4874
  %v4942 = vpop.f32.mrb[0].mxu0
  %v4943 = vadd.f32 0.0, %v4942
  %v4944 = vpop.f32.mrb[0].mxu0
  %4945 = vdwg.mxu0
  %v4947 = vlaneseq
  %v4948 = vshrl.u32 %v4947, 7
  %v4949 = vsub.s32 0, %v4948
  %v4950 = vrot.slane %v4788, %v4949
  %v4952 = vadd.f32 %v4950, %v4943
  %s4953 = scalar_lea.vmem %s11, 8
  %v4954 = vld [vmem:[%s4953] sm:$0xff]
  %v4956 = vsel %vm4790, %v4954, 0
  %4958 = vmatprep.subr.mxu0 0.0
  %4959 = vmatpush1.msra.mxu0 %v4770
  %4960 = vmatprep.subr.mxu0 0.0
  %4961 = vmatpush1.msra.mxu0 %v4775
  %4962 = vmatprep.subr.mxu0 0.0
  %4963 = vmatpush1.msra.mxu0 %v4780
  %4964 = vmatprep.subr.mxu0 0.0
  %4965 = vmatpush1.msra.mxu0 %v4785
  %4966 = vmatprep.subr.mxu0 0.0
  %4967 = vmatpush1.msra.mxu0 0.0
  %4968 = vmatprep.subr.mxu0 0.0
  %4969 = vmatpush1.msra.mxu0 0.0
  %4970 = vmatprep.subr.mxu0 0.0
  %4971 = vmatpush1.msra.mxu0 0.0
  %4972 = vmatprep.subr.mxu0 0.0
  %4973 = vmatpush1.msra.mxu0 0.0
  %4974 = vmatprep.subr.mxu0 0.0
  %4975 = vmatpush1.msra.mxu0 0.0
  %4976 = vmatprep.subr.mxu0 0.0
  %4977 = vmatpush1.msra.mxu0 0.0
  %4978 = vmatprep.subr.mxu0 0.0
  %4979 = vmatpush1.msra.mxu0 0.0
  %4980 = vmatprep.subr.mxu0 0.0
  %4981 = vmatpush1.msra.mxu0 0.0
  %4982 = vmatprep.subr.mxu0 0.0
  %4983 = vmatpush1.msra.mxu0 0.0
  %4984 = vmatprep.subr.mxu0 0.0
  %4985 = vmatpush1.msra.mxu0 0.0
  %4986 = vmatprep.subr.mxu0 0.0
  %4987 = vmatpush1.msra.mxu0 0.0
  %4988 = vmatprep.subr.mxu0 0.0
  %4989 = vmatpush1.msra.mxu0 0.0
  %4990 = vmatprep.subr.mxu0 0.0
  %4991 = vmatpush1.msra.mxu0 0.0
  %4992 = vmatprep.subr.mxu0 0.0
  %4993 = vmatpush1.msra.mxu0 0.0
  %4994 = vmatprep.subr.mxu0 0.0
  %4995 = vmatpush1.msra.mxu0 0.0
  %4996 = vmatprep.subr.mxu0 0.0
  %4997 = vmatpush1.msra.mxu0 0.0
  %4998 = vmatprep.subr.mxu0 0.0
  %4999 = vmatpush1.msra.mxu0 0.0
  %5000 = vmatprep.subr.mxu0 0.0
  %5001 = vmatpush1.msra.mxu0 0.0
  %5002 = vmatprep.subr.mxu0 0.0
  %5003 = vmatpush1.msra.mxu0 0.0
  %5004 = vmatprep.subr.mxu0 0.0
  %5005 = vmatpush1.msra.mxu0 0.0
  %5006 = vmatprep.subr.mxu0 0.0
  %5007 = vmatpush1.msra.mxu0 0.0
  %5008 = vmatprep.subr.mxu0 0.0
  %5009 = vmatpush1.msra.mxu0 0.0
  %5010 = vmatprep.subr.mxu0 0.0
  %5011 = vmatpush1.msra.mxu0 0.0
  %5012 = vmatprep.subr.mxu0 0.0
  %5013 = vmatpush1.msra.mxu0 0.0
  %5014 = vmatprep.subr.mxu0 0.0
  %5015 = vmatpush1.msra.mxu0 0.0
  %5016 = vmatprep.subr.mxu0 0.0
  %5017 = vmatpush1.msra.mxu0 0.0
  %5018 = vmatprep.subr.mxu0 0.0
  %5019 = vmatpush1.msra.mxu0 0.0
  %5020 = vmatprep.subr.mxu0 0.0
  %5021 = vmatpush1.msra.mxu0 0.0
  %5022 = vmatprep.mubr.f32.mxu0 0.0
  %5023 = vmatmul.mubr.f32.gmra.mrb[0].mxu0 %v4956
  %v5024 = vpop.f32.mrb[0].mxu0
  %v5025 = vadd.f32 0.0, %v5024
  %v5026 = vpop.f32.mrb[0].mxu0
  %5027 = vdwg.mxu0
  %s5028 = scalar_lea.vmem %s12, 64
  %v5029 = vld [vmem:[%s5028] sm:$0xff]
  %v5030 = vld [vmem:[%s5028 + $0x8] sm:$0xff]
  %v5031 = vld [vmem:[%s5028 + $0x10] sm:$0xff]
  %v5032 = vld [vmem:[%s5028 + $0x18] sm:$0xff]
  %v5033 = vld [vmem:[%s5028 + $0x20] sm:$0xff]
  %v5034 = vld [vmem:[%s5028 + $0x28] sm:$0xff]
  %v5035 = vld [vmem:[%s5028 + $0x30] sm:$0xff]
  %v5036 = vld [vmem:[%s5028 + $0x38] sm:$0xff]
  %v5038 = vsel %vm4872, %v5025, 0
  %5040 = vmatprep.subr.mxu0 0.0
  %5041 = vmatpush1.msra.mxu0 %v5029
  %5042 = vmatprep.subr.mxu0 0.0
  %5043 = vmatpush1.msra.mxu0 %v5030
  %5044 = vmatprep.subr.mxu0 0.0
  %5045 = vmatpush1.msra.mxu0 %v5031
  %5046 = vmatprep.subr.mxu0 0.0
  %5047 = vmatpush1.msra.mxu0 %v5032
  %5048 = vmatprep.subr.mxu0 0.0
  %5049 = vmatpush1.msra.mxu0 %v5033
  %5050 = vmatprep.subr.mxu0 0.0
  %5051 = vmatpush1.msra.mxu0 %v5034
  %5052 = vmatprep.subr.mxu0 0.0
  %5053 = vmatpush1.msra.mxu0 %v5035
  %5054 = vmatprep.subr.mxu0 0.0
  %5055 = vmatpush1.msra.mxu0 %v5036
  %5056 = vmatprep.subr.mxu0 0.0
  %5057 = vmatpush1.msra.mxu0 0.0
  %5058 = vmatprep.subr.mxu0 0.0
  %5059 = vmatpush1.msra.mxu0 0.0
  %5060 = vmatprep.subr.mxu0 0.0
  %5061 = vmatpush1.msra.mxu0 0.0
  %5062 = vmatprep.subr.mxu0 0.0
  %5063 = vmatpush1.msra.mxu0 0.0
  %5064 = vmatprep.subr.mxu0 0.0
  %5065 = vmatpush1.msra.mxu0 0.0
  %5066 = vmatprep.subr.mxu0 0.0
  %5067 = vmatpush1.msra.mxu0 0.0
  %5068 = vmatprep.subr.mxu0 0.0
  %5069 = vmatpush1.msra.mxu0 0.0
  %5070 = vmatprep.subr.mxu0 0.0
  %5071 = vmatpush1.msra.mxu0 0.0
  %5072 = vmatprep.subr.mxu0 0.0
  %5073 = vmatpush1.msra.mxu0 0.0
  %5074 = vmatprep.subr.mxu0 0.0
  %5075 = vmatpush1.msra.mxu0 0.0
  %5076 = vmatprep.subr.mxu0 0.0
  %5077 = vmatpush1.msra.mxu0 0.0
  %5078 = vmatprep.subr.mxu0 0.0
  %5079 = vmatpush1.msra.mxu0 0.0
  %5080 = vmatprep.subr.mxu0 0.0
  %5081 = vmatpush1.msra.mxu0 0.0
  %5082 = vmatprep.subr.mxu0 0.0
  %5083 = vmatpush1.msra.mxu0 0.0
  %5084 = vmatprep.subr.mxu0 0.0
  %5085 = vmatpush1.msra.mxu0 0.0
  %5086 = vmatprep.subr.mxu0 0.0
  %5087 = vmatpush1.msra.mxu0 0.0
  %5088 = vmatprep.subr.mxu0 0.0
  %5089 = vmatpush1.msra.mxu0 0.0
  %5090 = vmatprep.subr.mxu0 0.0
  %5091 = vmatpush1.msra.mxu0 0.0
  %5092 = vmatprep.subr.mxu0 0.0
  %5093 = vmatpush1.msra.mxu0 0.0
  %5094 = vmatprep.subr.mxu0 0.0
  %5095 = vmatpush1.msra.mxu0 0.0
  %5096 = vmatprep.subr.mxu0 0.0
  %5097 = vmatpush1.msra.mxu0 0.0
  %5098 = vmatprep.subr.mxu0 0.0
  %5099 = vmatpush1.msra.mxu0 0.0
  %5100 = vmatprep.subr.mxu0 0.0
  %5101 = vmatpush1.msra.mxu0 0.0
  %5102 = vmatprep.subr.mxu0 0.0
  %5103 = vmatpush1.msra.mxu0 0.0
  %5104 = vmatprep.mubr.f32.mxu0 0.0
  %5105 = vmatmul.mubr.f32.gmra.mrb[0].mxu0 %v5038
  %v5106 = vpop.f32.mrb[0].mxu0
  %v5107 = vadd.f32 0.0, %v5106
  %v5108 = vpop.f32.mrb[0].mxu0
  %5109 = vdwg.mxu0
  %v5110 = vadd.f32 %v4952, %v5107
  %s5111 = scalar_lea.vmem %s11, 16
  %v5112 = vld [vmem:[%s5111] sm:$0xff]
  %v5114 = vsel %vm4790, %v5112, 0
  %5116 = vmatprep.subr.mxu0 0.0
  %5117 = vmatpush1.msra.mxu0 %v4770
  %5118 = vmatprep.subr.mxu0 0.0
  %5119 = vmatpush1.msra.mxu0 %v4775
  %5120 = vmatprep.subr.mxu0 0.0
  %5121 = vmatpush1.msra.mxu0 %v4780
  %5122 = vmatprep.subr.mxu0 0.0
  %5123 = vmatpush1.msra.mxu0 %v4785
  %5124 = vmatprep.subr.mxu0 0.0
  %5125 = vmatpush1.msra.mxu0 0.0
  %5126 = vmatprep.subr.mxu0 0.0
  %5127 = vmatpush1.msra.mxu0 0.0
  %5128 = vmatprep.subr.mxu0 0.0
  %5129 = vmatpush1.msra.mxu0 0.0
  %5130 = vmatprep.subr.mxu0 0.0
  %5131 = vmatpush1.msra.mxu0 0.0
  %5132 = vmatprep.subr.mxu0 0.0
  %5133 = vmatpush1.msra.mxu0 0.0
  %5134 = vmatprep.subr.mxu0 0.0
  %5135 = vmatpush1.msra.mxu0 0.0
  %5136 = vmatprep.subr.mxu0 0.0
  %5137 = vmatpush1.msra.mxu0 0.0
  %5138 = vmatprep.subr.mxu0 0.0
  %5139 = vmatpush1.msra.mxu0 0.0
  %5140 = vmatprep.subr.mxu0 0.0
  %5141 = vmatpush1.msra.mxu0 0.0
  %5142 = vmatprep.subr.mxu0 0.0
  %5143 = vmatpush1.msra.mxu0 0.0
  %5144 = vmatprep.subr.mxu0 0.0
  %5145 = vmatpush1.msra.mxu0 0.0
  %5146 = vmatprep.subr.mxu0 0.0
  %5147 = vmatpush1.msra.mxu0 0.0
  %5148 = vmatprep.subr.mxu0 0.0
  %5149 = vmatpush1.msra.mxu0 0.0
  %5150 = vmatprep.subr.mxu0 0.0
  %5151 = vmatpush1.msra.mxu0 0.0
  %5152 = vmatprep.subr.mxu0 0.0
  %5153 = vmatpush1.msra.mxu0 0.0
  %5154 = vmatprep.subr.mxu0 0.0
  %5155 = vmatpush1.msra.mxu0 0.0
  %5156 = vmatprep.subr.mxu0 0.0
  %5157 = vmatpush1.msra.mxu0 0.0
  %5158 = vmatprep.subr.mxu0 0.0
  %5159 = vmatpush1.msra.mxu0 0.0
  %5160 = vmatprep.subr.mxu0 0.0
  %5161 = vmatpush1.msra.mxu0 0.0
  %5162 = vmatprep.subr.mxu0 0.0
  %5163 = vmatpush1.msra.mxu0 0.0
  %5164 = vmatprep.subr.mxu0 0.0
  %5165 = vmatpush1.msra.mxu0 0.0
  %5166 = vmatprep.subr.mxu0 0.0
  %5167 = vmatpush1.msra.mxu0 0.0
  %5168 = vmatprep.subr.mxu0 0.0
  %5169 = vmatpush1.msra.mxu0 0.0
  %5170 = vmatprep.subr.mxu0 0.0
  %5171 = vmatpush1.msra.mxu0 0.0
  %5172 = vmatprep.subr.mxu0 0.0
  %5173 = vmatpush1.msra.mxu0 0.0
  %5174 = vmatprep.subr.mxu0 0.0
  %5175 = vmatpush1.msra.mxu0 0.0
  %5176 = vmatprep.subr.mxu0 0.0
  %5177 = vmatpush1.msra.mxu0 0.0
  %5178 = vmatprep.subr.mxu0 0.0
  %5179 = vmatpush1.msra.mxu0 0.0
  %5180 = vmatprep.mubr.f32.mxu0 0.0
  %5181 = vmatmul.mubr.f32.gmra.mrb[0].mxu0 %v5114
  %v5182 = vpop.f32.mrb[0].mxu0
  %v5183 = vadd.f32 0.0, %v5182
  %v5184 = vpop.f32.mrb[0].mxu0
  %5185 = vdwg.mxu0
  %s5186 = scalar_lea.vmem %s12, 128
  %v5187 = vld [vmem:[%s5186] sm:$0xff]
  %v5188 = vld [vmem:[%s5186 + $0x8] sm:$0xff]
  %v5189 = vld [vmem:[%s5186 + $0x10] sm:$0xff]
  %v5190 = vld [vmem:[%s5186 + $0x18] sm:$0xff]
  %v5191 = vld [vmem:[%s5186 + $0x20] sm:$0xff]
  %v5192 = vld [vmem:[%s5186 + $0x28] sm:$0xff]
  %v5193 = vld [vmem:[%s5186 + $0x30] sm:$0xff]
  %v5194 = vld [vmem:[%s5186 + $0x38] sm:$0xff]
  %v5196 = vsel %vm4872, %v5183, 0
  %5198 = vmatprep.subr.mxu0 0.0
  %5199 = vmatpush1.msra.mxu0 %v5187
  %5200 = vmatprep.subr.mxu0 0.0
  %5201 = vmatpush1.msra.mxu0 %v5188
  %5202 = vmatprep.subr.mxu0 0.0
  %5203 = vmatpush1.msra.mxu0 %v5189
  %5204 = vmatprep.subr.mxu0 0.0
  %5205 = vmatpush1.msra.mxu0 %v5190
  %5206 = vmatprep.subr.mxu0 0.0
  %5207 = vmatpush1.msra.mxu0 %v5191
  %5208 = vmatprep.subr.mxu0 0.0
  %5209 = vmatpush1.msra.mxu0 %v5192
  %5210 = vmatprep.subr.mxu0 0.0
  %5211 = vmatpush1.msra.mxu0 %v5193
  %5212 = vmatprep.subr.mxu0 0.0
  %5213 = vmatpush1.msra.mxu0 %v5194
  %5214 = vmatprep.subr.mxu0 0.0
  %5215 = vmatpush1.msra.mxu0 0.0
  %5216 = vmatprep.subr.mxu0 0.0
  %5217 = vmatpush1.msra.mxu0 0.0
  %5218 = vmatprep.subr.mxu0 0.0
  %5219 = vmatpush1.msra.mxu0 0.0
  %5220 = vmatprep.subr.mxu0 0.0
  %5221 = vmatpush1.msra.mxu0 0.0
  %5222 = vmatprep.subr.mxu0 0.0
  %5223 = vmatpush1.msra.mxu0 0.0
  %5224 = vmatprep.subr.mxu0 0.0
  %5225 = vmatpush1.msra.mxu0 0.0
  %5226 = vmatprep.subr.mxu0 0.0
  %5227 = vmatpush1.msra.mxu0 0.0
  %5228 = vmatprep.subr.mxu0 0.0
  %5229 = vmatpush1.msra.mxu0 0.0
  %5230 = vmatprep.subr.mxu0 0.0
  %5231 = vmatpush1.msra.mxu0 0.0
  %5232 = vmatprep.subr.mxu0 0.0
  %5233 = vmatpush1.msra.mxu0 0.0
  %5234 = vmatprep.subr.mxu0 0.0
  %5235 = vmatpush1.msra.mxu0 0.0
  %5236 = vmatprep.subr.mxu0 0.0
  %5237 = vmatpush1.msra.mxu0 0.0
  %5238 = vmatprep.subr.mxu0 0.0
  %5239 = vmatpush1.msra.mxu0 0.0
  %5240 = vmatprep.subr.mxu0 0.0
  %5241 = vmatpush1.msra.mxu0 0.0
  %5242 = vmatprep.subr.mxu0 0.0
  %5243 = vmatpush1.msra.mxu0 0.0
  %5244 = vmatprep.subr.mxu0 0.0
  %5245 = vmatpush1.msra.mxu0 0.0
  %5246 = vmatprep.subr.mxu0 0.0
  %5247 = vmatpush1.msra.mxu0 0.0
  %5248 = vmatprep.subr.mxu0 0.0
  %5249 = vmatpush1.msra.mxu0 0.0
  %5250 = vmatprep.subr.mxu0 0.0
  %5251 = vmatpush1.msra.mxu0 0.0
  %5252 = vmatprep.subr.mxu0 0.0
  %5253 = vmatpush1.msra.mxu0 0.0
  %5254 = vmatprep.subr.mxu0 0.0
  %5255 = vmatpush1.msra.mxu0 0.0
  %5256 = vmatprep.subr.mxu0 0.0
  %5257 = vmatpush1.msra.mxu0 0.0
  %5258 = vmatprep.subr.mxu0 0.0
  %5259 = vmatpush1.msra.mxu0 0.0
  %5260 = vmatprep.subr.mxu0 0.0
  %5261 = vmatpush1.msra.mxu0 0.0
  %5262 = vmatprep.mubr.f32.mxu0 0.0
  %5263 = vmatmul.mubr.f32.gmra.mrb[0].mxu0 %v5196
  %v5264 = vpop.f32.mrb[0].mxu0
  %v5265 = vadd.f32 0.0, %v5264
  %v5266 = vpop.f32.mrb[0].mxu0
  %5267 = vdwg.mxu0
  %v5268 = vadd.f32 %v5110, %v5265
  %s5269 = scalar_lea.vmem %s11, 24
  %v5270 = vld [vmem:[%s5269] sm:$0xff]
  %v5272 = vsel %vm4790, %v5270, 0
  %5274 = vmatprep.subr.mxu0 0.0
  %5275 = vmatpush1.msra.mxu0 %v4770
  %5276 = vmatprep.subr.mxu0 0.0
  %5277 = vmatpush1.msra.mxu0 %v4775
  %5278 = vmatprep.subr.mxu0 0.0
  %5279 = vmatpush1.msra.mxu0 %v4780
  %5280 = vmatprep.subr.mxu0 0.0
  %5281 = vmatpush1.msra.mxu0 %v4785
  %5282 = vmatprep.subr.mxu0 0.0
  %5283 = vmatpush1.msra.mxu0 0.0
  %5284 = vmatprep.subr.mxu0 0.0
  %5285 = vmatpush1.msra.mxu0 0.0
  %5286 = vmatprep.subr.mxu0 0.0
  %5287 = vmatpush1.msra.mxu0 0.0
  %5288 = vmatprep.subr.mxu0 0.0
  %5289 = vmatpush1.msra.mxu0 0.0
  %5290 = vmatprep.subr.mxu0 0.0
  %5291 = vmatpush1.msra.mxu0 0.0
  %5292 = vmatprep.subr.mxu0 0.0
  %5293 = vmatpush1.msra.mxu0 0.0
  %5294 = vmatprep.subr.mxu0 0.0
  %5295 = vmatpush1.msra.mxu0 0.0
  %5296 = vmatprep.subr.mxu0 0.0
  %5297 = vmatpush1.msra.mxu0 0.0
  %5298 = vmatprep.subr.mxu0 0.0
  %5299 = vmatpush1.msra.mxu0 0.0
  %5300 = vmatprep.subr.mxu0 0.0
  %5301 = vmatpush1.msra.mxu0 0.0
  %5302 = vmatprep.subr.mxu0 0.0
  %5303 = vmatpush1.msra.mxu0 0.0
  %5304 = vmatprep.subr.mxu0 0.0
  %5305 = vmatpush1.msra.mxu0 0.0
  %5306 = vmatprep.subr.mxu0 0.0
  %5307 = vmatpush1.msra.mxu0 0.0
  %5308 = vmatprep.subr.mxu0 0.0
  %5309 = vmatpush1.msra.mxu0 0.0
  %5310 = vmatprep.subr.mxu0 0.0
  %5311 = vmatpush1.msra.mxu0 0.0
  %5312 = vmatprep.subr.mxu0 0.0
  %5313 = vmatpush1.msra.mxu0 0.0
  %5314 = vmatprep.subr.mxu0 0.0
  %5315 = vmatpush1.msra.mxu0 0.0
  %5316 = vmatprep.subr.mxu0 0.0
  %5317 = vmatpush1.msra.mxu0 0.0
  %5318 = vmatprep.subr.mxu0 0.0
  %5319 = vmatpush1.msra.mxu0 0.0
  %5320 = vmatprep.subr.mxu0 0.0
  %5321 = vmatpush1.msra.mxu0 0.0
  %5322 = vmatprep.subr.mxu0 0.0
  %5323 = vmatpush1.msra.mxu0 0.0
  %5324 = vmatprep.subr.mxu0 0.0
  %5325 = vmatpush1.msra.mxu0 0.0
  %5326 = vmatprep.subr.mxu0 0.0
  %5327 = vmatpush1.msra.mxu0 0.0
  %5328 = vmatprep.subr.mxu0 0.0
  %5329 = vmatpush1.msra.mxu0 0.0
  %5330 = vmatprep.subr.mxu0 0.0
  %5331 = vmatpush1.msra.mxu0 0.0
  %5332 = vmatprep.subr.mxu0 0.0
  %5333 = vmatpush1.msra.mxu0 0.0
  %5334 = vmatprep.subr.mxu0 0.0
  %5335 = vmatpush1.msra.mxu0 0.0
  %5336 = vmatprep.subr.mxu0 0.0
  %5337 = vmatpush1.msra.mxu0 0.0
  %5338 = vmatprep.mubr.f32.mxu0 0.0
  %5339 = vmatmul.mubr.f32.gmra.mrb[0].mxu0 %v5272
  %v5340 = vpop.f32.mrb[0].mxu0
  %v5341 = vadd.f32 0.0, %v5340
  %v5342 = vpop.f32.mrb[0].mxu0
  %5343 = vdwg.mxu0
  %s5344 = scalar_lea.vmem %s12, 192
  %v5345 = vld [vmem:[%s5344] sm:$0xff]
  %v5346 = vld [vmem:[%s5344 + $0x8] sm:$0xff]
  %v5347 = vld [vmem:[%s5344 + $0x10] sm:$0xff]
  %v5348 = vld [vmem:[%s5344 + $0x18] sm:$0xff]
  %v5349 = vld [vmem:[%s5344 + $0x20] sm:$0xff]
  %v5350 = vld [vmem:[%s5344 + $0x28] sm:$0xff]
  %v5351 = vld [vmem:[%s5344 + $0x30] sm:$0xff]
  %v5352 = vld [vmem:[%s5344 + $0x38] sm:$0xff]
  %v5354 = vsel %vm4872, %v5341, 0
  %5356 = vmatprep.subr.mxu0 0.0
  %5357 = vmatpush1.msra.mxu0 %v5345
  %5358 = vmatprep.subr.mxu0 0.0
  %5359 = vmatpush1.msra.mxu0 %v5346
  %5360 = vmatprep.subr.mxu0 0.0
  %5361 = vmatpush1.msra.mxu0 %v5347
  %5362 = vmatprep.subr.mxu0 0.0
  %5363 = vmatpush1.msra.mxu0 %v5348
  %5364 = vmatprep.subr.mxu0 0.0
  %5365 = vmatpush1.msra.mxu0 %v5349
  %5366 = vmatprep.subr.mxu0 0.0
  %5367 = vmatpush1.msra.mxu0 %v5350
  %5368 = vmatprep.subr.mxu0 0.0
  %5369 = vmatpush1.msra.mxu0 %v5351
  %5370 = vmatprep.subr.mxu0 0.0
  %5371 = vmatpush1.msra.mxu0 %v5352
  %5372 = vmatprep.subr.mxu0 0.0
  %5373 = vmatpush1.msra.mxu0 0.0
  %5374 = vmatprep.subr.mxu0 0.0
  %5375 = vmatpush1.msra.mxu0 0.0
  %5376 = vmatprep.subr.mxu0 0.0
  %5377 = vmatpush1.msra.mxu0 0.0
  %5378 = vmatprep.subr.mxu0 0.0
  %5379 = vmatpush1.msra.mxu0 0.0
  %5380 = vmatprep.subr.mxu0 0.0
  %5381 = vmatpush1.msra.mxu0 0.0
  %5382 = vmatprep.subr.mxu0 0.0
  %5383 = vmatpush1.msra.mxu0 0.0
  %5384 = vmatprep.subr.mxu0 0.0
  %5385 = vmatpush1.msra.mxu0 0.0
  %5386 = vmatprep.subr.mxu0 0.0
  %5387 = vmatpush1.msra.mxu0 0.0
  %5388 = vmatprep.subr.mxu0 0.0
  %5389 = vmatpush1.msra.mxu0 0.0
  %5390 = vmatprep.subr.mxu0 0.0
  %5391 = vmatpush1.msra.mxu0 0.0
  %5392 = vmatprep.subr.mxu0 0.0
  %5393 = vmatpush1.msra.mxu0 0.0
  %5394 = vmatprep.subr.mxu0 0.0
  %5395 = vmatpush1.msra.mxu0 0.0
  %5396 = vmatprep.subr.mxu0 0.0
  %5397 = vmatpush1.msra.mxu0 0.0
  %5398 = vmatprep.subr.mxu0 0.0
  %5399 = vmatpush1.msra.mxu0 0.0
  %5400 = vmatprep.subr.mxu0 0.0
  %5401 = vmatpush1.msra.mxu0 0.0
  %5402 = vmatprep.subr.mxu0 0.0
  %5403 = vmatpush1.msra.mxu0 0.0
  %5404 = vmatprep.subr.mxu0 0.0
  %5405 = vmatpush1.msra.mxu0 0.0
  %5406 = vmatprep.subr.mxu0 0.0
  %5407 = vmatpush1.msra.mxu0 0.0
  %5408 = vmatprep.subr.mxu0 0.0
  %5409 = vmatpush1.msra.mxu0 0.0
  %5410 = vmatprep.subr.mxu0 0.0
  %5411 = vmatpush1.msra.mxu0 0.0
  %5412 = vmatprep.subr.mxu0 0.0
  %5413 = vmatpush1.msra.mxu0 0.0
  %5414 = vmatprep.subr.mxu0 0.0
  %5415 = vmatpush1.msra.mxu0 0.0
  %5416 = vmatprep.subr.mxu0 0.0
  %5417 = vmatpush1.msra.mxu0 0.0
  %5418 = vmatprep.subr.mxu0 0.0
  %5419 = vmatpush1.msra.mxu0 0.0
  %5420 = vmatprep.mubr.f32.mxu0 0.0
  %5421 = vmatmul.mubr.f32.gmra.mrb[0].mxu0 %v5354
  %v5422 = vpop.f32.mrb[0].mxu0
  %v5423 = vadd.f32 0.0, %v5422
  %v5424 = vpop.f32.mrb[0].mxu0
  %5425 = vdwg.mxu0
  %v5426 = vadd.f32 %v5268, %v5423
  %v5427 = vtanh.pop %v5426
  %v5428 = vld [vmem:[%s14] sm:$0xff]
  %v5429 = vld [vmem:[%s14 + $0x8] sm:$0xff]
  %v5430 = vld [vmem:[%s14 + $0x10] sm:$0xff]
  %v5431 = vld [vmem:[%s14 + $0x18] sm:$0xff]
  %v5432 = vld [vmem:[%s14 + $0x20] sm:$0xff]
  %v5433 = vld [vmem:[%s14 + $0x28] sm:$0xff]
  %v5434 = vld [vmem:[%s14 + $0x30] sm:$0xff]
  %v5435 = vld [vmem:[%s14 + $0x38] sm:$0xff]
  %v5436 = vld [vmem:[%s14 + $0x40] sm:$0xff]
  %v5437 = vld [vmem:[%s14 + $0x48] sm:$0xff]
  %v5438 = vld [vmem:[%s14 + $0x50] sm:$0xff]
  %v5439 = vld [vmem:[%s14 + $0x58] sm:$0xff]
  %v5440 = vld [vmem:[%s14 + $0x60] sm:$0xff]
  %v5441 = vld [vmem:[%s14 + $0x68] sm:$0xff]
  %v5442 = vld [vmem:[%s14 + $0x70] sm:$0xff]
  %v5443 = vld [vmem:[%s15] sm:$0x1]
  %v5445 = vlaneseq
  %v5446 = vshrl.u32 %v5445, 7
  %v5447 = vsub.s32 0, %v5446
  %v5448 = vrot.slane %v5443, %v5447
  %vm5450 = vcmask 982016
  %v5452 = vsel %vm5450, %v5427, 0
  %5454 = vmatprep.subr.mxu0 0.0
  %5455 = vmatpush1.msra.mxu0 %v5428
  %5456 = vmatprep.subr.mxu0 0.0
  %5457 = vmatpush1.msra.mxu0 %v5429
  %5458 = vmatprep.subr.mxu0 0.0
  %5459 = vmatpush1.msra.mxu0 %v5430
  %5460 = vmatprep.subr.mxu0 0.0
  %5461 = vmatpush1.msra.mxu0 %v5431
  %5462 = vmatprep.subr.mxu0 0.0
  %5463 = vmatpush1.msra.mxu0 %v5432
  %5464 = vmatprep.subr.mxu0 0.0
  %5465 = vmatpush1.msra.mxu0 %v5433
  %5466 = vmatprep.subr.mxu0 0.0
  %5467 = vmatpush1.msra.mxu0 %v5434
  %5468 = vmatprep.subr.mxu0 0.0
  %5469 = vmatpush1.msra.mxu0 %v5435
  %5470 = vmatprep.subr.mxu0 0.0
  %5471 = vmatpush1.msra.mxu0 %v5436
  %5472 = vmatprep.subr.mxu0 0.0
  %5473 = vmatpush1.msra.mxu0 %v5437
  %5474 = vmatprep.subr.mxu0 0.0
  %5475 = vmatpush1.msra.mxu0 %v5438
  %5476 = vmatprep.subr.mxu0 0.0
  %5477 = vmatpush1.msra.mxu0 %v5439
  %5478 = vmatprep.subr.mxu0 0.0
  %5479 = vmatpush1.msra.mxu0 %v5440
  %5480 = vmatprep.subr.mxu0 0.0
  %5481 = vmatpush1.msra.mxu0 %v5441
  %5482 = vmatprep.subr.mxu0 0.0
  %5483 = vmatpush1.msra.mxu0 %v5442
  %5484 = vmatprep.subr.mxu0 0.0
  %5485 = vmatpush1.msra.mxu0 0.0
  %5486 = vmatprep.subr.mxu0 0.0
  %5487 = vmatpush1.msra.mxu0 0.0
  %5488 = vmatprep.subr.mxu0 0.0
  %5489 = vmatpush1.msra.mxu0 0.0
  %5490 = vmatprep.subr.mxu0 0.0
  %5491 = vmatpush1.msra.mxu0 0.0
  %5492 = vmatprep.subr.mxu0 0.0
  %5493 = vmatpush1.msra.mxu0 0.0
  %5494 = vmatprep.subr.mxu0 0.0
  %5495 = vmatpush1.msra.mxu0 0.0
  %5496 = vmatprep.subr.mxu0 0.0
  %5497 = vmatpush1.msra.mxu0 0.0
  %5498 = vmatprep.subr.mxu0 0.0
  %5499 = vmatpush1.msra.mxu0 0.0
  %5500 = vmatprep.subr.mxu0 0.0
  %5501 = vmatpush1.msra.mxu0 0.0
  %5502 = vmatprep.subr.mxu0 0.0
  %5503 = vmatpush1.msra.mxu0 0.0
  %5504 = vmatprep.subr.mxu0 0.0
  %5505 = vmatpush1.msra.mxu0 0.0
  %5506 = vmatprep.subr.mxu0 0.0
  %5507 = vmatpush1.msra.mxu0 0.0
  %5508 = vmatprep.subr.mxu0 0.0
  %5509 = vmatpush1.msra.mxu0 0.0
  %5510 = vmatprep.subr.mxu0 0.0
  %5511 = vmatpush1.msra.mxu0 0.0
  %5512 = vmatprep.subr.mxu0 0.0
  %5513 = vmatpush1.msra.mxu0 0.0
  %5514 = vmatprep.subr.mxu0 0.0
  %5515 = vmatpush1.msra.mxu0 0.0
  %5516 = vmatprep.subr.mxu0 0.0
  %5517 = vmatpush1.msra.mxu0 0.0
  %5518 = vmatprep.mubr.f32.mxu0 0.0
  %5519 = vmatmul.mubr.f32.gmra.mrb[0].mxu0 %v5452
  %v5520 = vpop.f32.mrb[0].mxu0
  %v5521 = vadd.f32 %v5448, %v5520
  %v5522 = vpop.f32.mrb[0].mxu0
  %5523 = vdwg.mxu0
  %v5524 = vtanh.pop %v5521
  %v5525 = vld [vmem:[%s16] sm:$0xff]
  %v5526 = vld [vmem:[%s16 + $0x8] sm:$0xff]
  %v5527 = vld [vmem:[%s16 + $0x10] sm:$0xff]
  %v5528 = vld [vmem:[%s16 + $0x18] sm:$0xff]
  %v5529 = vld [vmem:[%s16 + $0x20] sm:$0xff]
  %v5530 = vld [vmem:[%s16 + $0x28] sm:$0xff]
  %v5531 = vld [vmem:[%s16 + $0x30] sm:$0xff]
  %v5532 = vld [vmem:[%s16 + $0x38] sm:$0xff]
  %v5533 = vld [vmem:[%s16 + $0x40] sm:$0xff]
  %v5534 = vld [vmem:[%s16 + $0x48] sm:$0xff]
  %v5535 = vld [vmem:[%s16 + $0x50] sm:$0xf]
  %v5536 = vld [vmem:[%s17] sm:$0x1]
  %v5538 = vlaneseq
  %v5539 = vshrl.u32 %v5538, 7
  %v5540 = vsub.s32 0, %v5539
  %v5541 = vrot.slane %v5536, %v5540
  %vm5543 = vcmask 687104
  %v5545 = vsel %vm5543, %v5524, 0
  %v5548 = vsel %vm490, %v5535, 0
  %5550 = vmatprep.subr.mxu0 0.0
  %5551 = vmatpush1.msra.mxu0 %v5525
  %5552 = vmatprep.subr.mxu0 0.0
  %5553 = vmatpush1.msra.mxu0 %v5526
  %5554 = vmatprep.subr.mxu0 0.0
  %5555 = vmatpush1.msra.mxu0 %v5527
  %5556 = vmatprep.subr.mxu0 0.0
  %5557 = vmatpush1.msra.mxu0 %v5528
  %5558 = vmatprep.subr.mxu0 0.0
  %5559 = vmatpush1.msra.mxu0 %v5529
  %5560 = vmatprep.subr.mxu0 0.0
  %5561 = vmatpush1.msra.mxu0 %v5530
  %5562 = vmatprep.subr.mxu0 0.0
  %5563 = vmatpush1.msra.mxu0 %v5531
  %5564 = vmatprep.subr.mxu0 0.0
  %5565 = vmatpush1.msra.mxu0 %v5532
  %5566 = vmatprep.subr.mxu0 0.0
  %5567 = vmatpush1.msra.mxu0 %v5533
  %5568 = vmatprep.subr.mxu0 0.0
  %5569 = vmatpush1.msra.mxu0 %v5534
  %5570 = vmatprep.subr.mxu0 0.0
  %5571 = vmatpush1.msra.mxu0 %v5548
  %5572 = vmatprep.subr.mxu0 0.0
  %5573 = vmatpush1.msra.mxu0 0.0
  %5574 = vmatprep.subr.mxu0 0.0
  %5575 = vmatpush1.msra.mxu0 0.0
  %5576 = vmatprep.subr.mxu0 0.0
  %5577 = vmatpush1.msra.mxu0 0.0
  %5578 = vmatprep.subr.mxu0 0.0
  %5579 = vmatpush1.msra.mxu0 0.0
  %5580 = vmatprep.subr.mxu0 0.0
  %5581 = vmatpush1.msra.mxu0 0.0
  %5582 = vmatprep.subr.mxu0 0.0
  %5583 = vmatpush1.msra.mxu0 0.0
  %5584 = vmatprep.subr.mxu0 0.0
  %5585 = vmatpush1.msra.mxu0 0.0
  %5586 = vmatprep.subr.mxu0 0.0
  %5587 = vmatpush1.msra.mxu0 0.0
  %5588 = vmatprep.subr.mxu0 0.0
  %5589 = vmatpush1.msra.mxu0 0.0
  %5590 = vmatprep.subr.mxu0 0.0
  %5591 = vmatpush1.msra.mxu0 0.0
  %5592 = vmatprep.subr.mxu0 0.0
  %5593 = vmatpush1.msra.mxu0 0.0
  %5594 = vmatprep.subr.mxu0 0.0
  %5595 = vmatpush1.msra.mxu0 0.0
  %5596 = vmatprep.subr.mxu0 0.0
  %5597 = vmatpush1.msra.mxu0 0.0
  %5598 = vmatprep.subr.mxu0 0.0
  %5599 = vmatpush1.msra.mxu0 0.0
  %5600 = vmatprep.subr.mxu0 0.0
  %5601 = vmatpush1.msra.mxu0 0.0
  %5602 = vmatprep.subr.mxu0 0.0
  %5603 = vmatpush1.msra.mxu0 0.0
  %5604 = vmatprep.subr.mxu0 0.0
  %5605 = vmatpush1.msra.mxu0 0.0
  %5606 = vmatprep.subr.mxu0 0.0
  %5607 = vmatpush1.msra.mxu0 0.0
  %5608 = vmatprep.subr.mxu0 0.0
  %5609 = vmatpush1.msra.mxu0 0.0
  %5610 = vmatprep.subr.mxu0 0.0
  %5611 = vmatpush1.msra.mxu0 0.0
  %5612 = vmatprep.subr.mxu0 0.0
  %5613 = vmatpush1.msra.mxu0 0.0
  %5614 = vmatprep.mubr.f32.mxu0 0.0
  %5615 = vmatmul.mubr.f32.gmra.mrb[0].mxu0 %v5545
  %v5616 = vpop.f32.mrb[0].mxu0
  %v5617 = vadd.f32 %v5541, %v5616
  %v5618 = vpop.f32.mrb[0].mxu0
  %5619 = vdwg.mxu0
  %vm5620 = vcmask 80896
  %v5621 = vsel %vm5620, %v5617, -inf
  %5622 = vmax.xlane.f32.xlu0 %v5621
  %v5623 = vpop.xlane.xlu0 %5622
  %v5624 = vsub.f32 %v5617, %v5623
  %v5625 = vmul.f32 %v5624, 1.442695
  %v5626 = vpow.pop %v5625
  %v5627 = vsel %vm5620, %v5626, 0.0
  %5628 = vadd.xlane.f32.xlu0 %v5627
  %v5629 = vpop.xlane.xlu0 %5628
  %v5630 = vlog2.pop %v5629
  %v5631 = vmul.f32 %v5630, 0.6931472
  %v5632 = vsub.f32 %v5624, %v5631
  %5633 = vst.msk [vmem:[%s19] sm:$0xff] %vm5450, %v5427
  %5634 = vst.msk [vmem:[%s18] sm:$0xff] %vm5620, %v5632
  // Predicated region
  $region74: #{_forward_both.1} parent=0 // pred_check
    _
  $region75: #{_forward_both.1} parent=0 // pred_check_branch
    %5636 = sbr.rel (0) target = $region77
  $region76: #{_forward_both.1} parent=0 // pred_region
    _
  $region77: #{_forward_both.1} parent=0 // pred_fallthru
    _
  // Predicated region
  $region78: #{_forward_both.1} parent=0 // pred_check
    _
  $region79: #{_forward_both.1} parent=0 // pred_check_branch
    %5638 = sbr.rel (0) target = $region81
  $region80: #{_forward_both.1} parent=0 // pred_region
    _
  $region81: #{_forward_both.1} parent=0 // pred_fallthru
    _
  // Predicated region
  $region82: #{_forward_both.1} parent=0 // pred_check
    _
  $region83: #{_forward_both.1} parent=0 // pred_check_branch
    %5640 = sbr.rel (0) target = $region85
  $region84: #{_forward_both.1} parent=0 // pred_region
    _
  $region85: #{_forward_both.1} parent=0 // pred_fallthru
    _
  // Predicated region
  $region86: #{_forward_both.1} parent=0 // pred_check
    _
  $region87: #{_forward_both.1} parent=0 // pred_check_branch
    %5642 = sbr.rel (0) target = $region89
  $region88: #{_forward_both.1} parent=0 // pred_region
    _
  $region89: #{_forward_both.1} parent=0 // pred_fallthru
    _

</llo_original>
